<compile_context>
chip_gen: v6e
topology: v6e:2x2x1
jax: 0.10.0
libtpu: 0.0.40
codegen_flags: <defaults>
</compile_context>

<pallas_src>
import functools

import jax
import jax.numpy as jnp
import numpy as np
from jax import lax
from jax.experimental import pallas as pl
from jax.experimental.pallas import tpu as pltpu

POS_BIG = 9.0e15   # matches 9000000000000000.0 in min_max_norm
NEG_BIG = -9.0e15
LANE = 128


def _round_up(x, m):
    return ((x + m - 1) // m) * m


def _device_caps():
    """(phase-A row-tile cap, vmem_limit_bytes) tuned per TPU generation."""
    kind = ""
    try:
        kind = jax.devices()[0].device_kind.lower()
    except Exception:
        pass
    if "v7" in kind or "tpu7" in kind:
        return 256, 48 << 20          # v7x: 64 MiB VMEM per TC -> smaller tiles
    if "v5" in kind or "v6" in kind or "lite" in kind:
        return 512, 64 << 20          # v5e/v6e: 128 MiB VMEM -> bigger row tiles
    return 256, 32 << 20              # unknown backend: conservative


def _batch_tile(b, seq, hp, rec_pad, vmem_budget):
    """Padded-batch rows per Phase-B grid step, sized against the VMEM budget."""
    b8 = _round_up(b, 8)
    per_row = seq * (3 * hp + hp + rec_pad) * 4 * 2   # gx in + tract/rec out, dbl-buffered
    cap = max(8, ((vmem_budget // 2) // max(per_row, 1)) // 8 * 8)
    return int(min(b8, cap, 128))


# =============================================================================
# Kernel A: batched DisAttention gate pre-activations for all timesteps.
#   rows = seq*B (time-major), tiled over the grid, "parallel".
# =============================================================================
def attention_gates_kernel(
    x_ref,       # (TM, low)                flattened (seq*batch) input rows
    wqv_ref,     # (low, QVP)               fused [scaled-Wq | Wv] per (gate, head)
    wkall_ref,   # (low, 3*nheads*Hp)       fused, zero-padded Wk (lane-dense)
    wo_ref,      # (3, nheads*Hp, Hp)       fused, zero-padded out_layer W.T
    bo_ref,      # (1, 3*Hp)                out_layer biases (all gates)
    mask_ref,    # (low, Hp)                linkage mask (0/1), zero-padded
    gx_ref,      # out: (TM, 3*Hp)          [x2r | x2z | x2n]
    *, nheads, low, hp, tm,
):
    x = x_ref[...]                                        # (TM, low)
    # Hoisted out of the 3*nheads unrolled head loop (JAX does not CSE the
    # broadcast_in_dim each jnp.where would otherwise re-materialize).
    mask_b = jnp.broadcast_to((mask_ref[...] > 0.5)[None, :, :], (tm, low, hp))

    # One lane-dense matmul for every (gate, head) Q/V projection and another
    # for every (gate, head) K projection.
    qv_all = jnp.dot(x, wqv_ref[...], preferred_element_type=jnp.float32)
    k_all = jnp.dot(x, wkall_ref[...], preferred_element_type=jnp.float32)

    heads = []
    for g in range(3):
        for hd in range(nheads):
            idx = g * nheads + hd
            qb = idx * 2 * low
            q = qv_all[:, qb:qb + low]                            # (TM, low)
            v = qv_all[:, qb + low:qb + 2 * low]                  # (TM, low)
            kk = k_all[:, idx * hp:(idx + 1) * hp]                # (TM, Hp)

            # e[m,i,j] = Q[m,i] * K[m,j]   (1/sqrt(dk) folded into Wq)
            e = q[:, :, None] * kk[:, None, :]                    # (TM, low, Hp)

            # ---- min_max_norm over the (padded, lane-dense) last axis ----
            pos_e = jnp.where(mask_b, e, POS_BIG)
            neg_e = jnp.where(mask_b, e, NEG_BIG)
            mn = jnp.min(pos_e, axis=-1, keepdims=True)
            mx = jnp.max(neg_e, axis=-1, keepdims=True)
            den = mx - mn
            den = jnp.where(den == 0.0, 1e-6, den)
            e = (e - mn) * (1.0 / den)          # exact reciprocal (small tensor)
            e = jnp.where(mask_b, e, NEG_BIG)

            # ---- softmax WITHOUT max subtraction: masked scores are in [0,1]
            # after min_max_norm, unmasked are NEG_BIG (exp -> 0), so exp cannot
            # overflow.  (Assumes >=1 link per linkage row, as in the model.)
            p = jnp.exp(e)
            attn = p * pl.reciprocal(jnp.sum(p, axis=-1, keepdims=True),
                                     approx=True)                 # (TM, low, Hp)

            # head = V @ attention   (V is a length-1 "token" per row)
            heads.append(jnp.sum(v[:, :, None] * attn, axis=1))    # (TM, Hp)

    # Fused output projection per gate (concat of heads @ full W.T).
    gate_outs = []
    for g in range(3):
        hcat = jnp.concatenate(heads[g * nheads:(g + 1) * nheads], axis=-1)
        gate_outs.append(jnp.dot(hcat, wo_ref[g],
                                 preferred_element_type=jnp.float32))  # (TM, Hp)
    gx_ref[...] = jnp.concatenate(gate_outs, axis=-1) + bo_ref[...]


# =============================================================================
# Kernel B: batched sequential GRU recurrence + fused reconstruction epilogue.
#   Grid over padded-batch chunks ("parallel"); the loop runs only over seq.
# =============================================================================
def gru_recurrence_kernel(
    gx_ref,      # (seq, bt, 3*Hp)  precomputed [x2r | x2z | x2n], time-major
    whrz_ref,    # (Hp, 2*Hp)       [h2r.W.T | h2z.W.T]  (zero-padded)
    whn_ref,     # (Hp, Hp)         h2n.W.T
    bhrz_ref,    # (1, 2*Hp)
    bhn_ref,     # (1, Hp)
    wrec_ref,    # (Hp, rec_pad)    fused [puma_tract.T | nta_tract.T]
    tract_ref,   # out: (seq, bt, Hp)
    rec_ref,     # out: (seq, bt, rec_pad)
    *, seq, hp, bt,
):
    whrz = whrz_ref[...]
    whn = whn_ref[...]
    bhrz = bhrz_ref[...]
    bhn = bhn_ref[...]

    def step(t, h):                                           # h: (bt, Hp)
        gxt = gx_ref[pl.ds(t, 1), :, :][0]                    # (bt, 3*Hp)
        hrz = jnp.dot(h, whrz, preferred_element_type=jnp.float32) + bhrz
        r = jax.nn.sigmoid(gxt[:, :hp] + hrz[:, :hp])
        z = jax.nn.sigmoid(gxt[:, hp:2 * hp] + hrz[:, hp:])
        h2n = jnp.dot(h * r, whn, preferred_element_type=jnp.float32) + bhn
        n = jnp.tanh(gxt[:, 2 * hp:] + h2n)
        h_new = z * h + (1.0 - z) * n
        tract_ref[pl.ds(t, 1), :, :] = h_new[None, :, :]
        return h_new

    lax.fori_loop(0, seq, step, jnp.zeros((bt, hp), jnp.float32))

    # Reconstruction epilogue (former Phase C): the tract block is already
    # resident in VMEM, so no HBM round trip; one lane-dense matmul.
    tr = tract_ref[...].reshape(seq * bt, hp)
    rec = jnp.dot(tr, wrec_ref[...], preferred_element_type=jnp.float32)
    rec_ref[...] = rec.reshape(rec_ref.shape)


# =============================================================================
# Weight preparation (tiny, plain XLA in the wrapper)
# =============================================================================
def _prep_weights(params, nheads, low, high, nta, hp, rec_pad):
    f32 = jnp.float32
    pad_h = hp - high
    inv_sqrt_dk = 1.0 / float(np.sqrt(float(high)))

    wq = params["wq"].astype(f32) * inv_sqrt_dk            # fold 1/sqrt(dk) into Wq
    wv = params["wv"].astype(f32)
    qv_cols = []
    for g in range(3):
        for hd in range(nheads):
            qv_cols.append(wq[g, hd])
            qv_cols.append(wv[g, hd])
    wqv = jnp.concatenate(qv_cols, axis=1)                  # (low, 3*nh*2*low)
    qv_pad = _round_up(wqv.shape[1], LANE)
    wqv = jnp.pad(wqv, ((0, 0), (0, qv_pad - wqv.shape[1])))

    wk = jnp.pad(params["wk"].astype(f32),
                 ((0, 0), (0, 0), (0, 0), (0, pad_h)))                      # (3,nh,low,hp)
    wk_all = jnp.transpose(wk, (2, 0, 1, 3)).reshape(low, 3 * nheads * hp)  # (low,3*nh*hp)

    wo = jnp.pad(params["wo"].astype(f32),
                 ((0, 0), (0, 0), (0, pad_h), (0, pad_h)))                  # (3,nh,hp,hp)
    wo_fused = wo.reshape(3, nheads * hp, hp)
    bo = jnp.pad(params["bo"].astype(f32), ((0, 0), (0, 0), (0, pad_h)))    # (3,1,hp)
    bo_all = jnp.transpose(bo, (1, 0, 2)).reshape(1, 3 * hp)

    mask = jnp.pad((params["puma_tract"].astype(f32) > 0).astype(f32),
                   ((0, 0), (0, pad_h)))                                    # (low,hp)

    wh = jnp.pad(params["wh"].astype(f32), ((0, 0), (0, pad_h), (0, pad_h)))
    bh = jnp.pad(params["bh"].astype(f32), ((0, 0), (0, 0), (0, pad_h)))
    wh_rz = jnp.concatenate([wh[0], wh[1]], axis=1)                         # (hp,2hp)
    bh_rz = jnp.concatenate([bh[0], bh[1]], axis=1)                         # (1,2hp)
    wh_n, bh_n = wh[2], bh[2]

    w_rec = jnp.concatenate([params["puma_tract"].astype(f32).T,
                             params["nta_tract"].astype(f32).T], axis=1)    # (high,low+nta)
    w_rec = jnp.pad(w_rec, ((0, pad_h), (0, rec_pad - (low + nta))))        # (hp,rec_pad)

    return dict(wqv=wqv, wk_all=wk_all, wo=wo_fused, bo=bo_all, mask=mask,
                wh_rz=wh_rz, wh_n=wh_n, bh_rz=bh_rz, bh_n=bh_n, w_rec=w_rec)


# =============================================================================
# Wrapper
# =============================================================================
def puma_tract_forward(att, params, rec="bottomup"):
    """att: (B, seq, low) float32  ->  dict like the PyTorch module's output."""
    f32 = jnp.float32
    att = jnp.asarray(att, f32)
    B, seq, low = att.shape
    high = params["wh"].shape[-1]
    nheads = params["wq"].shape[1]
    nta = params["nta_tract"].shape[0]

    hp = _round_up(high, LANE)                    # lane-dense hidden width (exact)
    rec_pad = _round_up(low + nta, LANE)          # lane-dense fused rec output
    row_cap, vmem_bytes = _device_caps()

    w = _prep_weights(params, nheads, low, high, nta, hp, rec_pad)

    # ------------- Phase A: batched gate pre-activations (parallel grid) -----
    M = B * seq
    x2 = jnp.transpose(att, (1, 0, 2)).reshape(M, low)        # time-major rows
    tm = int(min(row_cap, _round_up(M, 8)))
    M_pad = _round_up(M, tm)
    if M_pad != M:
        x2 = jnp.pad(x2, ((0, M_pad - M), (0, 0)))

    kern_a = functools.partial(attention_gates_kernel,
                               nheads=nheads, low=low, hp=hp, tm=tm)
    gx = pl.pallas_call(
        kern_a,
        out_shape=jax.ShapeDtypeStruct((M_pad, 3 * hp), f32),
        grid=(M_pad // tm,),
        in_specs=[
            pl.BlockSpec((tm, low), lambda i: (i, 0)),
            pl.BlockSpec(w["wqv"].shape, lambda i: (0, 0)),
            pl.BlockSpec(w["wk_all"].shape, lambda i: (0, 0)),
            pl.BlockSpec(w["wo"].shape, lambda i: (0, 0, 0)),
            pl.BlockSpec(w["bo"].shape, lambda i: (0, 0)),
            pl.BlockSpec(w["mask"].shape, lambda i: (0, 0)),
        ],
        out_specs=pl.BlockSpec((tm, 3 * hp), lambda i: (i, 0)),
        compiler_params=pltpu.CompilerParams(
            dimension_semantics=("parallel",),
            vmem_limit_bytes=vmem_bytes),
    )(x2, w["wqv"], w["wk_all"], w["wo"], w["bo"], w["mask"])

    # ------------- Phase B: batched recurrence + fused reconstruction --------
    bt = _batch_tile(B, seq, hp, rec_pad, vmem_bytes)
    B_pad = _round_up(B, bt)
    gx_tb = gx[:M].reshape(seq, B, 3 * hp)
    if B_pad != B:
        gx_tb = jnp.pad(gx_tb, ((0, 0), (0, B_pad - B), (0, 0)))

    kern_b = functools.partial(gru_recurrence_kernel, seq=seq, hp=hp, bt=bt)
    tract_tb, rec_tb = pl.pallas_call(
        kern_b,
        out_shape=(jax.ShapeDtypeStruct((seq, B_pad, hp), f32),
                   jax.ShapeDtypeStruct((seq, B_pad, rec_pad), f32)),
        grid=(B_pad // bt,),
        in_specs=[
            pl.BlockSpec((seq, bt, 3 * hp), lambda b: (0, b, 0)),
            pl.BlockSpec(w["wh_rz"].shape, lambda b: (0, 0)),
            pl.BlockSpec(w["wh_n"].shape, lambda b: (0, 0)),
            pl.BlockSpec(w["bh_rz"].shape, lambda b: (0, 0)),
            pl.BlockSpec(w["bh_n"].shape, lambda b: (0, 0)),
            pl.BlockSpec(w["w_rec"].shape, lambda b: (0, 0)),
        ],
        out_specs=(pl.BlockSpec((seq, bt, hp), lambda b: (0, b, 0)),
                   pl.BlockSpec((seq, bt, rec_pad), lambda b: (0, b, 0))),
        compiler_params=pltpu.CompilerParams(
            dimension_semantics=("parallel",),
            vmem_limit_bytes=vmem_bytes),
    )(gx_tb, w["wh_rz"], w["wh_n"], w["bh_rz"], w["bh_n"], w["w_rec"])

    tract = jnp.transpose(tract_tb[:, :B, :high], (1, 0, 2))      # (B, seq, high)
    if rec == "no":
        return {"tract": tract, "rec_pumas": [], "rec_ntas": []}

    rec_puma = jnp.transpose(rec_tb[:, :B, :low], (1, 0, 2))      # (B, seq, low)
    rec_nta = jnp.transpose(rec_tb[:, :B, low:low + nta], (1, 0, 2))
    # rec == "bottomup"
    # TODO(synk): 'bridge'/'full' branches reference an undefined `nta` variable
    # in the original PyTorch code (NameError) and are not implemented.
    return {"tract": tract, "rec_pumas": [rec_puma], "rec_ntas": [rec_nta]}


# ----------------------------- pure-JAX reference ----------------------------
def reference_forward(att, params):
    wq, wk, wv, wo, bo = (params[k] for k in ("wq", "wk", "wv", "wo", "bo"))
    wh, bh = params["wh"], params["bh"]
    link, ntal = params["puma_tract"], params["nta_tract"]
    B, seq, low = att.shape
    high = wh.shape[-1]
    nheads = wq.shape[1]
    mask = link > 0

    def min_max_norm(e):
        pos_e = jnp.where(mask, e, POS_BIG)
        neg_e = jnp.where(mask, e, NEG_BIG)
        mn = jnp.min(pos_e, axis=-1, keepdims=True)
        mx = jnp.max(neg_e, axis=-1, keepdims=True)
        den = mx - mn
        den = jnp.where(den == 0.0, 1e-6, den)
        return jnp.where(mask, (e - mn) / den, NEG_BIG)

    def dis(xt, g):
        outs = []
        for k in range(nheads):
            Q, K, V = xt @ wq[g, k], xt @ wk[g, k], xt @ wv[g, k]
            e = Q[:, :, None] * K[:, None, :] / jnp.sqrt(jnp.float32(high))
            a = jax.nn.softmax(min_max_norm(e), axis=-1)
            outs.append(jnp.einsum("bi,bij->bj", V, a))
        cat = jnp.concatenate(outs, axis=-1)
        w_full = jnp.concatenate([wo[g, k] for k in range(nheads)], axis=0)
        return cat @ w_full + bo[g]

    h = jnp.zeros((B, high), jnp.float32)
    hs = []
    for t in range(seq):
        xt = att[:, t, :]
        r = jax.nn.sigmoid(dis(xt, 0) + h @ wh[0] + bh[0])
        z = jax.nn.sigmoid(dis(xt, 1) + h @ wh[1] + bh[1])
        n = jnp.tanh(dis(xt, 2) + (h * r) @ wh[2] + bh[2])
        h = z * h + (1.0 - z) * n
        hs.append(h)
    tract = jnp.stack(hs, axis=1)
    return {"tract": tract,
            "rec_pumas": [tract @ link.T],
            "rec_ntas": [tract @ ntal.T]}


# ------------------------------ parameter init --------------------------------
def init_params(key, low, nta_dim, high, nheads):
    # GRUCell.reset_parameters: every weight ~ U(-1/sqrt(hidden), 1/sqrt(hidden))
    std = 1.0 / (float(high) ** 0.5)
    ks = jax.random.split(key, 9)
    u = lambda k, s: jax.random.uniform(k, s, jnp.float32, -std, std)
    params = {
        "wq": u(ks[0], (3, nheads, low, low)),
        "wk": u(ks[1], (3, nheads, low, high)),
        "wv": u(ks[2], (3, nheads, low, low)),
        "wo": u(ks[3], (3, nheads, high, high)),   # out_layer weight.T, per head chunk
        "bo": u(ks[4], (3, 1, high)),
        "wh": u(ks[5], (3, high, high)),           # h2{r,z,n} weight.T
        "bh": u(ks[6], (3, 1, high)),
    }
    # binary linkage matrices; guarantee >=1 link per source row
    pt = (jax.random.uniform(ks[7], (low, high)) > 0.6).astype(jnp.float32)
    params["puma_tract"] = pt.at[:, 0].set(1.0)
    nt = (jax.random.uniform(ks[8], (nta_dim, high)) > 0.6).astype(jnp.float32)
    params["nta_tract"] = nt.at[:, 0].set(1.0)
    return params


if __name__ == "__main__":
    # hidden_dims = [n_puma(low)=8, n_nta=16, n_tract(high)=32], nheads=2
    B, seq = 2, 8
    low, nta_dim, high = 8, 16, 32
    nheads = 2

    key = jax.random.PRNGKey(0)
    kp, kx = jax.random.split(key)
    params = init_params(kp, low, nta_dim, high, nheads)
    att = jax.random.normal(kx, (B, seq, low), jnp.float32)

    out = puma_tract_forward(att, params, rec="bottomup")
    jax.block_until_ready(out["tract"])
    jax.block_until_ready(out["rec_pumas"][0])
    jax.block_until_ready(out["rec_ntas"][0])

    ref = reference_forward(att, params)
    np.testing.assert_allclose(np.asarray(out["tract"]), np.asarray(ref["tract"]),
                               rtol=1e-2, atol=1e-2)
    np.testing.assert_allclose(np.asarray(out["rec_pumas"][0]),
                               np.asarray(ref["rec_pumas"][0]), rtol=1e-2, atol=1e-2)
    np.testing.assert_allclose(np.asarray(out["rec_ntas"][0]),
                               np.asarray(ref["rec_ntas"][0]), rtol=1e-2, atol=1e-2)
    assert out["tract"].shape == (B, seq, high)
    assert out["rec_pumas"][0].shape == (B, seq, low)
    assert out["rec_ntas"][0].shape == (B, seq, nta_dim)
    print("KERNEL_OK")
</pallas_src>

<mosaic_0001>
module attributes {stable_mosaic.version = 11 : i64} {
  func.func @attention_gates_kernel(%arg0: i32, %arg1: memref<16x8xf32, #tpu.memory_space<vmem>>, %arg2: memref<8x128xf32, #tpu.memory_space<vmem>>, %arg3: memref<8x768xf32, #tpu.memory_space<vmem>>, %arg4: memref<3x256x128xf32, #tpu.memory_space<vmem>>, %arg5: memref<1x384xf32, #tpu.memory_space<vmem>>, %arg6: memref<8x128xf32, #tpu.memory_space<vmem>>, %arg7: memref<16x384xf32, #tpu.memory_space<vmem>>) attributes {dimension_semantics = [#tpu.dimension_semantics<parallel>], iteration_bounds = array<i64: 1>, scalar_prefetch = 0 : i64, scratch_operands = 0 : i64, tpu.core_type = #tpu.core_type<tc>, window_params = [{transform_indices = @transform_0, window_bounds = array<i64: 16, 8>}, {pipeline_mode = #tpu.pipeline_mode<synchronous>, transform_indices = @transform_1, window_bounds = array<i64: 8, 128>}, {pipeline_mode = #tpu.pipeline_mode<synchronous>, transform_indices = @transform_2, window_bounds = array<i64: 8, 768>}, {pipeline_mode = #tpu.pipeline_mode<synchronous>, transform_indices = @transform_3, window_bounds = array<i64: 3, 256, 128>}, {pipeline_mode = #tpu.pipeline_mode<synchronous>, transform_indices = @transform_4, window_bounds = array<i64: 1, 384>}, {pipeline_mode = #tpu.pipeline_mode<synchronous>, transform_indices = @transform_5, window_bounds = array<i64: 8, 128>}, {transform_indices = @transform_6, window_bounds = array<i64: 16, 384>}]} {
    %c0 = arith.constant 0 : index
    %c0_0 = arith.constant 0 : index
    %0 = vector.load %arg1[%c0, %c0_0] : memref<16x8xf32, #tpu.memory_space<vmem>>, vector<16x8xf32>
    %c0_1 = arith.constant 0 : index
    %c0_2 = arith.constant 0 : index
    %1 = vector.load %arg6[%c0_1, %c0_2] : memref<8x128xf32, #tpu.memory_space<vmem>>, vector<8x128xf32>
    %cst = arith.constant 5.000000e-01 : f32
    %2 = vector.broadcast %cst : f32 to vector<8x128xf32>
    %3 = arith.cmpf ogt, %1, %2 : vector<8x128xf32>
    %4 = vector.shape_cast %3 : vector<8x128xi1> to vector<1x8x128xi1>
    %5 = vector.shape_cast %4 : vector<1x8x128xi1> to vector<1x8x128xi1>
    %6 = vector.broadcast %5 : vector<1x8x128xi1> to vector<16x8x128xi1>
    %c0_3 = arith.constant 0 : index
    %c0_4 = arith.constant 0 : index
    %7 = vector.load %arg2[%c0_3, %c0_4] : memref<8x128xf32, #tpu.memory_space<vmem>>, vector<8x128xf32>
    %cst_5 = arith.constant dense<0.000000e+00> : vector<16x128xf32>
    %8 = tpu.matmul %0, %7, %cst_5 {dimension_numbers = #tpu.dot_dimension_numbers<[1], [0], [0], [1], [0, 0, 1, 1], [], []>} : vector<16x8xf32>, vector<8x128xf32>, vector<16x128xf32> -> vector<16x128xf32>
    %c0_6 = arith.constant 0 : index
    %c0_7 = arith.constant 0 : index
    %9 = vector.load %arg3[%c0_6, %c0_7] : memref<8x768xf32, #tpu.memory_space<vmem>>, vector<8x768xf32>
    %cst_8 = arith.constant dense<0.000000e+00> : vector<16x768xf32>
    %10 = tpu.matmul %0, %9, %cst_8 {dimension_numbers = #tpu.dot_dimension_numbers<[1], [0], [0], [1], [0, 0, 1, 1], [], []>} : vector<16x8xf32>, vector<8x768xf32>, vector<16x768xf32> -> vector<16x768xf32>
    %11 = vector.extract_strided_slice %8 {offsets = [0, 0], sizes = [16, 8], strides = [1, 1]} : vector<16x128xf32> to vector<16x8xf32>
    %12 = vector.extract_strided_slice %8 {offsets = [0, 8], sizes = [16, 8], strides = [1, 1]} : vector<16x128xf32> to vector<16x8xf32>
    %13 = vector.extract_strided_slice %10 {offsets = [0, 0], sizes = [16, 128], strides = [1, 1]} : vector<16x768xf32> to vector<16x128xf32>
    %14 = vector.shape_cast %11 : vector<16x8xf32> to vector<16x8x1xf32>
    %15 = vector.shape_cast %13 : vector<16x128xf32> to vector<16x1x128xf32>
    %16 = vector.broadcast %14 : vector<16x8x1xf32> to vector<16x8x128xf32>
    %17 = vector.broadcast %15 : vector<16x1x128xf32> to vector<16x8x128xf32>
    %18 = arith.mulf %16, %17 : vector<16x8x128xf32>
    %cst_9 = arith.constant 9.000000e+15 : f32
    %19 = vector.broadcast %cst_9 : f32 to vector<16x8x128xf32>
    %20 = arith.select %6, %18, %19 : vector<16x8x128xi1>, vector<16x8x128xf32>
    %cst_10 = arith.constant -9.000000e+15 : f32
    %21 = vector.broadcast %cst_10 : f32 to vector<16x8x128xf32>
    %22 = arith.select %6, %18, %21 : vector<16x8x128xi1>, vector<16x8x128xf32>
    %cst_11 = arith.constant dense<0x7F800000> : vector<16x8xf32>
    %23 = vector.multi_reduction <minimumf>, %20, %cst_11 [2] : vector<16x8x128xf32> to vector<16x8xf32>
    %24 = vector.shape_cast %23 : vector<16x8xf32> to vector<16x8x1xf32>
    %cst_12 = arith.constant dense<0xFF800000> : vector<16x8xf32>
    %25 = vector.multi_reduction <maximumf>, %22, %cst_12 [2] : vector<16x8x128xf32> to vector<16x8xf32>
    %26 = vector.shape_cast %25 : vector<16x8xf32> to vector<16x8x1xf32>
    %27 = arith.subf %26, %24 : vector<16x8x1xf32>
    %cst_13 = arith.constant 0.000000e+00 : f32
    %28 = vector.broadcast %cst_13 : f32 to vector<16x8x1xf32>
    %29 = arith.cmpf oeq, %27, %28 : vector<16x8x1xf32>
    %cst_14 = arith.constant 9.99999997E-7 : f32
    %30 = vector.broadcast %cst_14 : f32 to vector<16x8x1xf32>
    %31 = arith.select %29, %30, %27 : vector<16x8x1xi1>, vector<16x8x1xf32>
    %32 = vector.broadcast %24 : vector<16x8x1xf32> to vector<16x8x128xf32>
    %33 = arith.subf %18, %32 : vector<16x8x128xf32>
    %cst_15 = arith.constant 1.000000e+00 : f32
    %34 = vector.broadcast %cst_15 : f32 to vector<16x8x1xf32>
    %35 = arith.divf %34, %31 : vector<16x8x1xf32>
    %36 = vector.broadcast %35 : vector<16x8x1xf32> to vector<16x8x128xf32>
    %37 = arith.mulf %33, %36 : vector<16x8x128xf32>
    %cst_16 = arith.constant -9.000000e+15 : f32
    %38 = vector.broadcast %cst_16 : f32 to vector<16x8x128xf32>
    %39 = arith.select %6, %37, %38 : vector<16x8x128xi1>, vector<16x8x128xf32>
    %40 = math.exp %39 : vector<16x8x128xf32>
    %cst_17 = arith.constant dense<0.000000e+00> : vector<16x8xf32>
    %41 = vector.multi_reduction <add>, %40, %cst_17 [2] : vector<16x8x128xf32> to vector<16x8xf32>
    %42 = vector.shape_cast %41 : vector<16x8xf32> to vector<16x8x1xf32>
    %43 = tpu.reciprocal %42 {approx = true} : vector<16x8x1xf32> -> vector<16x8x1xf32>
    %44 = vector.broadcast %43 : vector<16x8x1xf32> to vector<16x8x128xf32>
    %45 = arith.mulf %40, %44 : vector<16x8x128xf32>
    %46 = vector.shape_cast %12 : vector<16x8xf32> to vector<16x8x1xf32>
    %47 = vector.broadcast %46 : vector<16x8x1xf32> to vector<16x8x128xf32>
    %48 = arith.mulf %47, %45 : vector<16x8x128xf32>
    %cst_18 = arith.constant dense<0.000000e+00> : vector<16x128xf32>
    %49 = vector.multi_reduction <add>, %48, %cst_18 [1] : vector<16x8x128xf32> to vector<16x128xf32>
    %50 = vector.extract_strided_slice %8 {offsets = [0, 16], sizes = [16, 8], strides = [1, 1]} : vector<16x128xf32> to vector<16x8xf32>
    %51 = vector.extract_strided_slice %8 {offsets = [0, 24], sizes = [16, 8], strides = [1, 1]} : vector<16x128xf32> to vector<16x8xf32>
    %52 = vector.extract_strided_slice %10 {offsets = [0, 128], sizes = [16, 128], strides = [1, 1]} : vector<16x768xf32> to vector<16x128xf32>
    %53 = vector.shape_cast %50 : vector<16x8xf32> to vector<16x8x1xf32>
    %54 = vector.shape_cast %52 : vector<16x128xf32> to vector<16x1x128xf32>
    %55 = vector.broadcast %53 : vector<16x8x1xf32> to vector<16x8x128xf32>
    %56 = vector.broadcast %54 : vector<16x1x128xf32> to vector<16x8x128xf32>
    %57 = arith.mulf %55, %56 : vector<16x8x128xf32>
    %cst_19 = arith.constant 9.000000e+15 : f32
    %58 = vector.broadcast %cst_19 : f32 to vector<16x8x128xf32>
    %59 = arith.select %6, %57, %58 : vector<16x8x128xi1>, vector<16x8x128xf32>
    %cst_20 = arith.constant -9.000000e+15 : f32
    %60 = vector.broadcast %cst_20 : f32 to vector<16x8x128xf32>
    %61 = arith.select %6, %57, %60 : vector<16x8x128xi1>, vector<16x8x128xf32>
    %cst_21 = arith.constant dense<0x7F800000> : vector<16x8xf32>
    %62 = vector.multi_reduction <minimumf>, %59, %cst_21 [2] : vector<16x8x128xf32> to vector<16x8xf32>
    %63 = vector.shape_cast %62 : vector<16x8xf32> to vector<16x8x1xf32>
    %cst_22 = arith.constant dense<0xFF800000> : vector<16x8xf32>
    %64 = vector.multi_reduction <maximumf>, %61, %cst_22 [2] : vector<16x8x128xf32> to vector<16x8xf32>
    %65 = vector.shape_cast %64 : vector<16x8xf32> to vector<16x8x1xf32>
    %66 = arith.subf %65, %63 : vector<16x8x1xf32>
    %cst_23 = arith.constant 0.000000e+00 : f32
    %67 = vector.broadcast %cst_23 : f32 to vector<16x8x1xf32>
    %68 = arith.cmpf oeq, %66, %67 : vector<16x8x1xf32>
    %cst_24 = arith.constant 9.99999997E-7 : f32
    %69 = vector.broadcast %cst_24 : f32 to vector<16x8x1xf32>
    %70 = arith.select %68, %69, %66 : vector<16x8x1xi1>, vector<16x8x1xf32>
    %71 = vector.broadcast %63 : vector<16x8x1xf32> to vector<16x8x128xf32>
    %72 = arith.subf %57, %71 : vector<16x8x128xf32>
    %cst_25 = arith.constant 1.000000e+00 : f32
    %73 = vector.broadcast %cst_25 : f32 to vector<16x8x1xf32>
    %74 = arith.divf %73, %70 : vector<16x8x1xf32>
    %75 = vector.broadcast %74 : vector<16x8x1xf32> to vector<16x8x128xf32>
    %76 = arith.mulf %72, %75 : vector<16x8x128xf32>
    %cst_26 = arith.constant -9.000000e+15 : f32
    %77 = vector.broadcast %cst_26 : f32 to vector<16x8x128xf32>
    %78 = arith.select %6, %76, %77 : vector<16x8x128xi1>, vector<16x8x128xf32>
    %79 = math.exp %78 : vector<16x8x128xf32>
    %cst_27 = arith.constant dense<0.000000e+00> : vector<16x8xf32>
    %80 = vector.multi_reduction <add>, %79, %cst_27 [2] : vector<16x8x128xf32> to vector<16x8xf32>
    %81 = vector.shape_cast %80 : vector<16x8xf32> to vector<16x8x1xf32>
    %82 = tpu.reciprocal %81 {approx = true} : vector<16x8x1xf32> -> vector<16x8x1xf32>
    %83 = vector.broadcast %82 : vector<16x8x1xf32> to vector<16x8x128xf32>
    %84 = arith.mulf %79, %83 : vector<16x8x128xf32>
    %85 = vector.shape_cast %51 : vector<16x8xf32> to vector<16x8x1xf32>
    %86 = vector.broadcast %85 : vector<16x8x1xf32> to vector<16x8x128xf32>
    %87 = arith.mulf %86, %84 : vector<16x8x128xf32>
    %cst_28 = arith.constant dense<0.000000e+00> : vector<16x128xf32>
    %88 = vector.multi_reduction <add>, %87, %cst_28 [1] : vector<16x8x128xf32> to vector<16x128xf32>
    %89 = vector.extract_strided_slice %8 {offsets = [0, 32], sizes = [16, 8], strides = [1, 1]} : vector<16x128xf32> to vector<16x8xf32>
    %90 = vector.extract_strided_slice %8 {offsets = [0, 40], sizes = [16, 8], strides = [1, 1]} : vector<16x128xf32> to vector<16x8xf32>
    %91 = vector.extract_strided_slice %10 {offsets = [0, 256], sizes = [16, 128], strides = [1, 1]} : vector<16x768xf32> to vector<16x128xf32>
    %92 = vector.shape_cast %89 : vector<16x8xf32> to vector<16x8x1xf32>
    %93 = vector.shape_cast %91 : vector<16x128xf32> to vector<16x1x128xf32>
    %94 = vector.broadcast %92 : vector<16x8x1xf32> to vector<16x8x128xf32>
    %95 = vector.broadcast %93 : vector<16x1x128xf32> to vector<16x8x128xf32>
    %96 = arith.mulf %94, %95 : vector<16x8x128xf32>
    %cst_29 = arith.constant 9.000000e+15 : f32
    %97 = vector.broadcast %cst_29 : f32 to vector<16x8x128xf32>
    %98 = arith.select %6, %96, %97 : vector<16x8x128xi1>, vector<16x8x128xf32>
    %cst_30 = arith.constant -9.000000e+15 : f32
    %99 = vector.broadcast %cst_30 : f32 to vector<16x8x128xf32>
    %100 = arith.select %6, %96, %99 : vector<16x8x128xi1>, vector<16x8x128xf32>
    %cst_31 = arith.constant dense<0x7F800000> : vector<16x8xf32>
    %101 = vector.multi_reduction <minimumf>, %98, %cst_31 [2] : vector<16x8x128xf32> to vector<16x8xf32>
    %102 = vector.shape_cast %101 : vector<16x8xf32> to vector<16x8x1xf32>
    %cst_32 = arith.constant dense<0xFF800000> : vector<16x8xf32>
    %103 = vector.multi_reduction <maximumf>, %100, %cst_32 [2] : vector<16x8x128xf32> to vector<16x8xf32>
    %104 = vector.shape_cast %103 : vector<16x8xf32> to vector<16x8x1xf32>
    %105 = arith.subf %104, %102 : vector<16x8x1xf32>
    %cst_33 = arith.constant 0.000000e+00 : f32
    %106 = vector.broadcast %cst_33 : f32 to vector<16x8x1xf32>
    %107 = arith.cmpf oeq, %105, %106 : vector<16x8x1xf32>
    %cst_34 = arith.constant 9.99999997E-7 : f32
    %108 = vector.broadcast %cst_34 : f32 to vector<16x8x1xf32>
    %109 = arith.select %107, %108, %105 : vector<16x8x1xi1>, vector<16x8x1xf32>
    %110 = vector.broadcast %102 : vector<16x8x1xf32> to vector<16x8x128xf32>
    %111 = arith.subf %96, %110 : vector<16x8x128xf32>
    %cst_35 = arith.constant 1.000000e+00 : f32
    %112 = vector.broadcast %cst_35 : f32 to vector<16x8x1xf32>
    %113 = arith.divf %112, %109 : vector<16x8x1xf32>
    %114 = vector.broadcast %113 : vector<16x8x1xf32> to vector<16x8x128xf32>
    %115 = arith.mulf %111, %114 : vector<16x8x128xf32>
    %cst_36 = arith.constant -9.000000e+15 : f32
    %116 = vector.broadcast %cst_36 : f32 to vector<16x8x128xf32>
    %117 = arith.select %6, %115, %116 : vector<16x8x128xi1>, vector<16x8x128xf32>
    %118 = math.exp %117 : vector<16x8x128xf32>
    %cst_37 = arith.constant dense<0.000000e+00> : vector<16x8xf32>
    %119 = vector.multi_reduction <add>, %118, %cst_37 [2] : vector<16x8x128xf32> to vector<16x8xf32>
    %120 = vector.shape_cast %119 : vector<16x8xf32> to vector<16x8x1xf32>
    %121 = tpu.reciprocal %120 {approx = true} : vector<16x8x1xf32> -> vector<16x8x1xf32>
    %122 = vector.broadcast %121 : vector<16x8x1xf32> to vector<16x8x128xf32>
    %123 = arith.mulf %118, %122 : vector<16x8x128xf32>
    %124 = vector.shape_cast %90 : vector<16x8xf32> to vector<16x8x1xf32>
    %125 = vector.broadcast %124 : vector<16x8x1xf32> to vector<16x8x128xf32>
    %126 = arith.mulf %125, %123 : vector<16x8x128xf32>
    %cst_38 = arith.constant dense<0.000000e+00> : vector<16x128xf32>
    %127 = vector.multi_reduction <add>, %126, %cst_38 [1] : vector<16x8x128xf32> to vector<16x128xf32>
    %128 = vector.extract_strided_slice %8 {offsets = [0, 48], sizes = [16, 8], strides = [1, 1]} : vector<16x128xf32> to vector<16x8xf32>
    %129 = vector.extract_strided_slice %8 {offsets = [0, 56], sizes = [16, 8], strides = [1, 1]} : vector<16x128xf32> to vector<16x8xf32>
    %130 = vector.extract_strided_slice %10 {offsets = [0, 384], sizes = [16, 128], strides = [1, 1]} : vector<16x768xf32> to vector<16x128xf32>
    %131 = vector.shape_cast %128 : vector<16x8xf32> to vector<16x8x1xf32>
    %132 = vector.shape_cast %130 : vector<16x128xf32> to vector<16x1x128xf32>
    %133 = vector.broadcast %131 : vector<16x8x1xf32> to vector<16x8x128xf32>
    %134 = vector.broadcast %132 : vector<16x1x128xf32> to vector<16x8x128xf32>
    %135 = arith.mulf %133, %134 : vector<16x8x128xf32>
    %cst_39 = arith.constant 9.000000e+15 : f32
    %136 = vector.broadcast %cst_39 : f32 to vector<16x8x128xf32>
    %137 = arith.select %6, %135, %136 : vector<16x8x128xi1>, vector<16x8x128xf32>
    %cst_40 = arith.constant -9.000000e+15 : f32
    %138 = vector.broadcast %cst_40 : f32 to vector<16x8x128xf32>
    %139 = arith.select %6, %135, %138 : vector<16x8x128xi1>, vector<16x8x128xf32>
    %cst_41 = arith.constant dense<0x7F800000> : vector<16x8xf32>
    %140 = vector.multi_reduction <minimumf>, %137, %cst_41 [2] : vector<16x8x128xf32> to vector<16x8xf32>
    %141 = vector.shape_cast %140 : vector<16x8xf32> to vector<16x8x1xf32>
    %cst_42 = arith.constant dense<0xFF800000> : vector<16x8xf32>
    %142 = vector.multi_reduction <maximumf>, %139, %cst_42 [2] : vector<16x8x128xf32> to vector<16x8xf32>
    %143 = vector.shape_cast %142 : vector<16x8xf32> to vector<16x8x1xf32>
    %144 = arith.subf %143, %141 : vector<16x8x1xf32>
    %cst_43 = arith.constant 0.000000e+00 : f32
    %145 = vector.broadcast %cst_43 : f32 to vector<16x8x1xf32>
    %146 = arith.cmpf oeq, %144, %145 : vector<16x8x1xf32>
    %cst_44 = arith.constant 9.99999997E-7 : f32
    %147 = vector.broadcast %cst_44 : f32 to vector<16x8x1xf32>
    %148 = arith.select %146, %147, %144 : vector<16x8x1xi1>, vector<16x8x1xf32>
    %149 = vector.broadcast %141 : vector<16x8x1xf32> to vector<16x8x128xf32>
    %150 = arith.subf %135, %149 : vector<16x8x128xf32>
    %cst_45 = arith.constant 1.000000e+00 : f32
    %151 = vector.broadcast %cst_45 : f32 to vector<16x8x1xf32>
    %152 = arith.divf %151, %148 : vector<16x8x1xf32>
    %153 = vector.broadcast %152 : vector<16x8x1xf32> to vector<16x8x128xf32>
    %154 = arith.mulf %150, %153 : vector<16x8x128xf32>
    %cst_46 = arith.constant -9.000000e+15 : f32
    %155 = vector.broadcast %cst_46 : f32 to vector<16x8x128xf32>
    %156 = arith.select %6, %154, %155 : vector<16x8x128xi1>, vector<16x8x128xf32>
    %157 = math.exp %156 : vector<16x8x128xf32>
    %cst_47 = arith.constant dense<0.000000e+00> : vector<16x8xf32>
    %158 = vector.multi_reduction <add>, %157, %cst_47 [2] : vector<16x8x128xf32> to vector<16x8xf32>
    %159 = vector.shape_cast %158 : vector<16x8xf32> to vector<16x8x1xf32>
    %160 = tpu.reciprocal %159 {approx = true} : vector<16x8x1xf32> -> vector<16x8x1xf32>
    %161 = vector.broadcast %160 : vector<16x8x1xf32> to vector<16x8x128xf32>
    %162 = arith.mulf %157, %161 : vector<16x8x128xf32>
    %163 = vector.shape_cast %129 : vector<16x8xf32> to vector<16x8x1xf32>
    %164 = vector.broadcast %163 : vector<16x8x1xf32> to vector<16x8x128xf32>
    %165 = arith.mulf %164, %162 : vector<16x8x128xf32>
    %cst_48 = arith.constant dense<0.000000e+00> : vector<16x128xf32>
    %166 = vector.multi_reduction <add>, %165, %cst_48 [1] : vector<16x8x128xf32> to vector<16x128xf32>
    %167 = vector.extract_strided_slice %8 {offsets = [0, 64], sizes = [16, 8], strides = [1, 1]} : vector<16x128xf32> to vector<16x8xf32>
    %168 = vector.extract_strided_slice %8 {offsets = [0, 72], sizes = [16, 8], strides = [1, 1]} : vector<16x128xf32> to vector<16x8xf32>
    %169 = vector.extract_strided_slice %10 {offsets = [0, 512], sizes = [16, 128], strides = [1, 1]} : vector<16x768xf32> to vector<16x128xf32>
    %170 = vector.shape_cast %167 : vector<16x8xf32> to vector<16x8x1xf32>
    %171 = vector.shape_cast %169 : vector<16x128xf32> to vector<16x1x128xf32>
    %172 = vector.broadcast %170 : vector<16x8x1xf32> to vector<16x8x128xf32>
    %173 = vector.broadcast %171 : vector<16x1x128xf32> to vector<16x8x128xf32>
    %174 = arith.mulf %172, %173 : vector<16x8x128xf32>
    %cst_49 = arith.constant 9.000000e+15 : f32
    %175 = vector.broadcast %cst_49 : f32 to vector<16x8x128xf32>
    %176 = arith.select %6, %174, %175 : vector<16x8x128xi1>, vector<16x8x128xf32>
    %cst_50 = arith.constant -9.000000e+15 : f32
    %177 = vector.broadcast %cst_50 : f32 to vector<16x8x128xf32>
    %178 = arith.select %6, %174, %177 : vector<16x8x128xi1>, vector<16x8x128xf32>
    %cst_51 = arith.constant dense<0x7F800000> : vector<16x8xf32>
    %179 = vector.multi_reduction <minimumf>, %176, %cst_51 [2] : vector<16x8x128xf32> to vector<16x8xf32>
    %180 = vector.shape_cast %179 : vector<16x8xf32> to vector<16x8x1xf32>
    %cst_52 = arith.constant dense<0xFF800000> : vector<16x8xf32>
    %181 = vector.multi_reduction <maximumf>, %178, %cst_52 [2] : vector<16x8x128xf32> to vector<16x8xf32>
    %182 = vector.shape_cast %181 : vector<16x8xf32> to vector<16x8x1xf32>
    %183 = arith.subf %182, %180 : vector<16x8x1xf32>
    %cst_53 = arith.constant 0.000000e+00 : f32
    %184 = vector.broadcast %cst_53 : f32 to vector<16x8x1xf32>
    %185 = arith.cmpf oeq, %183, %184 : vector<16x8x1xf32>
    %cst_54 = arith.constant 9.99999997E-7 : f32
    %186 = vector.broadcast %cst_54 : f32 to vector<16x8x1xf32>
    %187 = arith.select %185, %186, %183 : vector<16x8x1xi1>, vector<16x8x1xf32>
    %188 = vector.broadcast %180 : vector<16x8x1xf32> to vector<16x8x128xf32>
    %189 = arith.subf %174, %188 : vector<16x8x128xf32>
    %cst_55 = arith.constant 1.000000e+00 : f32
    %190 = vector.broadcast %cst_55 : f32 to vector<16x8x1xf32>
    %191 = arith.divf %190, %187 : vector<16x8x1xf32>
    %192 = vector.broadcast %191 : vector<16x8x1xf32> to vector<16x8x128xf32>
    %193 = arith.mulf %189, %192 : vector<16x8x128xf32>
    %cst_56 = arith.constant -9.000000e+15 : f32
    %194 = vector.broadcast %cst_56 : f32 to vector<16x8x128xf32>
    %195 = arith.select %6, %193, %194 : vector<16x8x128xi1>, vector<16x8x128xf32>
    %196 = math.exp %195 : vector<16x8x128xf32>
    %cst_57 = arith.constant dense<0.000000e+00> : vector<16x8xf32>
    %197 = vector.multi_reduction <add>, %196, %cst_57 [2] : vector<16x8x128xf32> to vector<16x8xf32>
    %198 = vector.shape_cast %197 : vector<16x8xf32> to vector<16x8x1xf32>
    %199 = tpu.reciprocal %198 {approx = true} : vector<16x8x1xf32> -> vector<16x8x1xf32>
    %200 = vector.broadcast %199 : vector<16x8x1xf32> to vector<16x8x128xf32>
    %201 = arith.mulf %196, %200 : vector<16x8x128xf32>
    %202 = vector.shape_cast %168 : vector<16x8xf32> to vector<16x8x1xf32>
    %203 = vector.broadcast %202 : vector<16x8x1xf32> to vector<16x8x128xf32>
    %204 = arith.mulf %203, %201 : vector<16x8x128xf32>
    %cst_58 = arith.constant dense<0.000000e+00> : vector<16x128xf32>
    %205 = vector.multi_reduction <add>, %204, %cst_58 [1] : vector<16x8x128xf32> to vector<16x128xf32>
    %206 = vector.extract_strided_slice %8 {offsets = [0, 80], sizes = [16, 8], strides = [1, 1]} : vector<16x128xf32> to vector<16x8xf32>
    %207 = vector.extract_strided_slice %8 {offsets = [0, 88], sizes = [16, 8], strides = [1, 1]} : vector<16x128xf32> to vector<16x8xf32>
    %208 = vector.extract_strided_slice %10 {offsets = [0, 640], sizes = [16, 128], strides = [1, 1]} : vector<16x768xf32> to vector<16x128xf32>
    %209 = vector.shape_cast %206 : vector<16x8xf32> to vector<16x8x1xf32>
    %210 = vector.shape_cast %208 : vector<16x128xf32> to vector<16x1x128xf32>
    %211 = vector.broadcast %209 : vector<16x8x1xf32> to vector<16x8x128xf32>
    %212 = vector.broadcast %210 : vector<16x1x128xf32> to vector<16x8x128xf32>
    %213 = arith.mulf %211, %212 : vector<16x8x128xf32>
    %cst_59 = arith.constant 9.000000e+15 : f32
    %214 = vector.broadcast %cst_59 : f32 to vector<16x8x128xf32>
    %215 = arith.select %6, %213, %214 : vector<16x8x128xi1>, vector<16x8x128xf32>
    %cst_60 = arith.constant -9.000000e+15 : f32
    %216 = vector.broadcast %cst_60 : f32 to vector<16x8x128xf32>
    %217 = arith.select %6, %213, %216 : vector<16x8x128xi1>, vector<16x8x128xf32>
    %cst_61 = arith.constant dense<0x7F800000> : vector<16x8xf32>
    %218 = vector.multi_reduction <minimumf>, %215, %cst_61 [2] : vector<16x8x128xf32> to vector<16x8xf32>
    %219 = vector.shape_cast %218 : vector<16x8xf32> to vector<16x8x1xf32>
    %cst_62 = arith.constant dense<0xFF800000> : vector<16x8xf32>
    %220 = vector.multi_reduction <maximumf>, %217, %cst_62 [2] : vector<16x8x128xf32> to vector<16x8xf32>
    %221 = vector.shape_cast %220 : vector<16x8xf32> to vector<16x8x1xf32>
    %222 = arith.subf %221, %219 : vector<16x8x1xf32>
    %cst_63 = arith.constant 0.000000e+00 : f32
    %223 = vector.broadcast %cst_63 : f32 to vector<16x8x1xf32>
    %224 = arith.cmpf oeq, %222, %223 : vector<16x8x1xf32>
    %cst_64 = arith.constant 9.99999997E-7 : f32
    %225 = vector.broadcast %cst_64 : f32 to vector<16x8x1xf32>
    %226 = arith.select %224, %225, %222 : vector<16x8x1xi1>, vector<16x8x1xf32>
    %227 = vector.broadcast %219 : vector<16x8x1xf32> to vector<16x8x128xf32>
    %228 = arith.subf %213, %227 : vector<16x8x128xf32>
    %cst_65 = arith.constant 1.000000e+00 : f32
    %229 = vector.broadcast %cst_65 : f32 to vector<16x8x1xf32>
    %230 = arith.divf %229, %226 : vector<16x8x1xf32>
    %231 = vector.broadcast %230 : vector<16x8x1xf32> to vector<16x8x128xf32>
    %232 = arith.mulf %228, %231 : vector<16x8x128xf32>
    %cst_66 = arith.constant -9.000000e+15 : f32
    %233 = vector.broadcast %cst_66 : f32 to vector<16x8x128xf32>
    %234 = arith.select %6, %232, %233 : vector<16x8x128xi1>, vector<16x8x128xf32>
    %235 = math.exp %234 : vector<16x8x128xf32>
    %cst_67 = arith.constant dense<0.000000e+00> : vector<16x8xf32>
    %236 = vector.multi_reduction <add>, %235, %cst_67 [2] : vector<16x8x128xf32> to vector<16x8xf32>
    %237 = vector.shape_cast %236 : vector<16x8xf32> to vector<16x8x1xf32>
    %238 = tpu.reciprocal %237 {approx = true} : vector<16x8x1xf32> -> vector<16x8x1xf32>
    %239 = vector.broadcast %238 : vector<16x8x1xf32> to vector<16x8x128xf32>
    %240 = arith.mulf %235, %239 : vector<16x8x128xf32>
    %241 = vector.shape_cast %207 : vector<16x8xf32> to vector<16x8x1xf32>
    %242 = vector.broadcast %241 : vector<16x8x1xf32> to vector<16x8x128xf32>
    %243 = arith.mulf %242, %240 : vector<16x8x128xf32>
    %cst_68 = arith.constant dense<0.000000e+00> : vector<16x128xf32>
    %244 = vector.multi_reduction <add>, %243, %cst_68 [1] : vector<16x8x128xf32> to vector<16x128xf32>
    %245 = tpu.concatenate %49, %88 in 1 : vector<16x128xf32>, vector<16x128xf32> -> vector<16x256xf32>
    %c0_69 = arith.constant 0 : index
    %c0_70 = arith.constant 0 : index
    %c0_71 = arith.constant 0 : index
    %246 = vector.load %arg4[%c0_69, %c0_70, %c0_71] : memref<3x256x128xf32, #tpu.memory_space<vmem>>, vector<1x256x128xf32>
    %247 = vector.shape_cast %246 : vector<1x256x128xf32> to vector<256x128xf32>
    %cst_72 = arith.constant dense<0.000000e+00> : vector<16x128xf32>
    %248 = tpu.matmul %245, %247, %cst_72 {dimension_numbers = #tpu.dot_dimension_numbers<[1], [0], [0], [1], [0, 0, 1, 1], [], []>} : vector<16x256xf32>, vector<256x128xf32>, vector<16x128xf32> -> vector<16x128xf32>
    %249 = tpu.concatenate %127, %166 in 1 : vector<16x128xf32>, vector<16x128xf32> -> vector<16x256xf32>
    %c1 = arith.constant 1 : index
    %c0_73 = arith.constant 0 : index
    %c0_74 = arith.constant 0 : index
    %250 = vector.load %arg4[%c1, %c0_73, %c0_74] : memref<3x256x128xf32, #tpu.memory_space<vmem>>, vector<1x256x128xf32>
    %251 = vector.shape_cast %250 : vector<1x256x128xf32> to vector<256x128xf32>
    %cst_75 = arith.constant dense<0.000000e+00> : vector<16x128xf32>
    %252 = tpu.matmul %249, %251, %cst_75 {dimension_numbers = #tpu.dot_dimension_numbers<[1], [0], [0], [1], [0, 0, 1, 1], [], []>} : vector<16x256xf32>, vector<256x128xf32>, vector<16x128xf32> -> vector<16x128xf32>
    %253 = tpu.concatenate %205, %244 in 1 : vector<16x128xf32>, vector<16x128xf32> -> vector<16x256xf32>
    %c2 = arith.constant 2 : index
    %c0_76 = arith.constant 0 : index
    %c0_77 = arith.constant 0 : index
    %254 = vector.load %arg4[%c2, %c0_76, %c0_77] : memref<3x256x128xf32, #tpu.memory_space<vmem>>, vector<1x256x128xf32>
    %255 = vector.shape_cast %254 : vector<1x256x128xf32> to vector<256x128xf32>
    %cst_78 = arith.constant dense<0.000000e+00> : vector<16x128xf32>
    %256 = tpu.matmul %253, %255, %cst_78 {dimension_numbers = #tpu.dot_dimension_numbers<[1], [0], [0], [1], [0, 0, 1, 1], [], []>} : vector<16x256xf32>, vector<256x128xf32>, vector<16x128xf32> -> vector<16x128xf32>
    %257 = tpu.concatenate %248, %252, %256 in 1 : vector<16x128xf32>, vector<16x128xf32>, vector<16x128xf32> -> vector<16x384xf32>
    %c0_79 = arith.constant 0 : index
    %c0_80 = arith.constant 0 : index
    %258 = vector.load %arg5[%c0_79, %c0_80] : memref<1x384xf32, #tpu.memory_space<vmem>>, vector<1x384xf32>
    %259 = vector.broadcast %258 : vector<1x384xf32> to vector<16x384xf32>
    %260 = arith.addf %257, %259 : vector<16x384xf32>
    %c0_81 = arith.constant 0 : index
    %c0_82 = arith.constant 0 : index
    %261 = vector.load %arg7[%c0_81, %c0_82] : memref<16x384xf32, #tpu.memory_space<vmem>>, vector<16x384xf32>
    tpu.vector_store %arg7[%c0_81, %c0_82], %260 {strides = array<i32>} : memref<16x384xf32, #tpu.memory_space<vmem>>, vector<16x384xf32>,
    return
  }
  func.func @transform_0(%arg0: i32) -> (i32, i32) {
    %c0_i32 = arith.constant 0 : i32
    %c0_i32_0 = arith.constant 0 : i32
    return %arg0, %c0_i32 : i32, i32
  }
  func.func @transform_1(%arg0: i32) -> (i32, i32) {
    %c0_i32 = arith.constant 0 : i32
    %c0_i32_0 = arith.constant 0 : i32
    %c0_i32_1 = arith.constant 0 : i32
    return %c0_i32, %c0_i32_0 : i32, i32
  }
  func.func @transform_2(%arg0: i32) -> (i32, i32) {
    %c0_i32 = arith.constant 0 : i32
    %c0_i32_0 = arith.constant 0 : i32
    %c0_i32_1 = arith.constant 0 : i32
    return %c0_i32, %c0_i32_0 : i32, i32
  }
  func.func @transform_3(%arg0: i32) -> (i32, i32, i32) {
    %c0_i32 = arith.constant 0 : i32
    %c0_i32_0 = arith.constant 0 : i32
    %c0_i32_1 = arith.constant 0 : i32
    %c0_i32_2 = arith.constant 0 : i32
    return %c0_i32, %c0_i32_0, %c0_i32_1 : i32, i32, i32
  }
  func.func @transform_4(%arg0: i32) -> (i32, i32) {
    %c0_i32 = arith.constant 0 : i32
    %c0_i32_0 = arith.constant 0 : i32
    %c0_i32_1 = arith.constant 0 : i32
    return %c0_i32, %c0_i32_0 : i32, i32
  }
  func.func @transform_5(%arg0: i32) -> (i32, i32) {
    %c0_i32 = arith.constant 0 : i32
    %c0_i32_0 = arith.constant 0 : i32
    %c0_i32_1 = arith.constant 0 : i32
    return %c0_i32, %c0_i32_0 : i32, i32
  }
  func.func @transform_6(%arg0: i32) -> (i32, i32) {
    %c0_i32 = arith.constant 0 : i32
    %c0_i32_0 = arith.constant 0 : i32
    return %arg0, %c0_i32 : i32, i32
  }
}

</mosaic_0001>

<llo_original>
// kernel: tpu_custom_call.1
$region0: #{tpu_custom_call.1}
  #allocation0 [shape = 'u32[]', space=smem, size = 0x4, offset = 0x4, fixed_abs, tag = 'smem constant byte address 0x4 - core index']
  #allocation1 [shape = 'u32[144,128]{1,0:T(1,128)}', space=vmem, size = 0x12000, scoped, tag = 'internal scratch']
  %s0 = inlined_call_operand.vmem [shape: f32[16,8], index: 0, kind: input, shape index: {}]
  %s1 = inlined_call_operand.vmem [shape: f32[8,128], index: 1, kind: input, shape index: {}]
  %s2 = inlined_call_operand.hbm [shape: f32[8,768], index: 2, kind: input, shape index: {}]
  %s3 = inlined_call_operand.hbm [shape: f32[3,256,128], index: 3, kind: input, shape index: {}]
  %s4 = inlined_call_operand.vmem [shape: f32[1,384], index: 4, kind: input, shape index: {}]
  %s5 = inlined_call_operand.vmem [shape: f32[8,128], index: 5, kind: input, shape index: {}]
  %s6 = inlined_call_operand.hbm [shape: f32[16,384], index: 6, kind: output, shape index: {}]
  %s7 = sld [smem:[#allocation0]]
  $region42: #{tpu_custom_call.1} parent=0
    _
  %s9 = ssub.s32 1, %s7
  %s10 = scalar_select 0, %s9, %s7
  $region1: #{tpu_custom_call.1} parent=0
    #allocation2 [shape = 'u8[24576]{0}', space=vmem, size = 0x6000, scoped, tag = 'input window, operand 2, single buffered']
    #allocation3 [shape = 's32[1]{0}', space=sflag, size = 0x4, scoped, tag = 'scoped memory for tpu_custom_call.1']
    #allocation4 [shape = 's32[1]{0}', space=sflag, size = 0x4, scoped, tag = 'scoped memory for tpu_custom_call.1']
    #allocation5 [shape = 'u8[393216]{0}', space=vmem, size = 0x60000, scoped, tag = 'input window, operand 3, single buffered']
    #allocation6 [shape = 's32[1]{0}', space=sflag, size = 0x4, scoped, tag = 'scoped memory for tpu_custom_call.1']
    #allocation7 [shape = 'u8[24576]{0}', space=vmem, size = 0x6000, scoped, tag = 'output window, operand 0, single buffered']
    %11 = vsyncpa [#allocation3], 0
    %12 = vsyncpa [#allocation6], 0
    %13 = vsyncpa [#allocation4], 0
    // Predicated region
    $region2: #{tpu_custom_call.1} parent=1 // pred_check
      _
    $region3: #{tpu_custom_call.1} parent=1 // pred_check_branch
      %15 = sbr.rel (0) target = $region5
    $region4: #{tpu_custom_call.1} parent=1 // pred_region
      _
    $region5: #{tpu_custom_call.1} parent=1 // pred_fallthru
      _
    // Predicated region
    $region6: #{tpu_custom_call.1} parent=1 // pred_check
      _
    $region7: #{tpu_custom_call.1} parent=1 // pred_check_branch
      %17 = sbr.rel (0) target = $region9
    $region8: #{tpu_custom_call.1} parent=1 // pred_region
      _
    $region9: #{tpu_custom_call.1} parent=1 // pred_fallthru
      _
    // Predicated region
    $region10: #{tpu_custom_call.1} parent=1 // pred_check
      _
    $region11: #{tpu_custom_call.1} parent=1 // pred_check_branch
      %19 = sbr.rel (0) target = $region13
    $region12: #{tpu_custom_call.1} parent=1 // pred_region
      %s21 = ssub.s32 768, 768
      %22 = vsyncadd [#allocation3], %s21
      %s24 = sshll.u32 [#allocation2], 4
      %s25 = int_to_ptr.vmem [resolvable:$true] %s24
      %27 = dma.hbm_to_vmem [thread:$0]  %s2, 768, %s25, [#allocation3]
    $region13: #{tpu_custom_call.1} parent=1 // pred_fallthru
      _
    // Predicated region
    $region14: #{tpu_custom_call.1} parent=1 // pred_check
      _
    $region15: #{tpu_custom_call.1} parent=1 // pred_check_branch
      %29 = sbr.rel (0) target = $region17
    $region16: #{tpu_custom_call.1} parent=1 // pred_region
      %s31 = ssub.s32 12288, 12288
      %32 = vsyncadd [#allocation6], %s31
      %s33 = sshll.u32 [#allocation5], 4
      %s34 = int_to_ptr.vmem [resolvable:$true] %s33
      %39 = dma.hbm_to_vmem [thread:$0]  %s3, 12288, %s34, [#allocation6], 128, 128, 8
    $region17: #{tpu_custom_call.1} parent=1 // pred_fallthru
      _
    // Predicated region
    $region18: #{tpu_custom_call.1} parent=1 // pred_check
      _
    $region19: #{tpu_custom_call.1} parent=1 // pred_check_branch
      %41 = sbr.rel (0) target = $region21
    $region20: #{tpu_custom_call.1} parent=1 // pred_region
      _
    $region21: #{tpu_custom_call.1} parent=1 // pred_fallthru
      _
    // Predicated region
    $region22: #{tpu_custom_call.1} parent=1 // pred_check
      _
    $region23: #{tpu_custom_call.1} parent=1 // pred_check_branch
      %43 = sbr.rel (0) target = $region25
    $region24: #{tpu_custom_call.1} parent=1 // pred_region
      _
    $region25: #{tpu_custom_call.1} parent=1 // pred_fallthru
      _
    // Predicated region
    $region26: #{tpu_custom_call.1} parent=1 // pred_check
      _
    $region27: #{tpu_custom_call.1} parent=1 // pred_check_branch
      %45 = sbr.rel (0) target = $region29
    $region28: #{tpu_custom_call.1} parent=1 // pred_region
      %46 = dma.done [#allocation3], 768
    $region29: #{tpu_custom_call.1} parent=1 // pred_fallthru
      _
    // Predicated region
    $region30: #{tpu_custom_call.1} parent=1 // pred_check
      _
    $region31: #{tpu_custom_call.1} parent=1 // pred_check_branch
      %48 = sbr.rel (0) target = $region33
    $region32: #{tpu_custom_call.1} parent=1 // pred_region
      %49 = dma.done [#allocation6], 12288
    $region33: #{tpu_custom_call.1} parent=1 // pred_fallthru
      _
    %v50 = vld [vmem:[%s0] sm:$0xff]
    %v51 = vld [vmem:[%s0 + $0x8] sm:$0xff]
    %v52 = vld [vmem:[%s5] sm:$0xff]
    %vm53 = vcmp.gt.f32.partialorder %v52, 0.5
    %v54 = vsel %vm53, 1, 0
    %vm55 = vcmp.eq.s32.totalorder %v54, 1
    %v56 = vld [vmem:[%s1] sm:$0xff]
    %vm57 = vcmask 64512
    %v59 = vsel %vm57, %v50, 0
    %v62 = vsel %vm57, %v51, 0
    %64 = vmatprep.subr.mxu0 0.0
    %65 = vmatpush1.msra.mxu0 0.0
    %66 = vmatprep.subr.mxu0 0.0
    %67 = vmatpush1.msra.mxu0 0.0
    %68 = vmatprep.subr.mxu0 0.0
    %69 = vmatpush1.msra.mxu0 0.0
    %70 = vmatprep.subr.mxu0 0.0
    %71 = vmatpush1.msra.mxu0 0.0
    %72 = vmatprep.subr.mxu0 0.0
    %73 = vmatpush1.msra.mxu0 0.0
    %74 = vmatprep.subr.mxu0 0.0
    %75 = vmatpush1.msra.mxu0 0.0
    %76 = vmatprep.subr.mxu0 0.0
    %77 = vmatpush1.msra.mxu0 0.0
    %78 = vmatprep.subr.mxu0 0.0
    %79 = vmatpush1.msra.mxu0 0.0
    %80 = vmatprep.subr.mxu0 0.0
    %81 = vmatpush1.msra.mxu0 0.0
    %82 = vmatprep.subr.mxu0 0.0
    %83 = vmatpush1.msra.mxu0 0.0
    %84 = vmatprep.subr.mxu0 0.0
    %85 = vmatpush1.msra.mxu0 0.0
    %86 = vmatprep.subr.mxu0 0.0
    %87 = vmatpush1.msra.mxu0 0.0
    %88 = vmatprep.subr.mxu0 0.0
    %89 = vmatpush1.msra.mxu0 0.0
    %90 = vmatprep.subr.mxu0 0.0
    %91 = vmatpush1.msra.mxu0 0.0
    %92 = vmatprep.subr.mxu0 0.0
    %93 = vmatpush1.msra.mxu0 0.0
    %94 = vmatprep.subr.mxu0 0.0
    %95 = vmatpush1.msra.mxu0 %v56
    %96 = vmatprep.subr.mxu0 0.0
    %97 = vmatpush2.msra.mxu0 0.0
    %98 = vmatprep.subr.mxu0 0.0
    %99 = vmatpush2.msra.mxu0 0.0
    %100 = vmatprep.subr.mxu0 0.0
    %101 = vmatpush2.msra.mxu0 0.0
    %102 = vmatprep.subr.mxu0 0.0
    %103 = vmatpush2.msra.mxu0 0.0
    %104 = vmatprep.subr.mxu0 0.0
    %105 = vmatpush2.msra.mxu0 0.0
    %106 = vmatprep.subr.mxu0 0.0
    %107 = vmatpush2.msra.mxu0 0.0
    %108 = vmatprep.subr.mxu0 0.0
    %109 = vmatpush2.msra.mxu0 0.0
    %110 = vmatprep.subr.mxu0 0.0
    %111 = vmatpush2.msra.mxu0 0.0
    %112 = vmatprep.subr.mxu0 0.0
    %113 = vmatpush2.msra.mxu0 0.0
    %114 = vmatprep.subr.mxu0 0.0
    %115 = vmatpush2.msra.mxu0 0.0
    %116 = vmatprep.subr.mxu0 0.0
    %117 = vmatpush2.msra.mxu0 0.0
    %118 = vmatprep.subr.mxu0 0.0
    %119 = vmatpush2.msra.mxu0 0.0
    %120 = vmatprep.subr.mxu0 0.0
    %121 = vmatpush2.msra.mxu0 0.0
    %122 = vmatprep.subr.mxu0 0.0
    %123 = vmatpush2.msra.mxu0 0.0
    %124 = vmatprep.subr.mxu0 0.0
    %125 = vmatpush2.msra.mxu0 0.0
    %126 = vmatprep.subr.mxu0 0.0
    %127 = vmatpush2.msra.mxu0 0.0
    %128 = vmatprep.mubr.f32.mxu0 0.0
    %129 = vmatmul.mubr.f32.gmra.mxu0 %v59
    %v130 = vpop.f32.mrf.mxu0
    %v131 = vadd.f32 0.0, %v130
    %v132 = vpop.f32.mrf.mxu0
    %133 = vmatprep.mubr.f32.mxu0 0.0
    %134 = vmatmul.mubr.f32.gmra.mxu0 %v62
    %v135 = vpop.f32.mrf.mxu0
    %v136 = vadd.f32 0.0, %v135
    %v137 = vpop.f32.mrf.mxu0
    %138 = vdwg.mxu0
    %v139 = vld [vmem:[#allocation2] sm:$0xff]
    %v140 = vld [vmem:[#allocation2 + $0x8] sm:$0xff]
    %v141 = vld [vmem:[#allocation2 + $0x10] sm:$0xff]
    %v142 = vld [vmem:[#allocation2 + $0x18] sm:$0xff]
    %v143 = vld [vmem:[#allocation2 + $0x20] sm:$0xff]
    %v144 = vld [vmem:[#allocation2 + $0x28] sm:$0xff]
    %145 = vmatprep.subr.mxu0 0.0
    %146 = vmatpush1.msra.mxu0 0.0
    %147 = vmatprep.subr.mxu0 0.0
    %148 = vmatpush1.msra.mxu0 0.0
    %149 = vmatprep.subr.mxu0 0.0
    %150 = vmatpush1.msra.mxu0 0.0
    %151 = vmatprep.subr.mxu0 0.0
    %152 = vmatpush1.msra.mxu0 0.0
    %153 = vmatprep.subr.mxu0 0.0
    %154 = vmatpush1.msra.mxu0 0.0
    %155 = vmatprep.subr.mxu0 0.0
    %156 = vmatpush1.msra.mxu0 0.0
    %157 = vmatprep.subr.mxu0 0.0
    %158 = vmatpush1.msra.mxu0 0.0
    %159 = vmatprep.subr.mxu0 0.0
    %160 = vmatpush1.msra.mxu0 0.0
    %161 = vmatprep.subr.mxu0 0.0
    %162 = vmatpush1.msra.mxu0 0.0
    %163 = vmatprep.subr.mxu0 0.0
    %164 = vmatpush1.msra.mxu0 0.0
    %165 = vmatprep.subr.mxu0 0.0
    %166 = vmatpush1.msra.mxu0 0.0
    %167 = vmatprep.subr.mxu0 0.0
    %168 = vmatpush1.msra.mxu0 0.0
    %169 = vmatprep.subr.mxu0 0.0
    %170 = vmatpush1.msra.mxu0 0.0
    %171 = vmatprep.subr.mxu0 0.0
    %172 = vmatpush1.msra.mxu0 0.0
    %173 = vmatprep.subr.mxu0 0.0
    %174 = vmatpush1.msra.mxu0 0.0
    %175 = vmatprep.subr.mxu0 %v140
    %176 = vmatpush1.msra.mxu0 %v139
    %177 = vmatprep.subr.mxu0 0.0
    %178 = vmatpush2.msra.mxu0 0.0
    %179 = vmatprep.subr.mxu0 0.0
    %180 = vmatpush2.msra.mxu0 0.0
    %181 = vmatprep.subr.mxu0 0.0
    %182 = vmatpush2.msra.mxu0 0.0
    %183 = vmatprep.subr.mxu0 0.0
    %184 = vmatpush2.msra.mxu0 0.0
    %185 = vmatprep.subr.mxu0 0.0
    %186 = vmatpush2.msra.mxu0 0.0
    %187 = vmatprep.subr.mxu0 0.0
    %188 = vmatpush2.msra.mxu0 0.0
    %189 = vmatprep.subr.mxu0 0.0
    %190 = vmatpush2.msra.mxu0 0.0
    %191 = vmatprep.subr.mxu0 0.0
    %192 = vmatpush2.msra.mxu0 0.0
    %193 = vmatprep.subr.mxu0 0.0
    %194 = vmatpush2.msra.mxu0 0.0
    %195 = vmatprep.subr.mxu0 0.0
    %196 = vmatpush2.msra.mxu0 0.0
    %197 = vmatprep.subr.mxu0 0.0
    %198 = vmatpush2.msra.mxu0 0.0
    %199 = vmatprep.subr.mxu0 0.0
    %200 = vmatpush2.msra.mxu0 0.0
    %201 = vmatprep.subr.mxu0 0.0
    %202 = vmatpush2.msra.mxu0 0.0
    %203 = vmatprep.subr.mxu0 0.0
    %204 = vmatpush2.msra.mxu0 0.0
    %205 = vmatprep.subr.mxu0 0.0
    %206 = vmatpush2.msra.mxu0 0.0
    %207 = vmatprep.subr.mxu0 0.0
    %208 = vmatpush2.msra.mxu0 0.0
    %209 = vmatprep.mubr.f32.mxu0 0.0
    %210 = vmatmul.mubr.f32.gmra.mxu0 %v59
    %v211 = vpop.f32.mrf.mxu0
    %v212 = vadd.f32 0.0, %v211
    %v213 = vpop.f32.mrf.mxu0
    %v214 = vadd.f32 0.0, %v213
    %215 = vmatprep.mubr.f32.mxu0 0.0
    %216 = vmatmul.mubr.f32.gmra.mxu0 %v62
    %v217 = vpop.f32.mrf.mxu0
    %v218 = vadd.f32 0.0, %v217
    %v219 = vpop.f32.mrf.mxu0
    %v220 = vadd.f32 0.0, %v219
    %221 = vdwg.mxu0
    %222 = vmatprep.subr.mxu0 0.0
    %223 = vmatpush1.msra.mxu0 0.0
    %224 = vmatprep.subr.mxu0 0.0
    %225 = vmatpush1.msra.mxu0 0.0
    %226 = vmatprep.subr.mxu0 0.0
    %227 = vmatpush1.msra.mxu0 0.0
    %228 = vmatprep.subr.mxu0 0.0
    %229 = vmatpush1.msra.mxu0 0.0
    %230 = vmatprep.subr.mxu0 0.0
    %231 = vmatpush1.msra.mxu0 0.0
    %232 = vmatprep.subr.mxu0 0.0
    %233 = vmatpush1.msra.mxu0 0.0
    %234 = vmatprep.subr.mxu0 0.0
    %235 = vmatpush1.msra.mxu0 0.0
    %236 = vmatprep.subr.mxu0 0.0
    %237 = vmatpush1.msra.mxu0 0.0
    %238 = vmatprep.subr.mxu0 0.0
    %239 = vmatpush1.msra.mxu0 0.0
    %240 = vmatprep.subr.mxu0 0.0
    %241 = vmatpush1.msra.mxu0 0.0
    %242 = vmatprep.subr.mxu0 0.0
    %243 = vmatpush1.msra.mxu0 0.0
    %244 = vmatprep.subr.mxu0 0.0
    %245 = vmatpush1.msra.mxu0 0.0
    %246 = vmatprep.subr.mxu0 0.0
    %247 = vmatpush1.msra.mxu0 0.0
    %248 = vmatprep.subr.mxu0 0.0
    %249 = vmatpush1.msra.mxu0 0.0
    %250 = vmatprep.subr.mxu0 0.0
    %251 = vmatpush1.msra.mxu0 0.0
    %252 = vmatprep.subr.mxu0 %v142
    %253 = vmatpush1.msra.mxu0 %v141
    %254 = vmatprep.subr.mxu0 0.0
    %255 = vmatpush2.msra.mxu0 0.0
    %256 = vmatprep.subr.mxu0 0.0
    %257 = vmatpush2.msra.mxu0 0.0
    %258 = vmatprep.subr.mxu0 0.0
    %259 = vmatpush2.msra.mxu0 0.0
    %260 = vmatprep.subr.mxu0 0.0
    %261 = vmatpush2.msra.mxu0 0.0
    %262 = vmatprep.subr.mxu0 0.0
    %263 = vmatpush2.msra.mxu0 0.0
    %264 = vmatprep.subr.mxu0 0.0
    %265 = vmatpush2.msra.mxu0 0.0
    %266 = vmatprep.subr.mxu0 0.0
    %267 = vmatpush2.msra.mxu0 0.0
    %268 = vmatprep.subr.mxu0 0.0
    %269 = vmatpush2.msra.mxu0 0.0
    %270 = vmatprep.subr.mxu0 0.0
    %271 = vmatpush2.msra.mxu0 0.0
    %272 = vmatprep.subr.mxu0 0.0
    %273 = vmatpush2.msra.mxu0 0.0
    %274 = vmatprep.subr.mxu0 0.0
    %275 = vmatpush2.msra.mxu0 0.0
    %276 = vmatprep.subr.mxu0 0.0
    %277 = vmatpush2.msra.mxu0 0.0
    %278 = vmatprep.subr.mxu0 0.0
    %279 = vmatpush2.msra.mxu0 0.0
    %280 = vmatprep.subr.mxu0 0.0
    %281 = vmatpush2.msra.mxu0 0.0
    %282 = vmatprep.subr.mxu0 0.0
    %283 = vmatpush2.msra.mxu0 0.0
    %284 = vmatprep.subr.mxu0 0.0
    %285 = vmatpush2.msra.mxu0 0.0
    %286 = vmatprep.mubr.f32.mxu0 0.0
    %287 = vmatmul.mubr.f32.gmra.mxu0 %v59
    %v288 = vpop.f32.mrf.mxu0
    %v289 = vadd.f32 0.0, %v288
    %v290 = vpop.f32.mrf.mxu0
    %v291 = vadd.f32 0.0, %v290
    %292 = vmatprep.mubr.f32.mxu0 0.0
    %293 = vmatmul.mubr.f32.gmra.mxu0 %v62
    %v294 = vpop.f32.mrf.mxu0
    %v295 = vadd.f32 0.0, %v294
    %v296 = vpop.f32.mrf.mxu0
    %v297 = vadd.f32 0.0, %v296
    %298 = vdwg.mxu0
    %299 = vmatprep.subr.mxu0 0.0
    %300 = vmatpush1.msra.mxu0 0.0
    %301 = vmatprep.subr.mxu0 0.0
    %302 = vmatpush1.msra.mxu0 0.0
    %303 = vmatprep.subr.mxu0 0.0
    %304 = vmatpush1.msra.mxu0 0.0
    %305 = vmatprep.subr.mxu0 0.0
    %306 = vmatpush1.msra.mxu0 0.0
    %307 = vmatprep.subr.mxu0 0.0
    %308 = vmatpush1.msra.mxu0 0.0
    %309 = vmatprep.subr.mxu0 0.0
    %310 = vmatpush1.msra.mxu0 0.0
    %311 = vmatprep.subr.mxu0 0.0
    %312 = vmatpush1.msra.mxu0 0.0
    %313 = vmatprep.subr.mxu0 0.0
    %314 = vmatpush1.msra.mxu0 0.0
    %315 = vmatprep.subr.mxu0 0.0
    %316 = vmatpush1.msra.mxu0 0.0
    %317 = vmatprep.subr.mxu0 0.0
    %318 = vmatpush1.msra.mxu0 0.0
    %319 = vmatprep.subr.mxu0 0.0
    %320 = vmatpush1.msra.mxu0 0.0
    %321 = vmatprep.subr.mxu0 0.0
    %322 = vmatpush1.msra.mxu0 0.0
    %323 = vmatprep.subr.mxu0 0.0
    %324 = vmatpush1.msra.mxu0 0.0
    %325 = vmatprep.subr.mxu0 0.0
    %326 = vmatpush1.msra.mxu0 0.0
    %327 = vmatprep.subr.mxu0 0.0
    %328 = vmatpush1.msra.mxu0 0.0
    %329 = vmatprep.subr.mxu0 %v144
    %330 = vmatpush1.msra.mxu0 %v143
    %331 = vmatprep.subr.mxu0 0.0
    %332 = vmatpush2.msra.mxu0 0.0
    %333 = vmatprep.subr.mxu0 0.0
    %334 = vmatpush2.msra.mxu0 0.0
    %335 = vmatprep.subr.mxu0 0.0
    %336 = vmatpush2.msra.mxu0 0.0
    %337 = vmatprep.subr.mxu0 0.0
    %338 = vmatpush2.msra.mxu0 0.0
    %339 = vmatprep.subr.mxu0 0.0
    %340 = vmatpush2.msra.mxu0 0.0
    %341 = vmatprep.subr.mxu0 0.0
    %342 = vmatpush2.msra.mxu0 0.0
    %343 = vmatprep.subr.mxu0 0.0
    %344 = vmatpush2.msra.mxu0 0.0
    %345 = vmatprep.subr.mxu0 0.0
    %346 = vmatpush2.msra.mxu0 0.0
    %347 = vmatprep.subr.mxu0 0.0
    %348 = vmatpush2.msra.mxu0 0.0
    %349 = vmatprep.subr.mxu0 0.0
    %350 = vmatpush2.msra.mxu0 0.0
    %351 = vmatprep.subr.mxu0 0.0
    %352 = vmatpush2.msra.mxu0 0.0
    %353 = vmatprep.subr.mxu0 0.0
    %354 = vmatpush2.msra.mxu0 0.0
    %355 = vmatprep.subr.mxu0 0.0
    %356 = vmatpush2.msra.mxu0 0.0
    %357 = vmatprep.subr.mxu0 0.0
    %358 = vmatpush2.msra.mxu0 0.0
    %359 = vmatprep.subr.mxu0 0.0
    %360 = vmatpush2.msra.mxu0 0.0
    %361 = vmatprep.subr.mxu0 0.0
    %362 = vmatpush2.msra.mxu0 0.0
    %363 = vmatprep.mubr.f32.mxu0 0.0
    %364 = vmatmul.mubr.f32.gmra.mxu0 %v59
    %v365 = vpop.f32.mrf.mxu0
    %v366 = vadd.f32 0.0, %v365
    %v367 = vpop.f32.mrf.mxu0
    %v368 = vadd.f32 0.0, %v367
    %369 = vmatprep.mubr.f32.mxu0 0.0
    %370 = vmatmul.mubr.f32.gmra.mxu0 %v62
    %v371 = vpop.f32.mrf.mxu0
    %v372 = vadd.f32 0.0, %v371
    %v373 = vpop.f32.mrf.mxu0
    %v374 = vadd.f32 0.0, %v373
    %375 = vdwg.mxu0
    %v376 = vlaneseq
    %v377 = vshrl.u32 %v376, 7
    %v378 = vsub.s32 0, %v377
    %v379 = vrot.slane %v131, %v378
    %381 = vbcast.lane.b32.xlu0 %v379, 256
    %v382 = vpop.permute.xlu0 %381
    %v383 = vlaneseq
    %v384 = vshrl.u32 %v383, 7
    %v385 = vsub.s32 1, %v384
    %v386 = vrot.slane %v131, %v385
    %388 = vbcast.lane.b32.xlu0 %v386, 256
    %v389 = vpop.permute.xlu0 %388
    %v390 = vlaneseq
    %v391 = vshrl.u32 %v390, 7
    %v392 = vsub.s32 2, %v391
    %v393 = vrot.slane %v131, %v392
    %395 = vbcast.lane.b32.xlu0 %v393, 256
    %v396 = vpop.permute.xlu0 %395
    %v397 = vlaneseq
    %v398 = vshrl.u32 %v397, 7
    %v399 = vsub.s32 3, %v398
    %v400 = vrot.slane %v131, %v399
    %402 = vbcast.lane.b32.xlu0 %v400, 256
    %v403 = vpop.permute.xlu0 %402
    %v404 = vlaneseq
    %v405 = vshrl.u32 %v404, 7
    %v406 = vsub.s32 4, %v405
    %v407 = vrot.slane %v131, %v406
    %409 = vbcast.lane.b32.xlu0 %v407, 256
    %v410 = vpop.permute.xlu0 %409
    %v411 = vlaneseq
    %v412 = vshrl.u32 %v411, 7
    %v413 = vsub.s32 5, %v412
    %v414 = vrot.slane %v131, %v413
    %416 = vbcast.lane.b32.xlu0 %v414, 256
    %v417 = vpop.permute.xlu0 %416
    %v418 = vlaneseq
    %v419 = vshrl.u32 %v418, 7
    %v420 = vsub.s32 6, %v419
    %v421 = vrot.slane %v131, %v420
    %423 = vbcast.lane.b32.xlu0 %v421, 256
    %v424 = vpop.permute.xlu0 %423
    %v425 = vlaneseq
    %v426 = vshrl.u32 %v425, 7
    %v427 = vsub.s32 7, %v426
    %v428 = vrot.slane %v131, %v427
    %430 = vbcast.lane.b32.xlu0 %v428, 256
    %v431 = vpop.permute.xlu0 %430
    %v432 = vlaneseq
    %v433 = vshrl.u32 %v432, 7
    %v434 = vsub.s32 0, %v433
    %v435 = vrot.slane %v136, %v434
    %437 = vbcast.lane.b32.xlu0 %v435, 256
    %v438 = vpop.permute.xlu0 %437
    %v439 = vlaneseq
    %v440 = vshrl.u32 %v439, 7
    %v441 = vsub.s32 1, %v440
    %v442 = vrot.slane %v136, %v441
    %444 = vbcast.lane.b32.xlu0 %v442, 256
    %v445 = vpop.permute.xlu0 %444
    %v446 = vlaneseq
    %v447 = vshrl.u32 %v446, 7
    %v448 = vsub.s32 2, %v447
    %v449 = vrot.slane %v136, %v448
    %451 = vbcast.lane.b32.xlu0 %v449, 256
    %v452 = vpop.permute.xlu0 %451
    %v453 = vlaneseq
    %v454 = vshrl.u32 %v453, 7
    %v455 = vsub.s32 3, %v454
    %v456 = vrot.slane %v136, %v455
    %458 = vbcast.lane.b32.xlu0 %v456, 256
    %v459 = vpop.permute.xlu0 %458
    %v460 = vlaneseq
    %v461 = vshrl.u32 %v460, 7
    %v462 = vsub.s32 4, %v461
    %v463 = vrot.slane %v136, %v462
    %465 = vbcast.lane.b32.xlu0 %v463, 256
    %v466 = vpop.permute.xlu0 %465
    %v467 = vlaneseq
    %v468 = vshrl.u32 %v467, 7
    %v469 = vsub.s32 5, %v468
    %v470 = vrot.slane %v136, %v469
    %472 = vbcast.lane.b32.xlu0 %v470, 256
    %v473 = vpop.permute.xlu0 %472
    %v474 = vlaneseq
    %v475 = vshrl.u32 %v474, 7
    %v476 = vsub.s32 6, %v475
    %v477 = vrot.slane %v136, %v476
    %479 = vbcast.lane.b32.xlu0 %v477, 256
    %v480 = vpop.permute.xlu0 %479
    %v481 = vlaneseq
    %v482 = vshrl.u32 %v481, 7
    %v483 = vsub.s32 7, %v482
    %v484 = vrot.slane %v136, %v483
    %486 = vbcast.lane.b32.xlu0 %v484, 256
    %v487 = vpop.permute.xlu0 %486
    %v490 = vcombine.high %v212, %v212
    %v492 = vunpack.c.l.s4 1966171168
    %v493 = vunpack.c.0.s8 %v492
    %v494 = vlaneseq
    %v495 = vshrl.u32 %v494, 7
    %v496 = vsub.s32 %v493, %v495
    %v497 = vrot.slane %v212, %v496
    %v499 = vunpack.c.l.s4 1966171168
    %v500 = vunpack.c.0.s8 %v499
    %v501 = vlaneseq
    %v502 = vshrl.u32 %v501, 7
    %v503 = vsub.s32 %v500, %v502
    %v504 = vrot.slane %v490, %v503
    %v505 = vcombine.high %v497, %v497
    %v506 = vcombine.high %v504, %v504
    %v508 = vunpack.c.l.s4 1966171168
    %v509 = vunpack.c.0.s8 %v508
    %v510 = vlaneseq
    %v511 = vshrl.u32 %v510, 7
    %v512 = vsub.s32 %v509, %v511
    %v513 = vrot.slane %v497, %v512
    %v515 = vunpack.c.l.s4 1966171168
    %v516 = vunpack.c.0.s8 %v515
    %v517 = vlaneseq
    %v518 = vshrl.u32 %v517, 7
    %v519 = vsub.s32 %v516, %v518
    %v520 = vrot.slane %v504, %v519
    %v522 = vunpack.c.l.s4 1966171168
    %v523 = vunpack.c.0.s8 %v522
    %v524 = vlaneseq
    %v525 = vshrl.u32 %v524, 7
    %v526 = vsub.s32 %v523, %v525
    %v527 = vrot.slane %v505, %v526
    %v529 = vunpack.c.l.s4 1966171168
    %v530 = vunpack.c.0.s8 %v529
    %v531 = vlaneseq
    %v532 = vshrl.u32 %v531, 7
    %v533 = vsub.s32 %v530, %v532
    %v534 = vrot.slane %v506, %v533
    %v535 = vcombine.high %v513, %v513
    %v536 = vcombine.high %v520, %v520
    %v537 = vcombine.high %v527, %v527
    %v538 = vcombine.high %v534, %v534
    %v539 = vcombine.high %v218, %v218
    %v541 = vunpack.c.l.s4 1966171168
    %v542 = vunpack.c.0.s8 %v541
    %v543 = vlaneseq
    %v544 = vshrl.u32 %v543, 7
    %v545 = vsub.s32 %v542, %v544
    %v546 = vrot.slane %v218, %v545
    %v548 = vunpack.c.l.s4 1966171168
    %v549 = vunpack.c.0.s8 %v548
    %v550 = vlaneseq
    %v551 = vshrl.u32 %v550, 7
    %v552 = vsub.s32 %v549, %v551
    %v553 = vrot.slane %v539, %v552
    %v554 = vcombine.high %v546, %v546
    %v555 = vcombine.high %v553, %v553
    %v557 = vunpack.c.l.s4 1966171168
    %v558 = vunpack.c.0.s8 %v557
    %v559 = vlaneseq
    %v560 = vshrl.u32 %v559, 7
    %v561 = vsub.s32 %v558, %v560
    %v562 = vrot.slane %v546, %v561
    %v564 = vunpack.c.l.s4 1966171168
    %v565 = vunpack.c.0.s8 %v564
    %v566 = vlaneseq
    %v567 = vshrl.u32 %v566, 7
    %v568 = vsub.s32 %v565, %v567
    %v569 = vrot.slane %v553, %v568
    %v571 = vunpack.c.l.s4 1966171168
    %v572 = vunpack.c.0.s8 %v571
    %v573 = vlaneseq
    %v574 = vshrl.u32 %v573, 7
    %v575 = vsub.s32 %v572, %v574
    %v576 = vrot.slane %v554, %v575
    %v578 = vunpack.c.l.s4 1966171168
    %v579 = vunpack.c.0.s8 %v578
    %v580 = vlaneseq
    %v581 = vshrl.u32 %v580, 7
    %v582 = vsub.s32 %v579, %v581
    %v583 = vrot.slane %v555, %v582
    %v584 = vcombine.high %v562, %v562
    %v585 = vcombine.high %v569, %v569
    %v586 = vcombine.high %v576, %v576
    %v587 = vcombine.high %v583, %v583
    %v588 = vlaneseq
    %v589 = vshrl.u32 %v588, 7
    %v590 = vsub.s32 0, %v589
    %v591 = vrot.slane %v513, %v590
    %v592 = vlaneseq
    %v593 = vshrl.u32 %v592, 7
    %v594 = vsub.s32 0, %v593
    %v595 = vrot.slane %v527, %v594
    %v596 = vlaneseq
    %v597 = vshrl.u32 %v596, 7
    %v598 = vsub.s32 0, %v597
    %v599 = vrot.slane %v535, %v598
    %v600 = vlaneseq
    %v601 = vshrl.u32 %v600, 7
    %v602 = vsub.s32 0, %v601
    %v603 = vrot.slane %v537, %v602
    %v604 = vlaneseq
    %v605 = vshrl.u32 %v604, 7
    %v606 = vsub.s32 0, %v605
    %v607 = vrot.slane %v520, %v606
    %v608 = vlaneseq
    %v609 = vshrl.u32 %v608, 7
    %v610 = vsub.s32 0, %v609
    %v611 = vrot.slane %v534, %v610
    %v612 = vlaneseq
    %v613 = vshrl.u32 %v612, 7
    %v614 = vsub.s32 0, %v613
    %v615 = vrot.slane %v536, %v614
    %v616 = vlaneseq
    %v617 = vshrl.u32 %v616, 7
    %v618 = vsub.s32 0, %v617
    %v619 = vrot.slane %v538, %v618
    %v620 = vlaneseq
    %v621 = vshrl.u32 %v620, 7
    %v622 = vsub.s32 0, %v621
    %v623 = vrot.slane %v562, %v622
    %v624 = vlaneseq
    %v625 = vshrl.u32 %v624, 7
    %v626 = vsub.s32 0, %v625
    %v627 = vrot.slane %v576, %v626
    %v628 = vlaneseq
    %v629 = vshrl.u32 %v628, 7
    %v630 = vsub.s32 0, %v629
    %v631 = vrot.slane %v584, %v630
    %v632 = vlaneseq
    %v633 = vshrl.u32 %v632, 7
    %v634 = vsub.s32 0, %v633
    %v635 = vrot.slane %v586, %v634
    %v636 = vlaneseq
    %v637 = vshrl.u32 %v636, 7
    %v638 = vsub.s32 0, %v637
    %v639 = vrot.slane %v569, %v638
    %v640 = vlaneseq
    %v641 = vshrl.u32 %v640, 7
    %v642 = vsub.s32 0, %v641
    %v643 = vrot.slane %v583, %v642
    %v644 = vlaneseq
    %v645 = vshrl.u32 %v644, 7
    %v646 = vsub.s32 0, %v645
    %v647 = vrot.slane %v585, %v646
    %v648 = vlaneseq
    %v649 = vshrl.u32 %v648, 7
    %v650 = vsub.s32 0, %v649
    %v651 = vrot.slane %v587, %v650
    %v668 = vmul.f32 %v382, %v591
    %v669 = vmul.f32 %v389, %v595
    %v670 = vmul.f32 %v396, %v599
    %v671 = vmul.f32 %v403, %v603
    %v672 = vmul.f32 %v410, %v607
    %v673 = vmul.f32 %v417, %v611
    %v674 = vmul.f32 %v424, %v615
    %v675 = vmul.f32 %v431, %v619
    %v676 = vmul.f32 %v438, %v623
    %v677 = vmul.f32 %v445, %v627
    %v678 = vmul.f32 %v452, %v631
    %v679 = vmul.f32 %v459, %v635
    %v680 = vmul.f32 %v466, %v639
    %v681 = vmul.f32 %v473, %v643
    %v682 = vmul.f32 %v480, %v647
    %v683 = vmul.f32 %v487, %v651
    %v684 = vsel %vm55, %v668, 9e+15
    %v685 = vsel %vm55, %v669, 9e+15
    %v686 = vsel %vm55, %v670, 9e+15
    %v687 = vsel %vm55, %v671, 9e+15
    %v688 = vsel %vm55, %v672, 9e+15
    %v689 = vsel %vm55, %v673, 9e+15
    %v690 = vsel %vm55, %v674, 9e+15
    %v691 = vsel %vm55, %v675, 9e+15
    %v692 = vsel %vm55, %v676, 9e+15
    %v693 = vsel %vm55, %v677, 9e+15
    %v694 = vsel %vm55, %v678, 9e+15
    %v695 = vsel %vm55, %v679, 9e+15
    %v696 = vsel %vm55, %v680, 9e+15
    %v697 = vsel %vm55, %v681, 9e+15
    %v698 = vsel %vm55, %v682, 9e+15
    %v699 = vsel %vm55, %v683, 9e+15
    %v700 = vsel %vm55, %v668, -9e+15
    %v701 = vsel %vm55, %v669, -9e+15
    %v702 = vsel %vm55, %v670, -9e+15
    %v703 = vsel %vm55, %v671, -9e+15
    %v704 = vsel %vm55, %v672, -9e+15
    %v705 = vsel %vm55, %v673, -9e+15
    %v706 = vsel %vm55, %v674, -9e+15
    %v707 = vsel %vm55, %v675, -9e+15
    %v708 = vsel %vm55, %v676, -9e+15
    %v709 = vsel %vm55, %v677, -9e+15
    %v710 = vsel %vm55, %v678, -9e+15
    %v711 = vsel %vm55, %v679, -9e+15
    %v712 = vsel %vm55, %v680, -9e+15
    %v713 = vsel %vm55, %v681, -9e+15
    %v714 = vsel %vm55, %v682, -9e+15
    %v715 = vsel %vm55, %v683, -9e+15
    %716 = vmin.xlane.f32.xlu0 %v684
    %v717 = vpop.xlane.xlu0 %716
    %718 = vmin.xlane.f32.xlu0 %v685
    %v719 = vpop.xlane.xlu0 %718
    %720 = vmin.xlane.f32.xlu0 %v686
    %v721 = vpop.xlane.xlu0 %720
    %722 = vmin.xlane.f32.xlu0 %v687
    %v723 = vpop.xlane.xlu0 %722
    %724 = vmin.xlane.f32.xlu0 %v688
    %v725 = vpop.xlane.xlu0 %724
    %726 = vmin.xlane.f32.xlu0 %v689
    %v727 = vpop.xlane.xlu0 %726
    %728 = vmin.xlane.f32.xlu0 %v690
    %v729 = vpop.xlane.xlu0 %728
    %730 = vmin.xlane.f32.xlu0 %v691
    %v731 = vpop.xlane.xlu0 %730
    %732 = vmin.xlane.f32.xlu0 %v692
    %v733 = vpop.xlane.xlu0 %732
    %734 = vmin.xlane.f32.xlu0 %v693
    %v735 = vpop.xlane.xlu0 %734
    %736 = vmin.xlane.f32.xlu0 %v694
    %v737 = vpop.xlane.xlu0 %736
    %738 = vmin.xlane.f32.xlu0 %v695
    %v739 = vpop.xlane.xlu0 %738
    %740 = vmin.xlane.f32.xlu0 %v696
    %v741 = vpop.xlane.xlu0 %740
    %742 = vmin.xlane.f32.xlu0 %v697
    %v743 = vpop.xlane.xlu0 %742
    %744 = vmin.xlane.f32.xlu0 %v698
    %v745 = vpop.xlane.xlu0 %744
    %746 = vmin.xlane.f32.xlu0 %v699
    %v747 = vpop.xlane.xlu0 %746
    %748 = vmax.xlane.f32.xlu0 %v700
    %v749 = vpop.xlane.xlu0 %748
    %750 = vmax.xlane.f32.xlu0 %v701
    %v751 = vpop.xlane.xlu0 %750
    %752 = vmax.xlane.f32.xlu0 %v702
    %v753 = vpop.xlane.xlu0 %752
    %754 = vmax.xlane.f32.xlu0 %v703
    %v755 = vpop.xlane.xlu0 %754
    %756 = vmax.xlane.f32.xlu0 %v704
    %v757 = vpop.xlane.xlu0 %756
    %758 = vmax.xlane.f32.xlu0 %v705
    %v759 = vpop.xlane.xlu0 %758
    %760 = vmax.xlane.f32.xlu0 %v706
    %v761 = vpop.xlane.xlu0 %760
    %762 = vmax.xlane.f32.xlu0 %v707
    %v763 = vpop.xlane.xlu0 %762
    %764 = vmax.xlane.f32.xlu0 %v708
    %v765 = vpop.xlane.xlu0 %764
    %766 = vmax.xlane.f32.xlu0 %v709
    %v767 = vpop.xlane.xlu0 %766
    %768 = vmax.xlane.f32.xlu0 %v710
    %v769 = vpop.xlane.xlu0 %768
    %770 = vmax.xlane.f32.xlu0 %v711
    %v771 = vpop.xlane.xlu0 %770
    %772 = vmax.xlane.f32.xlu0 %v712
    %v773 = vpop.xlane.xlu0 %772
    %774 = vmax.xlane.f32.xlu0 %v713
    %v775 = vpop.xlane.xlu0 %774
    %776 = vmax.xlane.f32.xlu0 %v714
    %v777 = vpop.xlane.xlu0 %776
    %778 = vmax.xlane.f32.xlu0 %v715
    %v779 = vpop.xlane.xlu0 %778
    %v780 = vsub.f32 %v749, %v717
    %v781 = vsub.f32 %v751, %v719
    %v782 = vsub.f32 %v753, %v721
    %v783 = vsub.f32 %v755, %v723
    %v784 = vsub.f32 %v757, %v725
    %v785 = vsub.f32 %v759, %v727
    %v786 = vsub.f32 %v761, %v729
    %v787 = vsub.f32 %v763, %v731
    %v788 = vsub.f32 %v765, %v733
    %v789 = vsub.f32 %v767, %v735
    %v790 = vsub.f32 %v769, %v737
    %v791 = vsub.f32 %v771, %v739
    %v792 = vsub.f32 %v773, %v741
    %v793 = vsub.f32 %v775, %v743
    %v794 = vsub.f32 %v777, %v745
    %v795 = vsub.f32 %v779, %v747
    %vm796 = vcmp.eq.f32.partialorder %v780, 0.0
    %vm797 = vcmp.eq.f32.partialorder %v781, 0.0
    %vm798 = vcmp.eq.f32.partialorder %v782, 0.0
    %vm799 = vcmp.eq.f32.partialorder %v783, 0.0
    %vm800 = vcmp.eq.f32.partialorder %v784, 0.0
    %vm801 = vcmp.eq.f32.partialorder %v785, 0.0
    %vm802 = vcmp.eq.f32.partialorder %v786, 0.0
    %vm803 = vcmp.eq.f32.partialorder %v787, 0.0
    %vm804 = vcmp.eq.f32.partialorder %v788, 0.0
    %vm805 = vcmp.eq.f32.partialorder %v789, 0.0
    %vm806 = vcmp.eq.f32.partialorder %v790, 0.0
    %vm807 = vcmp.eq.f32.partialorder %v791, 0.0
    %vm808 = vcmp.eq.f32.partialorder %v792, 0.0
    %vm809 = vcmp.eq.f32.partialorder %v793, 0.0
    %vm810 = vcmp.eq.f32.partialorder %v794, 0.0
    %vm811 = vcmp.eq.f32.partialorder %v795, 0.0
    %v812 = vsel %vm796, 1e-06, %v780
    %v813 = vsel %vm797, 1e-06, %v781
    %v814 = vsel %vm798, 1e-06, %v782
    %v815 = vsel %vm799, 1e-06, %v783
    %v816 = vsel %vm800, 1e-06, %v784
    %v817 = vsel %vm801, 1e-06, %v785
    %v818 = vsel %vm802, 1e-06, %v786
    %v819 = vsel %vm803, 1e-06, %v787
    %v820 = vsel %vm804, 1e-06, %v788
    %v821 = vsel %vm805, 1e-06, %v789
    %v822 = vsel %vm806, 1e-06, %v790
    %v823 = vsel %vm807, 1e-06, %v791
    %v824 = vsel %vm808, 1e-06, %v792
    %v825 = vsel %vm809, 1e-06, %v793
    %v826 = vsel %vm810, 1e-06, %v794
    %v827 = vsel %vm811, 1e-06, %v795
    %v828 = vsub.f32 %v668, %v717
    %v829 = vsub.f32 %v669, %v719
    %v830 = vsub.f32 %v670, %v721
    %v831 = vsub.f32 %v671, %v723
    %v832 = vsub.f32 %v672, %v725
    %v833 = vsub.f32 %v673, %v727
    %v834 = vsub.f32 %v674, %v729
    %v835 = vsub.f32 %v675, %v731
    %v836 = vsub.f32 %v676, %v733
    %v837 = vsub.f32 %v677, %v735
    %v838 = vsub.f32 %v678, %v737
    %v839 = vsub.f32 %v679, %v739
    %v840 = vsub.f32 %v680, %v741
    %v841 = vsub.f32 %v681, %v743
    %v842 = vsub.f32 %v682, %v745
    %v843 = vsub.f32 %v683, %v747
    %v844 = vrcp.pop %v812
    %v845 = vmul.f32 1.0, %v844
    %v846 = vrcp.pop %v813
    %v847 = vmul.f32 1.0, %v846
    %v848 = vrcp.pop %v814
    %v849 = vmul.f32 1.0, %v848
    %v850 = vrcp.pop %v815
    %v851 = vmul.f32 1.0, %v850
    %v852 = vrcp.pop %v816
    %v853 = vmul.f32 1.0, %v852
    %v854 = vrcp.pop %v817
    %v855 = vmul.f32 1.0, %v854
    %v856 = vrcp.pop %v818
    %v857 = vmul.f32 1.0, %v856
    %v858 = vrcp.pop %v819
    %v859 = vmul.f32 1.0, %v858
    %v860 = vrcp.pop %v820
    %v861 = vmul.f32 1.0, %v860
    %v862 = vrcp.pop %v821
    %v863 = vmul.f32 1.0, %v862
    %v864 = vrcp.pop %v822
    %v865 = vmul.f32 1.0, %v864
    %v866 = vrcp.pop %v823
    %v867 = vmul.f32 1.0, %v866
    %v868 = vrcp.pop %v824
    %v869 = vmul.f32 1.0, %v868
    %v870 = vrcp.pop %v825
    %v871 = vmul.f32 1.0, %v870
    %v872 = vrcp.pop %v826
    %v873 = vmul.f32 1.0, %v872
    %v874 = vrcp.pop %v827
    %v875 = vmul.f32 1.0, %v874
    %v876 = vmul.f32 %v828, %v845
    %v877 = vmul.f32 %v829, %v847
    %v878 = vmul.f32 %v830, %v849
    %v879 = vmul.f32 %v831, %v851
    %v880 = vmul.f32 %v832, %v853
    %v881 = vmul.f32 %v833, %v855
    %v882 = vmul.f32 %v834, %v857
    %v883 = vmul.f32 %v835, %v859
    %v884 = vmul.f32 %v836, %v861
    %v885 = vmul.f32 %v837, %v863
    %v886 = vmul.f32 %v838, %v865
    %v887 = vmul.f32 %v839, %v867
    %v888 = vmul.f32 %v840, %v869
    %v889 = vmul.f32 %v841, %v871
    %v890 = vmul.f32 %v842, %v873
    %v891 = vmul.f32 %v843, %v875
    %v892 = vsel %vm55, %v876, -9e+15
    %v893 = vsel %vm55, %v877, -9e+15
    %v894 = vsel %vm55, %v878, -9e+15
    %v895 = vsel %vm55, %v879, -9e+15
    %v896 = vsel %vm55, %v880, -9e+15
    %v897 = vsel %vm55, %v881, -9e+15
    %v898 = vsel %vm55, %v882, -9e+15
    %v899 = vsel %vm55, %v883, -9e+15
    %v900 = vsel %vm55, %v884, -9e+15
    %v901 = vsel %vm55, %v885, -9e+15
    %v902 = vsel %vm55, %v886, -9e+15
    %v903 = vsel %vm55, %v887, -9e+15
    %v904 = vsel %vm55, %v888, -9e+15
    %v905 = vsel %vm55, %v889, -9e+15
    %v906 = vsel %vm55, %v890, -9e+15
    %v907 = vsel %vm55, %v891, -9e+15
    %v908 = vmul.f32 %v892, 1.442695
    %v909 = vpow.pop %v908
    %v910 = vmul.f32 %v893, 1.442695
    %v911 = vpow.pop %v910
    %v912 = vmul.f32 %v894, 1.442695
    %v913 = vpow.pop %v912
    %v914 = vmul.f32 %v895, 1.442695
    %v915 = vpow.pop %v914
    %v916 = vmul.f32 %v896, 1.442695
    %v917 = vpow.pop %v916
    %v918 = vmul.f32 %v897, 1.442695
    %v919 = vpow.pop %v918
    %v920 = vmul.f32 %v898, 1.442695
    %v921 = vpow.pop %v920
    %v922 = vmul.f32 %v899, 1.442695
    %v923 = vpow.pop %v922
    %v924 = vmul.f32 %v900, 1.442695
    %v925 = vpow.pop %v924
    %v926 = vmul.f32 %v901, 1.442695
    %v927 = vpow.pop %v926
    %v928 = vmul.f32 %v902, 1.442695
    %v929 = vpow.pop %v928
    %v930 = vmul.f32 %v903, 1.442695
    %v931 = vpow.pop %v930
    %v932 = vmul.f32 %v904, 1.442695
    %v933 = vpow.pop %v932
    %v934 = vmul.f32 %v905, 1.442695
    %v935 = vpow.pop %v934
    %v936 = vmul.f32 %v906, 1.442695
    %v937 = vpow.pop %v936
    %v938 = vmul.f32 %v907, 1.442695
    %v939 = vpow.pop %v938
    %940 = vadd.xlane.f32.xlu0 %v909
    %v941 = vpop.xlane.xlu0 %940
    %942 = vadd.xlane.f32.xlu0 %v911
    %v943 = vpop.xlane.xlu0 %942
    %944 = vadd.xlane.f32.xlu0 %v913
    %v945 = vpop.xlane.xlu0 %944
    %946 = vadd.xlane.f32.xlu0 %v915
    %v947 = vpop.xlane.xlu0 %946
    %948 = vadd.xlane.f32.xlu0 %v917
    %v949 = vpop.xlane.xlu0 %948
    %950 = vadd.xlane.f32.xlu0 %v919
    %v951 = vpop.xlane.xlu0 %950
    %952 = vadd.xlane.f32.xlu0 %v921
    %v953 = vpop.xlane.xlu0 %952
    %954 = vadd.xlane.f32.xlu0 %v923
    %v955 = vpop.xlane.xlu0 %954
    %956 = vadd.xlane.f32.xlu0 %v925
    %v957 = vpop.xlane.xlu0 %956
    %958 = vadd.xlane.f32.xlu0 %v927
    %v959 = vpop.xlane.xlu0 %958
    %960 = vadd.xlane.f32.xlu0 %v929
    %v961 = vpop.xlane.xlu0 %960
    %962 = vadd.xlane.f32.xlu0 %v931
    %v963 = vpop.xlane.xlu0 %962
    %964 = vadd.xlane.f32.xlu0 %v933
    %v965 = vpop.xlane.xlu0 %964
    %966 = vadd.xlane.f32.xlu0 %v935
    %v967 = vpop.xlane.xlu0 %966
    %968 = vadd.xlane.f32.xlu0 %v937
    %v969 = vpop.xlane.xlu0 %968
    %970 = vadd.xlane.f32.xlu0 %v939
    %v971 = vpop.xlane.xlu0 %970
    %v972 = vrcp.pop %v941
    %v973 = vrcp.pop %v943
    %v974 = vrcp.pop %v945
    %v975 = vrcp.pop %v947
    %v976 = vrcp.pop %v949
    %v977 = vrcp.pop %v951
    %v978 = vrcp.pop %v953
    %v979 = vrcp.pop %v955
    %v980 = vrcp.pop %v957
    %v981 = vrcp.pop %v959
    %v982 = vrcp.pop %v961
    %v983 = vrcp.pop %v963
    %v984 = vrcp.pop %v965
    %v985 = vrcp.pop %v967
    %v986 = vrcp.pop %v969
    %v987 = vrcp.pop %v971
    %v988 = vmul.f32 %v909, %v972
    %v989 = vmul.f32 %v911, %v973
    %v990 = vmul.f32 %v913, %v974
    %v991 = vmul.f32 %v915, %v975
    %v992 = vmul.f32 %v917, %v976
    %v993 = vmul.f32 %v919, %v977
    %v994 = vmul.f32 %v921, %v978
    %v995 = vmul.f32 %v923, %v979
    %v996 = vmul.f32 %v925, %v980
    %v997 = vmul.f32 %v927, %v981
    %v998 = vmul.f32 %v929, %v982
    %v999 = vmul.f32 %v931, %v983
    %v1000 = vmul.f32 %v933, %v984
    %v1001 = vmul.f32 %v935, %v985
    %v1002 = vmul.f32 %v937, %v986
    %v1003 = vmul.f32 %v939, %v987
    %s1005 = sor.u32 256, 8
    %1006 = vbcast.lane.b32.xlu0 %v379, %s1005
    %v1007 = vpop.permute.xlu0 %1006
    %s1009 = sor.u32 256, 8
    %1010 = vbcast.lane.b32.xlu0 %v386, %s1009
    %v1011 = vpop.permute.xlu0 %1010
    %s1013 = sor.u32 256, 8
    %1014 = vbcast.lane.b32.xlu0 %v393, %s1013
    %v1015 = vpop.permute.xlu0 %1014
    %s1017 = sor.u32 256, 8
    %1018 = vbcast.lane.b32.xlu0 %v400, %s1017
    %v1019 = vpop.permute.xlu0 %1018
    %s1021 = sor.u32 256, 8
    %1022 = vbcast.lane.b32.xlu0 %v407, %s1021
    %v1023 = vpop.permute.xlu0 %1022
    %s1025 = sor.u32 256, 8
    %1026 = vbcast.lane.b32.xlu0 %v414, %s1025
    %v1027 = vpop.permute.xlu0 %1026
    %s1029 = sor.u32 256, 8
    %1030 = vbcast.lane.b32.xlu0 %v421, %s1029
    %v1031 = vpop.permute.xlu0 %1030
    %s1033 = sor.u32 256, 8
    %1034 = vbcast.lane.b32.xlu0 %v428, %s1033
    %v1035 = vpop.permute.xlu0 %1034
    %s1037 = sor.u32 256, 8
    %1038 = vbcast.lane.b32.xlu0 %v435, %s1037
    %v1039 = vpop.permute.xlu0 %1038
    %s1041 = sor.u32 256, 8
    %1042 = vbcast.lane.b32.xlu0 %v442, %s1041
    %v1043 = vpop.permute.xlu0 %1042
    %s1045 = sor.u32 256, 8
    %1046 = vbcast.lane.b32.xlu0 %v449, %s1045
    %v1047 = vpop.permute.xlu0 %1046
    %s1049 = sor.u32 256, 8
    %1050 = vbcast.lane.b32.xlu0 %v456, %s1049
    %v1051 = vpop.permute.xlu0 %1050
    %s1053 = sor.u32 256, 8
    %1054 = vbcast.lane.b32.xlu0 %v463, %s1053
    %v1055 = vpop.permute.xlu0 %1054
    %s1057 = sor.u32 256, 8
    %1058 = vbcast.lane.b32.xlu0 %v470, %s1057
    %v1059 = vpop.permute.xlu0 %1058
    %s1061 = sor.u32 256, 8
    %1062 = vbcast.lane.b32.xlu0 %v477, %s1061
    %v1063 = vpop.permute.xlu0 %1062
    %s1065 = sor.u32 256, 8
    %1066 = vbcast.lane.b32.xlu0 %v484, %s1065
    %v1067 = vpop.permute.xlu0 %1066
    %v1068 = vmul.f32 %v1007, %v988
    %v1069 = vmul.f32 %v1011, %v989
    %v1070 = vmul.f32 %v1015, %v990
    %v1071 = vmul.f32 %v1019, %v991
    %v1072 = vmul.f32 %v1023, %v992
    %v1073 = vmul.f32 %v1027, %v993
    %v1074 = vmul.f32 %v1031, %v994
    %v1075 = vmul.f32 %v1035, %v995
    %v1076 = vmul.f32 %v1039, %v996
    %v1077 = vmul.f32 %v1043, %v997
    %v1078 = vmul.f32 %v1047, %v998
    %v1079 = vmul.f32 %v1051, %v999
    %v1080 = vmul.f32 %v1055, %v1000
    %v1081 = vmul.f32 %v1059, %v1001
    %v1082 = vmul.f32 %v1063, %v1002
    %v1083 = vmul.f32 %v1067, %v1003
    %v1084 = vrot.slane %v1068, 4
    %v1085 = vadd.f32 %v1068, %v1084
    %v1086 = vrot.slane %v1085, 2
    %v1087 = vadd.f32 %v1085, %v1086
    %v1088 = vrot.slane %v1087, 1
    %v1089 = vadd.f32 %v1087, %v1088
    %v1090 = vrot.slane %v1069, 4
    %v1091 = vadd.f32 %v1069, %v1090
    %v1092 = vrot.slane %v1091, 2
    %v1093 = vadd.f32 %v1091, %v1092
    %v1094 = vrot.slane %v1093, 1
    %v1095 = vadd.f32 %v1093, %v1094
    %v1096 = vrot.slane %v1070, 4
    %v1097 = vadd.f32 %v1070, %v1096
    %v1098 = vrot.slane %v1097, 2
    %v1099 = vadd.f32 %v1097, %v1098
    %v1100 = vrot.slane %v1099, 1
    %v1101 = vadd.f32 %v1099, %v1100
    %v1102 = vrot.slane %v1071, 4
    %v1103 = vadd.f32 %v1071, %v1102
    %v1104 = vrot.slane %v1103, 2
    %v1105 = vadd.f32 %v1103, %v1104
    %v1106 = vrot.slane %v1105, 1
    %v1107 = vadd.f32 %v1105, %v1106
    %v1108 = vrot.slane %v1072, 4
    %v1109 = vadd.f32 %v1072, %v1108
    %v1110 = vrot.slane %v1109, 2
    %v1111 = vadd.f32 %v1109, %v1110
    %v1112 = vrot.slane %v1111, 1
    %v1113 = vadd.f32 %v1111, %v1112
    %v1114 = vrot.slane %v1073, 4
    %v1115 = vadd.f32 %v1073, %v1114
    %v1116 = vrot.slane %v1115, 2
    %v1117 = vadd.f32 %v1115, %v1116
    %v1118 = vrot.slane %v1117, 1
    %v1119 = vadd.f32 %v1117, %v1118
    %v1120 = vrot.slane %v1074, 4
    %v1121 = vadd.f32 %v1074, %v1120
    %v1122 = vrot.slane %v1121, 2
    %v1123 = vadd.f32 %v1121, %v1122
    %v1124 = vrot.slane %v1123, 1
    %v1125 = vadd.f32 %v1123, %v1124
    %v1126 = vrot.slane %v1075, 4
    %v1127 = vadd.f32 %v1075, %v1126
    %v1128 = vrot.slane %v1127, 2
    %v1129 = vadd.f32 %v1127, %v1128
    %v1130 = vrot.slane %v1129, 1
    %v1131 = vadd.f32 %v1129, %v1130
    %v1132 = vrot.slane %v1076, 4
    %v1133 = vadd.f32 %v1076, %v1132
    %v1134 = vrot.slane %v1133, 2
    %v1135 = vadd.f32 %v1133, %v1134
    %v1136 = vrot.slane %v1135, 1
    %v1137 = vadd.f32 %v1135, %v1136
    %v1138 = vrot.slane %v1077, 4
    %v1139 = vadd.f32 %v1077, %v1138
    %v1140 = vrot.slane %v1139, 2
    %v1141 = vadd.f32 %v1139, %v1140
    %v1142 = vrot.slane %v1141, 1
    %v1143 = vadd.f32 %v1141, %v1142
    %v1144 = vrot.slane %v1078, 4
    %v1145 = vadd.f32 %v1078, %v1144
    %v1146 = vrot.slane %v1145, 2
    %v1147 = vadd.f32 %v1145, %v1146
    %v1148 = vrot.slane %v1147, 1
    %v1149 = vadd.f32 %v1147, %v1148
    %v1150 = vrot.slane %v1079, 4
    %v1151 = vadd.f32 %v1079, %v1150
    %v1152 = vrot.slane %v1151, 2
    %v1153 = vadd.f32 %v1151, %v1152
    %v1154 = vrot.slane %v1153, 1
    %v1155 = vadd.f32 %v1153, %v1154
    %v1156 = vrot.slane %v1080, 4
    %v1157 = vadd.f32 %v1080, %v1156
    %v1158 = vrot.slane %v1157, 2
    %v1159 = vadd.f32 %v1157, %v1158
    %v1160 = vrot.slane %v1159, 1
    %v1161 = vadd.f32 %v1159, %v1160
    %v1162 = vrot.slane %v1081, 4
    %v1163 = vadd.f32 %v1081, %v1162
    %v1164 = vrot.slane %v1163, 2
    %v1165 = vadd.f32 %v1163, %v1164
    %v1166 = vrot.slane %v1165, 1
    %v1167 = vadd.f32 %v1165, %v1166
    %v1168 = vrot.slane %v1082, 4
    %v1169 = vadd.f32 %v1082, %v1168
    %v1170 = vrot.slane %v1169, 2
    %v1171 = vadd.f32 %v1169, %v1170
    %v1172 = vrot.slane %v1171, 1
    %v1173 = vadd.f32 %v1171, %v1172
    %v1174 = vrot.slane %v1083, 4
    %v1175 = vadd.f32 %v1083, %v1174
    %v1176 = vrot.slane %v1175, 2
    %v1177 = vadd.f32 %v1175, %v1176
    %v1178 = vrot.slane %v1177, 1
    %v1179 = vadd.f32 %v1177, %v1178
    %s1181 = sor.u32 256, 16
    %1182 = vbcast.lane.b32.xlu0 %v379, %s1181
    %v1183 = vpop.permute.xlu0 %1182
    %s1185 = sor.u32 256, 16
    %1186 = vbcast.lane.b32.xlu0 %v386, %s1185
    %v1187 = vpop.permute.xlu0 %1186
    %s1189 = sor.u32 256, 16
    %1190 = vbcast.lane.b32.xlu0 %v393, %s1189
    %v1191 = vpop.permute.xlu0 %1190
    %s1193 = sor.u32 256, 16
    %1194 = vbcast.lane.b32.xlu0 %v400, %s1193
    %v1195 = vpop.permute.xlu0 %1194
    %s1197 = sor.u32 256, 16
    %1198 = vbcast.lane.b32.xlu0 %v407, %s1197
    %v1199 = vpop.permute.xlu0 %1198
    %s1201 = sor.u32 256, 16
    %1202 = vbcast.lane.b32.xlu0 %v414, %s1201
    %v1203 = vpop.permute.xlu0 %1202
    %s1205 = sor.u32 256, 16
    %1206 = vbcast.lane.b32.xlu0 %v421, %s1205
    %v1207 = vpop.permute.xlu0 %1206
    %s1209 = sor.u32 256, 16
    %1210 = vbcast.lane.b32.xlu0 %v428, %s1209
    %v1211 = vpop.permute.xlu0 %1210
    %s1213 = sor.u32 256, 16
    %1214 = vbcast.lane.b32.xlu0 %v435, %s1213
    %v1215 = vpop.permute.xlu0 %1214
    %s1217 = sor.u32 256, 16
    %1218 = vbcast.lane.b32.xlu0 %v442, %s1217
    %v1219 = vpop.permute.xlu0 %1218
    %s1221 = sor.u32 256, 16
    %1222 = vbcast.lane.b32.xlu0 %v449, %s1221
    %v1223 = vpop.permute.xlu0 %1222
    %s1225 = sor.u32 256, 16
    %1226 = vbcast.lane.b32.xlu0 %v456, %s1225
    %v1227 = vpop.permute.xlu0 %1226
    %s1229 = sor.u32 256, 16
    %1230 = vbcast.lane.b32.xlu0 %v463, %s1229
    %v1231 = vpop.permute.xlu0 %1230
    %s1233 = sor.u32 256, 16
    %1234 = vbcast.lane.b32.xlu0 %v470, %s1233
    %v1235 = vpop.permute.xlu0 %1234
    %s1237 = sor.u32 256, 16
    %1238 = vbcast.lane.b32.xlu0 %v477, %s1237
    %v1239 = vpop.permute.xlu0 %1238
    %s1241 = sor.u32 256, 16
    %1242 = vbcast.lane.b32.xlu0 %v484, %s1241
    %v1243 = vpop.permute.xlu0 %1242
    %v1246 = vcombine.high %v214, %v214
    %v1248 = vunpack.c.l.s4 1966171168
    %v1249 = vunpack.c.0.s8 %v1248
    %v1250 = vlaneseq
    %v1251 = vshrl.u32 %v1250, 7
    %v1252 = vsub.s32 %v1249, %v1251
    %v1253 = vrot.slane %v214, %v1252
    %v1255 = vunpack.c.l.s4 1966171168
    %v1256 = vunpack.c.0.s8 %v1255
    %v1257 = vlaneseq
    %v1258 = vshrl.u32 %v1257, 7
    %v1259 = vsub.s32 %v1256, %v1258
    %v1260 = vrot.slane %v1246, %v1259
    %v1261 = vcombine.high %v1253, %v1253
    %v1262 = vcombine.high %v1260, %v1260
    %v1264 = vunpack.c.l.s4 1966171168
    %v1265 = vunpack.c.0.s8 %v1264
    %v1266 = vlaneseq
    %v1267 = vshrl.u32 %v1266, 7
    %v1268 = vsub.s32 %v1265, %v1267
    %v1269 = vrot.slane %v1253, %v1268
    %v1271 = vunpack.c.l.s4 1966171168
    %v1272 = vunpack.c.0.s8 %v1271
    %v1273 = vlaneseq
    %v1274 = vshrl.u32 %v1273, 7
    %v1275 = vsub.s32 %v1272, %v1274
    %v1276 = vrot.slane %v1260, %v1275
    %v1278 = vunpack.c.l.s4 1966171168
    %v1279 = vunpack.c.0.s8 %v1278
    %v1280 = vlaneseq
    %v1281 = vshrl.u32 %v1280, 7
    %v1282 = vsub.s32 %v1279, %v1281
    %v1283 = vrot.slane %v1261, %v1282
    %v1285 = vunpack.c.l.s4 1966171168
    %v1286 = vunpack.c.0.s8 %v1285
    %v1287 = vlaneseq
    %v1288 = vshrl.u32 %v1287, 7
    %v1289 = vsub.s32 %v1286, %v1288
    %v1290 = vrot.slane %v1262, %v1289
    %v1291 = vcombine.high %v1269, %v1269
    %v1292 = vcombine.high %v1276, %v1276
    %v1293 = vcombine.high %v1283, %v1283
    %v1294 = vcombine.high %v1290, %v1290
    %v1295 = vcombine.high %v220, %v220
    %v1297 = vunpack.c.l.s4 1966171168
    %v1298 = vunpack.c.0.s8 %v1297
    %v1299 = vlaneseq
    %v1300 = vshrl.u32 %v1299, 7
    %v1301 = vsub.s32 %v1298, %v1300
    %v1302 = vrot.slane %v220, %v1301
    %v1304 = vunpack.c.l.s4 1966171168
    %v1305 = vunpack.c.0.s8 %v1304
    %v1306 = vlaneseq
    %v1307 = vshrl.u32 %v1306, 7
    %v1308 = vsub.s32 %v1305, %v1307
    %v1309 = vrot.slane %v1295, %v1308
    %v1310 = vcombine.high %v1302, %v1302
    %v1311 = vcombine.high %v1309, %v1309
    %v1313 = vunpack.c.l.s4 1966171168
    %v1314 = vunpack.c.0.s8 %v1313
    %v1315 = vlaneseq
    %v1316 = vshrl.u32 %v1315, 7
    %v1317 = vsub.s32 %v1314, %v1316
    %v1318 = vrot.slane %v1302, %v1317
    %v1320 = vunpack.c.l.s4 1966171168
    %v1321 = vunpack.c.0.s8 %v1320
    %v1322 = vlaneseq
    %v1323 = vshrl.u32 %v1322, 7
    %v1324 = vsub.s32 %v1321, %v1323
    %v1325 = vrot.slane %v1309, %v1324
    %v1327 = vunpack.c.l.s4 1966171168
    %v1328 = vunpack.c.0.s8 %v1327
    %v1329 = vlaneseq
    %v1330 = vshrl.u32 %v1329, 7
    %v1331 = vsub.s32 %v1328, %v1330
    %v1332 = vrot.slane %v1310, %v1331
    %v1334 = vunpack.c.l.s4 1966171168
    %v1335 = vunpack.c.0.s8 %v1334
    %v1336 = vlaneseq
    %v1337 = vshrl.u32 %v1336, 7
    %v1338 = vsub.s32 %v1335, %v1337
    %v1339 = vrot.slane %v1311, %v1338
    %v1340 = vcombine.high %v1318, %v1318
    %v1341 = vcombine.high %v1325, %v1325
    %v1342 = vcombine.high %v1332, %v1332
    %v1343 = vcombine.high %v1339, %v1339
    %v1344 = vlaneseq
    %v1345 = vshrl.u32 %v1344, 7
    %v1346 = vsub.s32 0, %v1345
    %v1347 = vrot.slane %v1269, %v1346
    %v1348 = vlaneseq
    %v1349 = vshrl.u32 %v1348, 7
    %v1350 = vsub.s32 0, %v1349
    %v1351 = vrot.slane %v1283, %v1350
    %v1352 = vlaneseq
    %v1353 = vshrl.u32 %v1352, 7
    %v1354 = vsub.s32 0, %v1353
    %v1355 = vrot.slane %v1291, %v1354
    %v1356 = vlaneseq
    %v1357 = vshrl.u32 %v1356, 7
    %v1358 = vsub.s32 0, %v1357
    %v1359 = vrot.slane %v1293, %v1358
    %v1360 = vlaneseq
    %v1361 = vshrl.u32 %v1360, 7
    %v1362 = vsub.s32 0, %v1361
    %v1363 = vrot.slane %v1276, %v1362
    %v1364 = vlaneseq
    %v1365 = vshrl.u32 %v1364, 7
    %v1366 = vsub.s32 0, %v1365
    %v1367 = vrot.slane %v1290, %v1366
    %v1368 = vlaneseq
    %v1369 = vshrl.u32 %v1368, 7
    %v1370 = vsub.s32 0, %v1369
    %v1371 = vrot.slane %v1292, %v1370
    %v1372 = vlaneseq
    %v1373 = vshrl.u32 %v1372, 7
    %v1374 = vsub.s32 0, %v1373
    %v1375 = vrot.slane %v1294, %v1374
    %v1376 = vlaneseq
    %v1377 = vshrl.u32 %v1376, 7
    %v1378 = vsub.s32 0, %v1377
    %v1379 = vrot.slane %v1318, %v1378
    %v1380 = vlaneseq
    %v1381 = vshrl.u32 %v1380, 7
    %v1382 = vsub.s32 0, %v1381
    %v1383 = vrot.slane %v1332, %v1382
    %v1384 = vlaneseq
    %v1385 = vshrl.u32 %v1384, 7
    %v1386 = vsub.s32 0, %v1385
    %v1387 = vrot.slane %v1340, %v1386
    %v1388 = vlaneseq
    %v1389 = vshrl.u32 %v1388, 7
    %v1390 = vsub.s32 0, %v1389
    %v1391 = vrot.slane %v1342, %v1390
    %v1392 = vlaneseq
    %v1393 = vshrl.u32 %v1392, 7
    %v1394 = vsub.s32 0, %v1393
    %v1395 = vrot.slane %v1325, %v1394
    %v1396 = vlaneseq
    %v1397 = vshrl.u32 %v1396, 7
    %v1398 = vsub.s32 0, %v1397
    %v1399 = vrot.slane %v1339, %v1398
    %v1400 = vlaneseq
    %v1401 = vshrl.u32 %v1400, 7
    %v1402 = vsub.s32 0, %v1401
    %v1403 = vrot.slane %v1341, %v1402
    %v1404 = vlaneseq
    %v1405 = vshrl.u32 %v1404, 7
    %v1406 = vsub.s32 0, %v1405
    %v1407 = vrot.slane %v1343, %v1406
    %v1424 = vmul.f32 %v1183, %v1347
    %v1425 = vmul.f32 %v1187, %v1351
    %v1426 = vmul.f32 %v1191, %v1355
    %v1427 = vmul.f32 %v1195, %v1359
    %v1428 = vmul.f32 %v1199, %v1363
    %v1429 = vmul.f32 %v1203, %v1367
    %v1430 = vmul.f32 %v1207, %v1371
    %v1431 = vmul.f32 %v1211, %v1375
    %v1432 = vmul.f32 %v1215, %v1379
    %v1433 = vmul.f32 %v1219, %v1383
    %v1434 = vmul.f32 %v1223, %v1387
    %v1435 = vmul.f32 %v1227, %v1391
    %v1436 = vmul.f32 %v1231, %v1395
    %v1437 = vmul.f32 %v1235, %v1399
    %v1438 = vmul.f32 %v1239, %v1403
    %v1439 = vmul.f32 %v1243, %v1407
    %v1440 = vsel %vm55, %v1424, 9e+15
    %v1441 = vsel %vm55, %v1425, 9e+15
    %v1442 = vsel %vm55, %v1426, 9e+15
    %v1443 = vsel %vm55, %v1427, 9e+15
    %v1444 = vsel %vm55, %v1428, 9e+15
    %v1445 = vsel %vm55, %v1429, 9e+15
    %v1446 = vsel %vm55, %v1430, 9e+15
    %v1447 = vsel %vm55, %v1431, 9e+15
    %v1448 = vsel %vm55, %v1432, 9e+15
    %v1449 = vsel %vm55, %v1433, 9e+15
    %v1450 = vsel %vm55, %v1434, 9e+15
    %v1451 = vsel %vm55, %v1435, 9e+15
    %v1452 = vsel %vm55, %v1436, 9e+15
    %v1453 = vsel %vm55, %v1437, 9e+15
    %v1454 = vsel %vm55, %v1438, 9e+15
    %v1455 = vsel %vm55, %v1439, 9e+15
    %v1456 = vsel %vm55, %v1424, -9e+15
    %v1457 = vsel %vm55, %v1425, -9e+15
    %v1458 = vsel %vm55, %v1426, -9e+15
    %v1459 = vsel %vm55, %v1427, -9e+15
    %v1460 = vsel %vm55, %v1428, -9e+15
    %v1461 = vsel %vm55, %v1429, -9e+15
    %v1462 = vsel %vm55, %v1430, -9e+15
    %v1463 = vsel %vm55, %v1431, -9e+15
    %v1464 = vsel %vm55, %v1432, -9e+15
    %v1465 = vsel %vm55, %v1433, -9e+15
    %v1466 = vsel %vm55, %v1434, -9e+15
    %v1467 = vsel %vm55, %v1435, -9e+15
    %v1468 = vsel %vm55, %v1436, -9e+15
    %v1469 = vsel %vm55, %v1437, -9e+15
    %v1470 = vsel %vm55, %v1438, -9e+15
    %v1471 = vsel %vm55, %v1439, -9e+15
    %1472 = vmin.xlane.f32.xlu0 %v1440
    %v1473 = vpop.xlane.xlu0 %1472
    %1474 = vmin.xlane.f32.xlu0 %v1441
    %v1475 = vpop.xlane.xlu0 %1474
    %1476 = vmin.xlane.f32.xlu0 %v1442
    %v1477 = vpop.xlane.xlu0 %1476
    %1478 = vmin.xlane.f32.xlu0 %v1443
    %v1479 = vpop.xlane.xlu0 %1478
    %1480 = vmin.xlane.f32.xlu0 %v1444
    %v1481 = vpop.xlane.xlu0 %1480
    %1482 = vmin.xlane.f32.xlu0 %v1445
    %v1483 = vpop.xlane.xlu0 %1482
    %1484 = vmin.xlane.f32.xlu0 %v1446
    %v1485 = vpop.xlane.xlu0 %1484
    %1486 = vmin.xlane.f32.xlu0 %v1447
    %v1487 = vpop.xlane.xlu0 %1486
    %1488 = vmin.xlane.f32.xlu0 %v1448
    %v1489 = vpop.xlane.xlu0 %1488
    %1490 = vmin.xlane.f32.xlu0 %v1449
    %v1491 = vpop.xlane.xlu0 %1490
    %1492 = vmin.xlane.f32.xlu0 %v1450
    %v1493 = vpop.xlane.xlu0 %1492
    %1494 = vmin.xlane.f32.xlu0 %v1451
    %v1495 = vpop.xlane.xlu0 %1494
    %1496 = vmin.xlane.f32.xlu0 %v1452
    %v1497 = vpop.xlane.xlu0 %1496
    %1498 = vmin.xlane.f32.xlu0 %v1453
    %v1499 = vpop.xlane.xlu0 %1498
    %1500 = vmin.xlane.f32.xlu0 %v1454
    %v1501 = vpop.xlane.xlu0 %1500
    %1502 = vmin.xlane.f32.xlu0 %v1455
    %v1503 = vpop.xlane.xlu0 %1502
    %1504 = vmax.xlane.f32.xlu0 %v1456
    %v1505 = vpop.xlane.xlu0 %1504
    %1506 = vmax.xlane.f32.xlu0 %v1457
    %v1507 = vpop.xlane.xlu0 %1506
    %1508 = vmax.xlane.f32.xlu0 %v1458
    %v1509 = vpop.xlane.xlu0 %1508
    %1510 = vmax.xlane.f32.xlu0 %v1459
    %v1511 = vpop.xlane.xlu0 %1510
    %1512 = vmax.xlane.f32.xlu0 %v1460
    %v1513 = vpop.xlane.xlu0 %1512
    %1514 = vmax.xlane.f32.xlu0 %v1461
    %v1515 = vpop.xlane.xlu0 %1514
    %1516 = vmax.xlane.f32.xlu0 %v1462
    %v1517 = vpop.xlane.xlu0 %1516
    %1518 = vmax.xlane.f32.xlu0 %v1463
    %v1519 = vpop.xlane.xlu0 %1518
    %1520 = vmax.xlane.f32.xlu0 %v1464
    %v1521 = vpop.xlane.xlu0 %1520
    %1522 = vmax.xlane.f32.xlu0 %v1465
    %v1523 = vpop.xlane.xlu0 %1522
    %1524 = vmax.xlane.f32.xlu0 %v1466
    %v1525 = vpop.xlane.xlu0 %1524
    %1526 = vmax.xlane.f32.xlu0 %v1467
    %v1527 = vpop.xlane.xlu0 %1526
    %1528 = vmax.xlane.f32.xlu0 %v1468
    %v1529 = vpop.xlane.xlu0 %1528
    %1530 = vmax.xlane.f32.xlu0 %v1469
    %v1531 = vpop.xlane.xlu0 %1530
    %1532 = vmax.xlane.f32.xlu0 %v1470
    %v1533 = vpop.xlane.xlu0 %1532
    %1534 = vmax.xlane.f32.xlu0 %v1471
    %v1535 = vpop.xlane.xlu0 %1534
    %v1536 = vsub.f32 %v1505, %v1473
    %v1537 = vsub.f32 %v1507, %v1475
    %v1538 = vsub.f32 %v1509, %v1477
    %v1539 = vsub.f32 %v1511, %v1479
    %v1540 = vsub.f32 %v1513, %v1481
    %v1541 = vsub.f32 %v1515, %v1483
    %v1542 = vsub.f32 %v1517, %v1485
    %v1543 = vsub.f32 %v1519, %v1487
    %v1544 = vsub.f32 %v1521, %v1489
    %v1545 = vsub.f32 %v1523, %v1491
    %v1546 = vsub.f32 %v1525, %v1493
    %v1547 = vsub.f32 %v1527, %v1495
    %v1548 = vsub.f32 %v1529, %v1497
    %v1549 = vsub.f32 %v1531, %v1499
    %v1550 = vsub.f32 %v1533, %v1501
    %v1551 = vsub.f32 %v1535, %v1503
    %vm1552 = vcmp.eq.f32.partialorder %v1536, 0.0
    %vm1553 = vcmp.eq.f32.partialorder %v1537, 0.0
    %vm1554 = vcmp.eq.f32.partialorder %v1538, 0.0
    %vm1555 = vcmp.eq.f32.partialorder %v1539, 0.0
    %vm1556 = vcmp.eq.f32.partialorder %v1540, 0.0
    %vm1557 = vcmp.eq.f32.partialorder %v1541, 0.0
    %vm1558 = vcmp.eq.f32.partialorder %v1542, 0.0
    %vm1559 = vcmp.eq.f32.partialorder %v1543, 0.0
    %vm1560 = vcmp.eq.f32.partialorder %v1544, 0.0
    %vm1561 = vcmp.eq.f32.partialorder %v1545, 0.0
    %vm1562 = vcmp.eq.f32.partialorder %v1546, 0.0
    %vm1563 = vcmp.eq.f32.partialorder %v1547, 0.0
    %vm1564 = vcmp.eq.f32.partialorder %v1548, 0.0
    %vm1565 = vcmp.eq.f32.partialorder %v1549, 0.0
    %vm1566 = vcmp.eq.f32.partialorder %v1550, 0.0
    %vm1567 = vcmp.eq.f32.partialorder %v1551, 0.0
    %v1568 = vsel %vm1552, 1e-06, %v1536
    %v1569 = vsel %vm1553, 1e-06, %v1537
    %v1570 = vsel %vm1554, 1e-06, %v1538
    %v1571 = vsel %vm1555, 1e-06, %v1539
    %v1572 = vsel %vm1556, 1e-06, %v1540
    %v1573 = vsel %vm1557, 1e-06, %v1541
    %v1574 = vsel %vm1558, 1e-06, %v1542
    %v1575 = vsel %vm1559, 1e-06, %v1543
    %v1576 = vsel %vm1560, 1e-06, %v1544
    %v1577 = vsel %vm1561, 1e-06, %v1545
    %v1578 = vsel %vm1562, 1e-06, %v1546
    %v1579 = vsel %vm1563, 1e-06, %v1547
    %v1580 = vsel %vm1564, 1e-06, %v1548
    %v1581 = vsel %vm1565, 1e-06, %v1549
    %v1582 = vsel %vm1566, 1e-06, %v1550
    %v1583 = vsel %vm1567, 1e-06, %v1551
    %v1584 = vsub.f32 %v1424, %v1473
    %v1585 = vsub.f32 %v1425, %v1475
    %v1586 = vsub.f32 %v1426, %v1477
    %v1587 = vsub.f32 %v1427, %v1479
    %v1588 = vsub.f32 %v1428, %v1481
    %v1589 = vsub.f32 %v1429, %v1483
    %v1590 = vsub.f32 %v1430, %v1485
    %v1591 = vsub.f32 %v1431, %v1487
    %v1592 = vsub.f32 %v1432, %v1489
    %v1593 = vsub.f32 %v1433, %v1491
    %v1594 = vsub.f32 %v1434, %v1493
    %v1595 = vsub.f32 %v1435, %v1495
    %v1596 = vsub.f32 %v1436, %v1497
    %v1597 = vsub.f32 %v1437, %v1499
    %v1598 = vsub.f32 %v1438, %v1501
    %v1599 = vsub.f32 %v1439, %v1503
    %v1600 = vrcp.pop %v1568
    %v1601 = vmul.f32 1.0, %v1600
    %v1602 = vrcp.pop %v1569
    %v1603 = vmul.f32 1.0, %v1602
    %v1604 = vrcp.pop %v1570
    %v1605 = vmul.f32 1.0, %v1604
    %v1606 = vrcp.pop %v1571
    %v1607 = vmul.f32 1.0, %v1606
    %v1608 = vrcp.pop %v1572
    %v1609 = vmul.f32 1.0, %v1608
    %v1610 = vrcp.pop %v1573
    %v1611 = vmul.f32 1.0, %v1610
    %v1612 = vrcp.pop %v1574
    %v1613 = vmul.f32 1.0, %v1612
    %v1614 = vrcp.pop %v1575
    %v1615 = vmul.f32 1.0, %v1614
    %v1616 = vrcp.pop %v1576
    %v1617 = vmul.f32 1.0, %v1616
    %v1618 = vrcp.pop %v1577
    %v1619 = vmul.f32 1.0, %v1618
    %v1620 = vrcp.pop %v1578
    %v1621 = vmul.f32 1.0, %v1620
    %v1622 = vrcp.pop %v1579
    %v1623 = vmul.f32 1.0, %v1622
    %v1624 = vrcp.pop %v1580
    %v1625 = vmul.f32 1.0, %v1624
    %v1626 = vrcp.pop %v1581
    %v1627 = vmul.f32 1.0, %v1626
    %v1628 = vrcp.pop %v1582
    %v1629 = vmul.f32 1.0, %v1628
    %v1630 = vrcp.pop %v1583
    %v1631 = vmul.f32 1.0, %v1630
    %v1632 = vmul.f32 %v1584, %v1601
    %v1633 = vmul.f32 %v1585, %v1603
    %v1634 = vmul.f32 %v1586, %v1605
    %v1635 = vmul.f32 %v1587, %v1607
    %v1636 = vmul.f32 %v1588, %v1609
    %v1637 = vmul.f32 %v1589, %v1611
    %v1638 = vmul.f32 %v1590, %v1613
    %v1639 = vmul.f32 %v1591, %v1615
    %v1640 = vmul.f32 %v1592, %v1617
    %v1641 = vmul.f32 %v1593, %v1619
    %v1642 = vmul.f32 %v1594, %v1621
    %v1643 = vmul.f32 %v1595, %v1623
    %v1644 = vmul.f32 %v1596, %v1625
    %v1645 = vmul.f32 %v1597, %v1627
    %v1646 = vmul.f32 %v1598, %v1629
    %v1647 = vmul.f32 %v1599, %v1631
    %v1648 = vsel %vm55, %v1632, -9e+15
    %v1649 = vsel %vm55, %v1633, -9e+15
    %v1650 = vsel %vm55, %v1634, -9e+15
    %v1651 = vsel %vm55, %v1635, -9e+15
    %v1652 = vsel %vm55, %v1636, -9e+15
    %v1653 = vsel %vm55, %v1637, -9e+15
    %v1654 = vsel %vm55, %v1638, -9e+15
    %v1655 = vsel %vm55, %v1639, -9e+15
    %v1656 = vsel %vm55, %v1640, -9e+15
    %v1657 = vsel %vm55, %v1641, -9e+15
    %v1658 = vsel %vm55, %v1642, -9e+15
    %v1659 = vsel %vm55, %v1643, -9e+15
    %v1660 = vsel %vm55, %v1644, -9e+15
    %v1661 = vsel %vm55, %v1645, -9e+15
    %v1662 = vsel %vm55, %v1646, -9e+15
    %v1663 = vsel %vm55, %v1647, -9e+15
    %v1664 = vmul.f32 %v1648, 1.442695
    %v1665 = vpow.pop %v1664
    %v1666 = vmul.f32 %v1649, 1.442695
    %v1667 = vpow.pop %v1666
    %v1668 = vmul.f32 %v1650, 1.442695
    %v1669 = vpow.pop %v1668
    %v1670 = vmul.f32 %v1651, 1.442695
    %v1671 = vpow.pop %v1670
    %v1672 = vmul.f32 %v1652, 1.442695
    %v1673 = vpow.pop %v1672
    %v1674 = vmul.f32 %v1653, 1.442695
    %v1675 = vpow.pop %v1674
    %v1676 = vmul.f32 %v1654, 1.442695
    %v1677 = vpow.pop %v1676
    %v1678 = vmul.f32 %v1655, 1.442695
    %v1679 = vpow.pop %v1678
    %v1680 = vmul.f32 %v1656, 1.442695
    %v1681 = vpow.pop %v1680
    %v1682 = vmul.f32 %v1657, 1.442695
    %v1683 = vpow.pop %v1682
    %v1684 = vmul.f32 %v1658, 1.442695
    %v1685 = vpow.pop %v1684
    %v1686 = vmul.f32 %v1659, 1.442695
    %v1687 = vpow.pop %v1686
    %v1688 = vmul.f32 %v1660, 1.442695
    %v1689 = vpow.pop %v1688
    %v1690 = vmul.f32 %v1661, 1.442695
    %v1691 = vpow.pop %v1690
    %v1692 = vmul.f32 %v1662, 1.442695
    %v1693 = vpow.pop %v1692
    %v1694 = vmul.f32 %v1663, 1.442695
    %v1695 = vpow.pop %v1694
    %1696 = vadd.xlane.f32.xlu0 %v1665
    %v1697 = vpop.xlane.xlu0 %1696
    %1698 = vadd.xlane.f32.xlu0 %v1667
    %v1699 = vpop.xlane.xlu0 %1698
    %1700 = vadd.xlane.f32.xlu0 %v1669
    %v1701 = vpop.xlane.xlu0 %1700
    %1702 = vadd.xlane.f32.xlu0 %v1671
    %v1703 = vpop.xlane.xlu0 %1702
    %1704 = vadd.xlane.f32.xlu0 %v1673
    %v1705 = vpop.xlane.xlu0 %1704
    %1706 = vadd.xlane.f32.xlu0 %v1675
    %v1707 = vpop.xlane.xlu0 %1706
    %1708 = vadd.xlane.f32.xlu0 %v1677
    %v1709 = vpop.xlane.xlu0 %1708
    %1710 = vadd.xlane.f32.xlu0 %v1679
    %v1711 = vpop.xlane.xlu0 %1710
    %1712 = vadd.xlane.f32.xlu0 %v1681
    %v1713 = vpop.xlane.xlu0 %1712
    %1714 = vadd.xlane.f32.xlu0 %v1683
    %v1715 = vpop.xlane.xlu0 %1714
    %1716 = vadd.xlane.f32.xlu0 %v1685
    %v1717 = vpop.xlane.xlu0 %1716
    %1718 = vadd.xlane.f32.xlu0 %v1687
    %v1719 = vpop.xlane.xlu0 %1718
    %1720 = vadd.xlane.f32.xlu0 %v1689
    %v1721 = vpop.xlane.xlu0 %1720
    %1722 = vadd.xlane.f32.xlu0 %v1691
    %v1723 = vpop.xlane.xlu0 %1722
    %1724 = vadd.xlane.f32.xlu0 %v1693
    %v1725 = vpop.xlane.xlu0 %1724
    %1726 = vadd.xlane.f32.xlu0 %v1695
    %v1727 = vpop.xlane.xlu0 %1726
    %v1728 = vrcp.pop %v1697
    %v1729 = vrcp.pop %v1699
    %v1730 = vrcp.pop %v1701
    %v1731 = vrcp.pop %v1703
    %v1732 = vrcp.pop %v1705
    %v1733 = vrcp.pop %v1707
    %v1734 = vrcp.pop %v1709
    %v1735 = vrcp.pop %v1711
    %v1736 = vrcp.pop %v1713
    %v1737 = vrcp.pop %v1715
    %v1738 = vrcp.pop %v1717
    %v1739 = vrcp.pop %v1719
    %v1740 = vrcp.pop %v1721
    %v1741 = vrcp.pop %v1723
    %v1742 = vrcp.pop %v1725
    %v1743 = vrcp.pop %v1727
    %v1744 = vmul.f32 %v1665, %v1728
    %v1745 = vmul.f32 %v1667, %v1729
    %v1746 = vmul.f32 %v1669, %v1730
    %v1747 = vmul.f32 %v1671, %v1731
    %v1748 = vmul.f32 %v1673, %v1732
    %v1749 = vmul.f32 %v1675, %v1733
    %v1750 = vmul.f32 %v1677, %v1734
    %v1751 = vmul.f32 %v1679, %v1735
    %v1752 = vmul.f32 %v1681, %v1736
    %v1753 = vmul.f32 %v1683, %v1737
    %v1754 = vmul.f32 %v1685, %v1738
    %v1755 = vmul.f32 %v1687, %v1739
    %v1756 = vmul.f32 %v1689, %v1740
    %v1757 = vmul.f32 %v1691, %v1741
    %v1758 = vmul.f32 %v1693, %v1742
    %v1759 = vmul.f32 %v1695, %v1743
    %s1761 = sor.u32 256, 24
    %1762 = vbcast.lane.b32.xlu0 %v379, %s1761
    %v1763 = vpop.permute.xlu0 %1762
    %s1765 = sor.u32 256, 24
    %1766 = vbcast.lane.b32.xlu0 %v386, %s1765
    %v1767 = vpop.permute.xlu0 %1766
    %s1769 = sor.u32 256, 24
    %1770 = vbcast.lane.b32.xlu0 %v393, %s1769
    %v1771 = vpop.permute.xlu0 %1770
    %s1773 = sor.u32 256, 24
    %1774 = vbcast.lane.b32.xlu0 %v400, %s1773
    %v1775 = vpop.permute.xlu0 %1774
    %s1777 = sor.u32 256, 24
    %1778 = vbcast.lane.b32.xlu0 %v407, %s1777
    %v1779 = vpop.permute.xlu0 %1778
    %s1781 = sor.u32 256, 24
    %1782 = vbcast.lane.b32.xlu0 %v414, %s1781
    %v1783 = vpop.permute.xlu0 %1782
    %s1785 = sor.u32 256, 24
    %1786 = vbcast.lane.b32.xlu0 %v421, %s1785
    %v1787 = vpop.permute.xlu0 %1786
    %s1789 = sor.u32 256, 24
    %1790 = vbcast.lane.b32.xlu0 %v428, %s1789
    %v1791 = vpop.permute.xlu0 %1790
    %s1793 = sor.u32 256, 24
    %1794 = vbcast.lane.b32.xlu0 %v435, %s1793
    %v1795 = vpop.permute.xlu0 %1794
    %s1797 = sor.u32 256, 24
    %1798 = vbcast.lane.b32.xlu0 %v442, %s1797
    %v1799 = vpop.permute.xlu0 %1798
    %s1801 = sor.u32 256, 24
    %1802 = vbcast.lane.b32.xlu0 %v449, %s1801
    %v1803 = vpop.permute.xlu0 %1802
    %s1805 = sor.u32 256, 24
    %1806 = vbcast.lane.b32.xlu0 %v456, %s1805
    %v1807 = vpop.permute.xlu0 %1806
    %s1809 = sor.u32 256, 24
    %1810 = vbcast.lane.b32.xlu0 %v463, %s1809
    %v1811 = vpop.permute.xlu0 %1810
    %s1813 = sor.u32 256, 24
    %1814 = vbcast.lane.b32.xlu0 %v470, %s1813
    %v1815 = vpop.permute.xlu0 %1814
    %s1817 = sor.u32 256, 24
    %1818 = vbcast.lane.b32.xlu0 %v477, %s1817
    %v1819 = vpop.permute.xlu0 %1818
    %s1821 = sor.u32 256, 24
    %1822 = vbcast.lane.b32.xlu0 %v484, %s1821
    %v1823 = vpop.permute.xlu0 %1822
    %v1824 = vmul.f32 %v1763, %v1744
    %v1825 = vmul.f32 %v1767, %v1745
    %v1826 = vmul.f32 %v1771, %v1746
    %v1827 = vmul.f32 %v1775, %v1747
    %v1828 = vmul.f32 %v1779, %v1748
    %v1829 = vmul.f32 %v1783, %v1749
    %v1830 = vmul.f32 %v1787, %v1750
    %v1831 = vmul.f32 %v1791, %v1751
    %v1832 = vmul.f32 %v1795, %v1752
    %v1833 = vmul.f32 %v1799, %v1753
    %v1834 = vmul.f32 %v1803, %v1754
    %v1835 = vmul.f32 %v1807, %v1755
    %v1836 = vmul.f32 %v1811, %v1756
    %v1837 = vmul.f32 %v1815, %v1757
    %v1838 = vmul.f32 %v1819, %v1758
    %v1839 = vmul.f32 %v1823, %v1759
    %v1840 = vrot.slane %v1824, 4
    %v1841 = vadd.f32 %v1824, %v1840
    %v1842 = vrot.slane %v1841, 2
    %v1843 = vadd.f32 %v1841, %v1842
    %v1844 = vrot.slane %v1843, 1
    %v1845 = vadd.f32 %v1843, %v1844
    %v1846 = vrot.slane %v1825, 4
    %v1847 = vadd.f32 %v1825, %v1846
    %v1848 = vrot.slane %v1847, 2
    %v1849 = vadd.f32 %v1847, %v1848
    %v1850 = vrot.slane %v1849, 1
    %v1851 = vadd.f32 %v1849, %v1850
    %v1852 = vrot.slane %v1826, 4
    %v1853 = vadd.f32 %v1826, %v1852
    %v1854 = vrot.slane %v1853, 2
    %v1855 = vadd.f32 %v1853, %v1854
    %v1856 = vrot.slane %v1855, 1
    %v1857 = vadd.f32 %v1855, %v1856
    %v1858 = vrot.slane %v1827, 4
    %v1859 = vadd.f32 %v1827, %v1858
    %v1860 = vrot.slane %v1859, 2
    %v1861 = vadd.f32 %v1859, %v1860
    %v1862 = vrot.slane %v1861, 1
    %v1863 = vadd.f32 %v1861, %v1862
    %v1864 = vrot.slane %v1828, 4
    %v1865 = vadd.f32 %v1828, %v1864
    %v1866 = vrot.slane %v1865, 2
    %v1867 = vadd.f32 %v1865, %v1866
    %v1868 = vrot.slane %v1867, 1
    %v1869 = vadd.f32 %v1867, %v1868
    %v1870 = vrot.slane %v1829, 4
    %v1871 = vadd.f32 %v1829, %v1870
    %v1872 = vrot.slane %v1871, 2
    %v1873 = vadd.f32 %v1871, %v1872
    %v1874 = vrot.slane %v1873, 1
    %v1875 = vadd.f32 %v1873, %v1874
    %v1876 = vrot.slane %v1830, 4
    %v1877 = vadd.f32 %v1830, %v1876
    %v1878 = vrot.slane %v1877, 2
    %v1879 = vadd.f32 %v1877, %v1878
    %v1880 = vrot.slane %v1879, 1
    %v1881 = vadd.f32 %v1879, %v1880
    %v1882 = vrot.slane %v1831, 4
    %v1883 = vadd.f32 %v1831, %v1882
    %v1884 = vrot.slane %v1883, 2
    %v1885 = vadd.f32 %v1883, %v1884
    %v1886 = vrot.slane %v1885, 1
    %v1887 = vadd.f32 %v1885, %v1886
    %v1888 = vrot.slane %v1832, 4
    %v1889 = vadd.f32 %v1832, %v1888
    %v1890 = vrot.slane %v1889, 2
    %v1891 = vadd.f32 %v1889, %v1890
    %v1892 = vrot.slane %v1891, 1
    %v1893 = vadd.f32 %v1891, %v1892
    %v1894 = vrot.slane %v1833, 4
    %v1895 = vadd.f32 %v1833, %v1894
    %v1896 = vrot.slane %v1895, 2
    %v1897 = vadd.f32 %v1895, %v1896
    %v1898 = vrot.slane %v1897, 1
    %v1899 = vadd.f32 %v1897, %v1898
    %v1900 = vrot.slane %v1834, 4
    %v1901 = vadd.f32 %v1834, %v1900
    %v1902 = vrot.slane %v1901, 2
    %v1903 = vadd.f32 %v1901, %v1902
    %v1904 = vrot.slane %v1903, 1
    %v1905 = vadd.f32 %v1903, %v1904
    %v1906 = vrot.slane %v1835, 4
    %v1907 = vadd.f32 %v1835, %v1906
    %v1908 = vrot.slane %v1907, 2
    %v1909 = vadd.f32 %v1907, %v1908
    %v1910 = vrot.slane %v1909, 1
    %v1911 = vadd.f32 %v1909, %v1910
    %v1912 = vrot.slane %v1836, 4
    %v1913 = vadd.f32 %v1836, %v1912
    %v1914 = vrot.slane %v1913, 2
    %v1915 = vadd.f32 %v1913, %v1914
    %v1916 = vrot.slane %v1915, 1
    %v1917 = vadd.f32 %v1915, %v1916
    %v1918 = vrot.slane %v1837, 4
    %v1919 = vadd.f32 %v1837, %v1918
    %v1920 = vrot.slane %v1919, 2
    %v1921 = vadd.f32 %v1919, %v1920
    %v1922 = vrot.slane %v1921, 1
    %v1923 = vadd.f32 %v1921, %v1922
    %v1924 = vrot.slane %v1838, 4
    %v1925 = vadd.f32 %v1838, %v1924
    %v1926 = vrot.slane %v1925, 2
    %v1927 = vadd.f32 %v1925, %v1926
    %v1928 = vrot.slane %v1927, 1
    %v1929 = vadd.f32 %v1927, %v1928
    %v1930 = vrot.slane %v1839, 4
    %v1931 = vadd.f32 %v1839, %v1930
    %v1932 = vrot.slane %v1931, 2
    %v1933 = vadd.f32 %v1931, %v1932
    %v1934 = vrot.slane %v1933, 1
    %v1935 = vadd.f32 %v1933, %v1934
    %s1937 = sor.u32 256, 32
    %1938 = vbcast.lane.b32.xlu0 %v379, %s1937
    %v1939 = vpop.permute.xlu0 %1938
    %s1941 = sor.u32 256, 32
    %1942 = vbcast.lane.b32.xlu0 %v386, %s1941
    %v1943 = vpop.permute.xlu0 %1942
    %s1945 = sor.u32 256, 32
    %1946 = vbcast.lane.b32.xlu0 %v393, %s1945
    %v1947 = vpop.permute.xlu0 %1946
    %s1949 = sor.u32 256, 32
    %1950 = vbcast.lane.b32.xlu0 %v400, %s1949
    %v1951 = vpop.permute.xlu0 %1950
    %s1953 = sor.u32 256, 32
    %1954 = vbcast.lane.b32.xlu0 %v407, %s1953
    %v1955 = vpop.permute.xlu0 %1954
    %s1957 = sor.u32 256, 32
    %1958 = vbcast.lane.b32.xlu0 %v414, %s1957
    %v1959 = vpop.permute.xlu0 %1958
    %s1961 = sor.u32 256, 32
    %1962 = vbcast.lane.b32.xlu0 %v421, %s1961
    %v1963 = vpop.permute.xlu0 %1962
    %s1965 = sor.u32 256, 32
    %1966 = vbcast.lane.b32.xlu0 %v428, %s1965
    %v1967 = vpop.permute.xlu0 %1966
    %s1969 = sor.u32 256, 32
    %1970 = vbcast.lane.b32.xlu0 %v435, %s1969
    %v1971 = vpop.permute.xlu0 %1970
    %s1973 = sor.u32 256, 32
    %1974 = vbcast.lane.b32.xlu0 %v442, %s1973
    %v1975 = vpop.permute.xlu0 %1974
    %s1977 = sor.u32 256, 32
    %1978 = vbcast.lane.b32.xlu0 %v449, %s1977
    %v1979 = vpop.permute.xlu0 %1978
    %s1981 = sor.u32 256, 32
    %1982 = vbcast.lane.b32.xlu0 %v456, %s1981
    %v1983 = vpop.permute.xlu0 %1982
    %s1985 = sor.u32 256, 32
    %1986 = vbcast.lane.b32.xlu0 %v463, %s1985
    %v1987 = vpop.permute.xlu0 %1986
    %s1989 = sor.u32 256, 32
    %1990 = vbcast.lane.b32.xlu0 %v470, %s1989
    %v1991 = vpop.permute.xlu0 %1990
    %s1993 = sor.u32 256, 32
    %1994 = vbcast.lane.b32.xlu0 %v477, %s1993
    %v1995 = vpop.permute.xlu0 %1994
    %s1997 = sor.u32 256, 32
    %1998 = vbcast.lane.b32.xlu0 %v484, %s1997
    %v1999 = vpop.permute.xlu0 %1998
    %v2002 = vcombine.high %v289, %v289
    %v2004 = vunpack.c.l.s4 1966171168
    %v2005 = vunpack.c.0.s8 %v2004
    %v2006 = vlaneseq
    %v2007 = vshrl.u32 %v2006, 7
    %v2008 = vsub.s32 %v2005, %v2007
    %v2009 = vrot.slane %v289, %v2008
    %v2011 = vunpack.c.l.s4 1966171168
    %v2012 = vunpack.c.0.s8 %v2011
    %v2013 = vlaneseq
    %v2014 = vshrl.u32 %v2013, 7
    %v2015 = vsub.s32 %v2012, %v2014
    %v2016 = vrot.slane %v2002, %v2015
    %v2017 = vcombine.high %v2009, %v2009
    %v2018 = vcombine.high %v2016, %v2016
    %v2020 = vunpack.c.l.s4 1966171168
    %v2021 = vunpack.c.0.s8 %v2020
    %v2022 = vlaneseq
    %v2023 = vshrl.u32 %v2022, 7
    %v2024 = vsub.s32 %v2021, %v2023
    %v2025 = vrot.slane %v2009, %v2024
    %v2027 = vunpack.c.l.s4 1966171168
    %v2028 = vunpack.c.0.s8 %v2027
    %v2029 = vlaneseq
    %v2030 = vshrl.u32 %v2029, 7
    %v2031 = vsub.s32 %v2028, %v2030
    %v2032 = vrot.slane %v2016, %v2031
    %v2034 = vunpack.c.l.s4 1966171168
    %v2035 = vunpack.c.0.s8 %v2034
    %v2036 = vlaneseq
    %v2037 = vshrl.u32 %v2036, 7
    %v2038 = vsub.s32 %v2035, %v2037
    %v2039 = vrot.slane %v2017, %v2038
    %v2041 = vunpack.c.l.s4 1966171168
    %v2042 = vunpack.c.0.s8 %v2041
    %v2043 = vlaneseq
    %v2044 = vshrl.u32 %v2043, 7
    %v2045 = vsub.s32 %v2042, %v2044
    %v2046 = vrot.slane %v2018, %v2045
    %v2047 = vcombine.high %v2025, %v2025
    %v2048 = vcombine.high %v2032, %v2032
    %v2049 = vcombine.high %v2039, %v2039
    %v2050 = vcombine.high %v2046, %v2046
    %v2051 = vcombine.high %v295, %v295
    %v2053 = vunpack.c.l.s4 1966171168
    %v2054 = vunpack.c.0.s8 %v2053
    %v2055 = vlaneseq
    %v2056 = vshrl.u32 %v2055, 7
    %v2057 = vsub.s32 %v2054, %v2056
    %v2058 = vrot.slane %v295, %v2057
    %v2060 = vunpack.c.l.s4 1966171168
    %v2061 = vunpack.c.0.s8 %v2060
    %v2062 = vlaneseq
    %v2063 = vshrl.u32 %v2062, 7
    %v2064 = vsub.s32 %v2061, %v2063
    %v2065 = vrot.slane %v2051, %v2064
    %v2066 = vcombine.high %v2058, %v2058
    %v2067 = vcombine.high %v2065, %v2065
    %v2069 = vunpack.c.l.s4 1966171168
    %v2070 = vunpack.c.0.s8 %v2069
    %v2071 = vlaneseq
    %v2072 = vshrl.u32 %v2071, 7
    %v2073 = vsub.s32 %v2070, %v2072
    %v2074 = vrot.slane %v2058, %v2073
    %v2076 = vunpack.c.l.s4 1966171168
    %v2077 = vunpack.c.0.s8 %v2076
    %v2078 = vlaneseq
    %v2079 = vshrl.u32 %v2078, 7
    %v2080 = vsub.s32 %v2077, %v2079
    %v2081 = vrot.slane %v2065, %v2080
    %v2083 = vunpack.c.l.s4 1966171168
    %v2084 = vunpack.c.0.s8 %v2083
    %v2085 = vlaneseq
    %v2086 = vshrl.u32 %v2085, 7
    %v2087 = vsub.s32 %v2084, %v2086
    %v2088 = vrot.slane %v2066, %v2087
    %v2090 = vunpack.c.l.s4 1966171168
    %v2091 = vunpack.c.0.s8 %v2090
    %v2092 = vlaneseq
    %v2093 = vshrl.u32 %v2092, 7
    %v2094 = vsub.s32 %v2091, %v2093
    %v2095 = vrot.slane %v2067, %v2094
    %v2096 = vcombine.high %v2074, %v2074
    %v2097 = vcombine.high %v2081, %v2081
    %v2098 = vcombine.high %v2088, %v2088
    %v2099 = vcombine.high %v2095, %v2095
    %v2100 = vlaneseq
    %v2101 = vshrl.u32 %v2100, 7
    %v2102 = vsub.s32 0, %v2101
    %v2103 = vrot.slane %v2025, %v2102
    %v2104 = vlaneseq
    %v2105 = vshrl.u32 %v2104, 7
    %v2106 = vsub.s32 0, %v2105
    %v2107 = vrot.slane %v2039, %v2106
    %v2108 = vlaneseq
    %v2109 = vshrl.u32 %v2108, 7
    %v2110 = vsub.s32 0, %v2109
    %v2111 = vrot.slane %v2047, %v2110
    %v2112 = vlaneseq
    %v2113 = vshrl.u32 %v2112, 7
    %v2114 = vsub.s32 0, %v2113
    %v2115 = vrot.slane %v2049, %v2114
    %v2116 = vlaneseq
    %v2117 = vshrl.u32 %v2116, 7
    %v2118 = vsub.s32 0, %v2117
    %v2119 = vrot.slane %v2032, %v2118
    %v2120 = vlaneseq
    %v2121 = vshrl.u32 %v2120, 7
    %v2122 = vsub.s32 0, %v2121
    %v2123 = vrot.slane %v2046, %v2122
    %v2124 = vlaneseq
    %v2125 = vshrl.u32 %v2124, 7
    %v2126 = vsub.s32 0, %v2125
    %v2127 = vrot.slane %v2048, %v2126
    %v2128 = vlaneseq
    %v2129 = vshrl.u32 %v2128, 7
    %v2130 = vsub.s32 0, %v2129
    %v2131 = vrot.slane %v2050, %v2130
    %v2132 = vlaneseq
    %v2133 = vshrl.u32 %v2132, 7
    %v2134 = vsub.s32 0, %v2133
    %v2135 = vrot.slane %v2074, %v2134
    %v2136 = vlaneseq
    %v2137 = vshrl.u32 %v2136, 7
    %v2138 = vsub.s32 0, %v2137
    %v2139 = vrot.slane %v2088, %v2138
    %v2140 = vlaneseq
    %v2141 = vshrl.u32 %v2140, 7
    %v2142 = vsub.s32 0, %v2141
    %v2143 = vrot.slane %v2096, %v2142
    %v2144 = vlaneseq
    %v2145 = vshrl.u32 %v2144, 7
    %v2146 = vsub.s32 0, %v2145
    %v2147 = vrot.slane %v2098, %v2146
    %v2148 = vlaneseq
    %v2149 = vshrl.u32 %v2148, 7
    %v2150 = vsub.s32 0, %v2149
    %v2151 = vrot.slane %v2081, %v2150
    %v2152 = vlaneseq
    %v2153 = vshrl.u32 %v2152, 7
    %v2154 = vsub.s32 0, %v2153
    %v2155 = vrot.slane %v2095, %v2154
    %v2156 = vlaneseq
    %v2157 = vshrl.u32 %v2156, 7
    %v2158 = vsub.s32 0, %v2157
    %v2159 = vrot.slane %v2097, %v2158
    %v2160 = vlaneseq
    %v2161 = vshrl.u32 %v2160, 7
    %v2162 = vsub.s32 0, %v2161
    %v2163 = vrot.slane %v2099, %v2162
    %v2180 = vmul.f32 %v1939, %v2103
    %v2181 = vmul.f32 %v1943, %v2107
    %v2182 = vmul.f32 %v1947, %v2111
    %v2183 = vmul.f32 %v1951, %v2115
    %v2184 = vmul.f32 %v1955, %v2119
    %v2185 = vmul.f32 %v1959, %v2123
    %v2186 = vmul.f32 %v1963, %v2127
    %v2187 = vmul.f32 %v1967, %v2131
    %v2188 = vmul.f32 %v1971, %v2135
    %v2189 = vmul.f32 %v1975, %v2139
    %v2190 = vmul.f32 %v1979, %v2143
    %v2191 = vmul.f32 %v1983, %v2147
    %v2192 = vmul.f32 %v1987, %v2151
    %v2193 = vmul.f32 %v1991, %v2155
    %v2194 = vmul.f32 %v1995, %v2159
    %v2195 = vmul.f32 %v1999, %v2163
    %v2196 = vsel %vm55, %v2180, 9e+15
    %v2197 = vsel %vm55, %v2181, 9e+15
    %v2198 = vsel %vm55, %v2182, 9e+15
    %v2199 = vsel %vm55, %v2183, 9e+15
    %v2200 = vsel %vm55, %v2184, 9e+15
    %v2201 = vsel %vm55, %v2185, 9e+15
    %v2202 = vsel %vm55, %v2186, 9e+15
    %v2203 = vsel %vm55, %v2187, 9e+15
    %v2204 = vsel %vm55, %v2188, 9e+15
    %v2205 = vsel %vm55, %v2189, 9e+15
    %v2206 = vsel %vm55, %v2190, 9e+15
    %v2207 = vsel %vm55, %v2191, 9e+15
    %v2208 = vsel %vm55, %v2192, 9e+15
    %v2209 = vsel %vm55, %v2193, 9e+15
    %v2210 = vsel %vm55, %v2194, 9e+15
    %v2211 = vsel %vm55, %v2195, 9e+15
    %v2212 = vsel %vm55, %v2180, -9e+15
    %v2213 = vsel %vm55, %v2181, -9e+15
    %v2214 = vsel %vm55, %v2182, -9e+15
    %v2215 = vsel %vm55, %v2183, -9e+15
    %v2216 = vsel %vm55, %v2184, -9e+15
    %v2217 = vsel %vm55, %v2185, -9e+15
    %v2218 = vsel %vm55, %v2186, -9e+15
    %v2219 = vsel %vm55, %v2187, -9e+15
    %v2220 = vsel %vm55, %v2188, -9e+15
    %v2221 = vsel %vm55, %v2189, -9e+15
    %v2222 = vsel %vm55, %v2190, -9e+15
    %v2223 = vsel %vm55, %v2191, -9e+15
    %v2224 = vsel %vm55, %v2192, -9e+15
    %v2225 = vsel %vm55, %v2193, -9e+15
    %v2226 = vsel %vm55, %v2194, -9e+15
    %v2227 = vsel %vm55, %v2195, -9e+15
    %2228 = vmin.xlane.f32.xlu0 %v2196
    %v2229 = vpop.xlane.xlu0 %2228
    %2230 = vmin.xlane.f32.xlu0 %v2197
    %v2231 = vpop.xlane.xlu0 %2230
    %2232 = vmin.xlane.f32.xlu0 %v2198
    %v2233 = vpop.xlane.xlu0 %2232
    %2234 = vmin.xlane.f32.xlu0 %v2199
    %v2235 = vpop.xlane.xlu0 %2234
    %2236 = vmin.xlane.f32.xlu0 %v2200
    %v2237 = vpop.xlane.xlu0 %2236
    %2238 = vmin.xlane.f32.xlu0 %v2201
    %v2239 = vpop.xlane.xlu0 %2238
    %2240 = vmin.xlane.f32.xlu0 %v2202
    %v2241 = vpop.xlane.xlu0 %2240
    %2242 = vmin.xlane.f32.xlu0 %v2203
    %v2243 = vpop.xlane.xlu0 %2242
    %2244 = vmin.xlane.f32.xlu0 %v2204
    %v2245 = vpop.xlane.xlu0 %2244
    %2246 = vmin.xlane.f32.xlu0 %v2205
    %v2247 = vpop.xlane.xlu0 %2246
    %2248 = vmin.xlane.f32.xlu0 %v2206
    %v2249 = vpop.xlane.xlu0 %2248
    %2250 = vmin.xlane.f32.xlu0 %v2207
    %v2251 = vpop.xlane.xlu0 %2250
    %2252 = vmin.xlane.f32.xlu0 %v2208
    %v2253 = vpop.xlane.xlu0 %2252
    %2254 = vmin.xlane.f32.xlu0 %v2209
    %v2255 = vpop.xlane.xlu0 %2254
    %2256 = vmin.xlane.f32.xlu0 %v2210
    %v2257 = vpop.xlane.xlu0 %2256
    %2258 = vmin.xlane.f32.xlu0 %v2211
    %v2259 = vpop.xlane.xlu0 %2258
    %2260 = vmax.xlane.f32.xlu0 %v2212
    %v2261 = vpop.xlane.xlu0 %2260
    %2262 = vmax.xlane.f32.xlu0 %v2213
    %v2263 = vpop.xlane.xlu0 %2262
    %2264 = vmax.xlane.f32.xlu0 %v2214
    %v2265 = vpop.xlane.xlu0 %2264
    %2266 = vmax.xlane.f32.xlu0 %v2215
    %v2267 = vpop.xlane.xlu0 %2266
    %2268 = vmax.xlane.f32.xlu0 %v2216
    %v2269 = vpop.xlane.xlu0 %2268
    %2270 = vmax.xlane.f32.xlu0 %v2217
    %v2271 = vpop.xlane.xlu0 %2270
    %2272 = vmax.xlane.f32.xlu0 %v2218
    %v2273 = vpop.xlane.xlu0 %2272
    %2274 = vmax.xlane.f32.xlu0 %v2219
    %v2275 = vpop.xlane.xlu0 %2274
    %2276 = vmax.xlane.f32.xlu0 %v2220
    %v2277 = vpop.xlane.xlu0 %2276
    %2278 = vmax.xlane.f32.xlu0 %v2221
    %v2279 = vpop.xlane.xlu0 %2278
    %2280 = vmax.xlane.f32.xlu0 %v2222
    %v2281 = vpop.xlane.xlu0 %2280
    %2282 = vmax.xlane.f32.xlu0 %v2223
    %v2283 = vpop.xlane.xlu0 %2282
    %2284 = vmax.xlane.f32.xlu0 %v2224
    %v2285 = vpop.xlane.xlu0 %2284
    %2286 = vmax.xlane.f32.xlu0 %v2225
    %v2287 = vpop.xlane.xlu0 %2286
    %2288 = vmax.xlane.f32.xlu0 %v2226
    %v2289 = vpop.xlane.xlu0 %2288
    %2290 = vmax.xlane.f32.xlu0 %v2227
    %v2291 = vpop.xlane.xlu0 %2290
    %v2292 = vsub.f32 %v2261, %v2229
    %v2293 = vsub.f32 %v2263, %v2231
    %v2294 = vsub.f32 %v2265, %v2233
    %v2295 = vsub.f32 %v2267, %v2235
    %v2296 = vsub.f32 %v2269, %v2237
    %v2297 = vsub.f32 %v2271, %v2239
    %v2298 = vsub.f32 %v2273, %v2241
    %v2299 = vsub.f32 %v2275, %v2243
    %v2300 = vsub.f32 %v2277, %v2245
    %v2301 = vsub.f32 %v2279, %v2247
    %v2302 = vsub.f32 %v2281, %v2249
    %v2303 = vsub.f32 %v2283, %v2251
    %v2304 = vsub.f32 %v2285, %v2253
    %v2305 = vsub.f32 %v2287, %v2255
    %v2306 = vsub.f32 %v2289, %v2257
    %v2307 = vsub.f32 %v2291, %v2259
    %vm2308 = vcmp.eq.f32.partialorder %v2292, 0.0
    %vm2309 = vcmp.eq.f32.partialorder %v2293, 0.0
    %vm2310 = vcmp.eq.f32.partialorder %v2294, 0.0
    %vm2311 = vcmp.eq.f32.partialorder %v2295, 0.0
    %vm2312 = vcmp.eq.f32.partialorder %v2296, 0.0
    %vm2313 = vcmp.eq.f32.partialorder %v2297, 0.0
    %vm2314 = vcmp.eq.f32.partialorder %v2298, 0.0
    %vm2315 = vcmp.eq.f32.partialorder %v2299, 0.0
    %vm2316 = vcmp.eq.f32.partialorder %v2300, 0.0
    %vm2317 = vcmp.eq.f32.partialorder %v2301, 0.0
    %vm2318 = vcmp.eq.f32.partialorder %v2302, 0.0
    %vm2319 = vcmp.eq.f32.partialorder %v2303, 0.0
    %vm2320 = vcmp.eq.f32.partialorder %v2304, 0.0
    %vm2321 = vcmp.eq.f32.partialorder %v2305, 0.0
    %vm2322 = vcmp.eq.f32.partialorder %v2306, 0.0
    %vm2323 = vcmp.eq.f32.partialorder %v2307, 0.0
    %v2324 = vsel %vm2308, 1e-06, %v2292
    %v2325 = vsel %vm2309, 1e-06, %v2293
    %v2326 = vsel %vm2310, 1e-06, %v2294
    %v2327 = vsel %vm2311, 1e-06, %v2295
    %v2328 = vsel %vm2312, 1e-06, %v2296
    %v2329 = vsel %vm2313, 1e-06, %v2297
    %v2330 = vsel %vm2314, 1e-06, %v2298
    %v2331 = vsel %vm2315, 1e-06, %v2299
    %v2332 = vsel %vm2316, 1e-06, %v2300
    %v2333 = vsel %vm2317, 1e-06, %v2301
    %v2334 = vsel %vm2318, 1e-06, %v2302
    %v2335 = vsel %vm2319, 1e-06, %v2303
    %v2336 = vsel %vm2320, 1e-06, %v2304
    %v2337 = vsel %vm2321, 1e-06, %v2305
    %v2338 = vsel %vm2322, 1e-06, %v2306
    %v2339 = vsel %vm2323, 1e-06, %v2307
    %v2340 = vsub.f32 %v2180, %v2229
    %v2341 = vsub.f32 %v2181, %v2231
    %v2342 = vsub.f32 %v2182, %v2233
    %v2343 = vsub.f32 %v2183, %v2235
    %v2344 = vsub.f32 %v2184, %v2237
    %v2345 = vsub.f32 %v2185, %v2239
    %v2346 = vsub.f32 %v2186, %v2241
    %v2347 = vsub.f32 %v2187, %v2243
    %v2348 = vsub.f32 %v2188, %v2245
    %v2349 = vsub.f32 %v2189, %v2247
    %v2350 = vsub.f32 %v2190, %v2249
    %v2351 = vsub.f32 %v2191, %v2251
    %v2352 = vsub.f32 %v2192, %v2253
    %v2353 = vsub.f32 %v2193, %v2255
    %v2354 = vsub.f32 %v2194, %v2257
    %v2355 = vsub.f32 %v2195, %v2259
    %v2356 = vrcp.pop %v2324
    %v2357 = vmul.f32 1.0, %v2356
    %v2358 = vrcp.pop %v2325
    %v2359 = vmul.f32 1.0, %v2358
    %v2360 = vrcp.pop %v2326
    %v2361 = vmul.f32 1.0, %v2360
    %v2362 = vrcp.pop %v2327
    %v2363 = vmul.f32 1.0, %v2362
    %v2364 = vrcp.pop %v2328
    %v2365 = vmul.f32 1.0, %v2364
    %v2366 = vrcp.pop %v2329
    %v2367 = vmul.f32 1.0, %v2366
    %v2368 = vrcp.pop %v2330
    %v2369 = vmul.f32 1.0, %v2368
    %v2370 = vrcp.pop %v2331
    %v2371 = vmul.f32 1.0, %v2370
    %v2372 = vrcp.pop %v2332
    %v2373 = vmul.f32 1.0, %v2372
    %v2374 = vrcp.pop %v2333
    %v2375 = vmul.f32 1.0, %v2374
    %v2376 = vrcp.pop %v2334
    %v2377 = vmul.f32 1.0, %v2376
    %v2378 = vrcp.pop %v2335
    %v2379 = vmul.f32 1.0, %v2378
    %v2380 = vrcp.pop %v2336
    %v2381 = vmul.f32 1.0, %v2380
    %v2382 = vrcp.pop %v2337
    %v2383 = vmul.f32 1.0, %v2382
    %v2384 = vrcp.pop %v2338
    %v2385 = vmul.f32 1.0, %v2384
    %v2386 = vrcp.pop %v2339
    %v2387 = vmul.f32 1.0, %v2386
    %v2388 = vmul.f32 %v2340, %v2357
    %v2389 = vmul.f32 %v2341, %v2359
    %v2390 = vmul.f32 %v2342, %v2361
    %v2391 = vmul.f32 %v2343, %v2363
    %v2392 = vmul.f32 %v2344, %v2365
    %v2393 = vmul.f32 %v2345, %v2367
    %v2394 = vmul.f32 %v2346, %v2369
    %v2395 = vmul.f32 %v2347, %v2371
    %v2396 = vmul.f32 %v2348, %v2373
    %v2397 = vmul.f32 %v2349, %v2375
    %v2398 = vmul.f32 %v2350, %v2377
    %v2399 = vmul.f32 %v2351, %v2379
    %v2400 = vmul.f32 %v2352, %v2381
    %v2401 = vmul.f32 %v2353, %v2383
    %v2402 = vmul.f32 %v2354, %v2385
    %v2403 = vmul.f32 %v2355, %v2387
    %v2404 = vsel %vm55, %v2388, -9e+15
    %v2405 = vsel %vm55, %v2389, -9e+15
    %v2406 = vsel %vm55, %v2390, -9e+15
    %v2407 = vsel %vm55, %v2391, -9e+15
    %v2408 = vsel %vm55, %v2392, -9e+15
    %v2409 = vsel %vm55, %v2393, -9e+15
    %v2410 = vsel %vm55, %v2394, -9e+15
    %v2411 = vsel %vm55, %v2395, -9e+15
    %v2412 = vsel %vm55, %v2396, -9e+15
    %v2413 = vsel %vm55, %v2397, -9e+15
    %v2414 = vsel %vm55, %v2398, -9e+15
    %v2415 = vsel %vm55, %v2399, -9e+15
    %v2416 = vsel %vm55, %v2400, -9e+15
    %v2417 = vsel %vm55, %v2401, -9e+15
    %v2418 = vsel %vm55, %v2402, -9e+15
    %v2419 = vsel %vm55, %v2403, -9e+15
    %v2420 = vmul.f32 %v2404, 1.442695
    %v2421 = vpow.pop %v2420
    %v2422 = vmul.f32 %v2405, 1.442695
    %v2423 = vpow.pop %v2422
    %v2424 = vmul.f32 %v2406, 1.442695
    %v2425 = vpow.pop %v2424
    %v2426 = vmul.f32 %v2407, 1.442695
    %v2427 = vpow.pop %v2426
    %v2428 = vmul.f32 %v2408, 1.442695
    %v2429 = vpow.pop %v2428
    %v2430 = vmul.f32 %v2409, 1.442695
    %v2431 = vpow.pop %v2430
    %v2432 = vmul.f32 %v2410, 1.442695
    %v2433 = vpow.pop %v2432
    %v2434 = vmul.f32 %v2411, 1.442695
    %v2435 = vpow.pop %v2434
    %v2436 = vmul.f32 %v2412, 1.442695
    %v2437 = vpow.pop %v2436
    %v2438 = vmul.f32 %v2413, 1.442695
    %v2439 = vpow.pop %v2438
    %v2440 = vmul.f32 %v2414, 1.442695
    %v2441 = vpow.pop %v2440
    %v2442 = vmul.f32 %v2415, 1.442695
    %v2443 = vpow.pop %v2442
    %v2444 = vmul.f32 %v2416, 1.442695
    %v2445 = vpow.pop %v2444
    %v2446 = vmul.f32 %v2417, 1.442695
    %v2447 = vpow.pop %v2446
    %v2448 = vmul.f32 %v2418, 1.442695
    %v2449 = vpow.pop %v2448
    %v2450 = vmul.f32 %v2419, 1.442695
    %v2451 = vpow.pop %v2450
    %2452 = vadd.xlane.f32.xlu0 %v2421
    %v2453 = vpop.xlane.xlu0 %2452
    %2454 = vadd.xlane.f32.xlu0 %v2423
    %v2455 = vpop.xlane.xlu0 %2454
    %2456 = vadd.xlane.f32.xlu0 %v2425
    %v2457 = vpop.xlane.xlu0 %2456
    %2458 = vadd.xlane.f32.xlu0 %v2427
    %v2459 = vpop.xlane.xlu0 %2458
    %2460 = vadd.xlane.f32.xlu0 %v2429
    %v2461 = vpop.xlane.xlu0 %2460
    %2462 = vadd.xlane.f32.xlu0 %v2431
    %v2463 = vpop.xlane.xlu0 %2462
    %2464 = vadd.xlane.f32.xlu0 %v2433
    %v2465 = vpop.xlane.xlu0 %2464
    %2466 = vadd.xlane.f32.xlu0 %v2435
    %v2467 = vpop.xlane.xlu0 %2466
    %2468 = vadd.xlane.f32.xlu0 %v2437
    %v2469 = vpop.xlane.xlu0 %2468
    %2470 = vadd.xlane.f32.xlu0 %v2439
    %v2471 = vpop.xlane.xlu0 %2470
    %2472 = vadd.xlane.f32.xlu0 %v2441
    %v2473 = vpop.xlane.xlu0 %2472
    %2474 = vadd.xlane.f32.xlu0 %v2443
    %v2475 = vpop.xlane.xlu0 %2474
    %2476 = vadd.xlane.f32.xlu0 %v2445
    %v2477 = vpop.xlane.xlu0 %2476
    %2478 = vadd.xlane.f32.xlu0 %v2447
    %v2479 = vpop.xlane.xlu0 %2478
    %2480 = vadd.xlane.f32.xlu0 %v2449
    %v2481 = vpop.xlane.xlu0 %2480
    %2482 = vadd.xlane.f32.xlu0 %v2451
    %v2483 = vpop.xlane.xlu0 %2482
    %v2484 = vrcp.pop %v2453
    %v2485 = vrcp.pop %v2455
    %v2486 = vrcp.pop %v2457
    %v2487 = vrcp.pop %v2459
    %v2488 = vrcp.pop %v2461
    %v2489 = vrcp.pop %v2463
    %v2490 = vrcp.pop %v2465
    %v2491 = vrcp.pop %v2467
    %v2492 = vrcp.pop %v2469
    %v2493 = vrcp.pop %v2471
    %v2494 = vrcp.pop %v2473
    %v2495 = vrcp.pop %v2475
    %v2496 = vrcp.pop %v2477
    %v2497 = vrcp.pop %v2479
    %v2498 = vrcp.pop %v2481
    %v2499 = vrcp.pop %v2483
    %v2500 = vmul.f32 %v2421, %v2484
    %v2501 = vmul.f32 %v2423, %v2485
    %v2502 = vmul.f32 %v2425, %v2486
    %v2503 = vmul.f32 %v2427, %v2487
    %v2504 = vmul.f32 %v2429, %v2488
    %v2505 = vmul.f32 %v2431, %v2489
    %v2506 = vmul.f32 %v2433, %v2490
    %v2507 = vmul.f32 %v2435, %v2491
    %v2508 = vmul.f32 %v2437, %v2492
    %v2509 = vmul.f32 %v2439, %v2493
    %v2510 = vmul.f32 %v2441, %v2494
    %v2511 = vmul.f32 %v2443, %v2495
    %v2512 = vmul.f32 %v2445, %v2496
    %v2513 = vmul.f32 %v2447, %v2497
    %v2514 = vmul.f32 %v2449, %v2498
    %v2515 = vmul.f32 %v2451, %v2499
    %s2517 = sor.u32 256, 40
    %2518 = vbcast.lane.b32.xlu0 %v379, %s2517
    %v2519 = vpop.permute.xlu0 %2518
    %s2521 = sor.u32 256, 40
    %2522 = vbcast.lane.b32.xlu0 %v386, %s2521
    %v2523 = vpop.permute.xlu0 %2522
    %s2525 = sor.u32 256, 40
    %2526 = vbcast.lane.b32.xlu0 %v393, %s2525
    %v2527 = vpop.permute.xlu0 %2526
    %s2529 = sor.u32 256, 40
    %2530 = vbcast.lane.b32.xlu0 %v400, %s2529
    %v2531 = vpop.permute.xlu0 %2530
    %s2533 = sor.u32 256, 40
    %2534 = vbcast.lane.b32.xlu0 %v407, %s2533
    %v2535 = vpop.permute.xlu0 %2534
    %s2537 = sor.u32 256, 40
    %2538 = vbcast.lane.b32.xlu0 %v414, %s2537
    %v2539 = vpop.permute.xlu0 %2538
    %s2541 = sor.u32 256, 40
    %2542 = vbcast.lane.b32.xlu0 %v421, %s2541
    %v2543 = vpop.permute.xlu0 %2542
    %s2545 = sor.u32 256, 40
    %2546 = vbcast.lane.b32.xlu0 %v428, %s2545
    %v2547 = vpop.permute.xlu0 %2546
    %s2549 = sor.u32 256, 40
    %2550 = vbcast.lane.b32.xlu0 %v435, %s2549
    %v2551 = vpop.permute.xlu0 %2550
    %s2553 = sor.u32 256, 40
    %2554 = vbcast.lane.b32.xlu0 %v442, %s2553
    %v2555 = vpop.permute.xlu0 %2554
    %s2557 = sor.u32 256, 40
    %2558 = vbcast.lane.b32.xlu0 %v449, %s2557
    %v2559 = vpop.permute.xlu0 %2558
    %s2561 = sor.u32 256, 40
    %2562 = vbcast.lane.b32.xlu0 %v456, %s2561
    %v2563 = vpop.permute.xlu0 %2562
    %s2565 = sor.u32 256, 40
    %2566 = vbcast.lane.b32.xlu0 %v463, %s2565
    %v2567 = vpop.permute.xlu0 %2566
    %s2569 = sor.u32 256, 40
    %2570 = vbcast.lane.b32.xlu0 %v470, %s2569
    %v2571 = vpop.permute.xlu0 %2570
    %s2573 = sor.u32 256, 40
    %2574 = vbcast.lane.b32.xlu0 %v477, %s2573
    %v2575 = vpop.permute.xlu0 %2574
    %s2577 = sor.u32 256, 40
    %2578 = vbcast.lane.b32.xlu0 %v484, %s2577
    %v2579 = vpop.permute.xlu0 %2578
    %v2580 = vmul.f32 %v2519, %v2500
    %v2581 = vmul.f32 %v2523, %v2501
    %v2582 = vmul.f32 %v2527, %v2502
    %v2583 = vmul.f32 %v2531, %v2503
    %v2584 = vmul.f32 %v2535, %v2504
    %v2585 = vmul.f32 %v2539, %v2505
    %v2586 = vmul.f32 %v2543, %v2506
    %v2587 = vmul.f32 %v2547, %v2507
    %v2588 = vmul.f32 %v2551, %v2508
    %v2589 = vmul.f32 %v2555, %v2509
    %v2590 = vmul.f32 %v2559, %v2510
    %v2591 = vmul.f32 %v2563, %v2511
    %v2592 = vmul.f32 %v2567, %v2512
    %v2593 = vmul.f32 %v2571, %v2513
    %v2594 = vmul.f32 %v2575, %v2514
    %v2595 = vmul.f32 %v2579, %v2515
    %v2596 = vrot.slane %v2580, 4
    %v2597 = vadd.f32 %v2580, %v2596
    %v2598 = vrot.slane %v2597, 2
    %v2599 = vadd.f32 %v2597, %v2598
    %v2600 = vrot.slane %v2599, 1
    %v2601 = vadd.f32 %v2599, %v2600
    %v2602 = vrot.slane %v2581, 4
    %v2603 = vadd.f32 %v2581, %v2602
    %v2604 = vrot.slane %v2603, 2
    %v2605 = vadd.f32 %v2603, %v2604
    %v2606 = vrot.slane %v2605, 1
    %v2607 = vadd.f32 %v2605, %v2606
    %v2608 = vrot.slane %v2582, 4
    %v2609 = vadd.f32 %v2582, %v2608
    %v2610 = vrot.slane %v2609, 2
    %v2611 = vadd.f32 %v2609, %v2610
    %v2612 = vrot.slane %v2611, 1
    %v2613 = vadd.f32 %v2611, %v2612
    %v2614 = vrot.slane %v2583, 4
    %v2615 = vadd.f32 %v2583, %v2614
    %v2616 = vrot.slane %v2615, 2
    %v2617 = vadd.f32 %v2615, %v2616
    %v2618 = vrot.slane %v2617, 1
    %v2619 = vadd.f32 %v2617, %v2618
    %v2620 = vrot.slane %v2584, 4
    %v2621 = vadd.f32 %v2584, %v2620
    %v2622 = vrot.slane %v2621, 2
    %v2623 = vadd.f32 %v2621, %v2622
    %v2624 = vrot.slane %v2623, 1
    %v2625 = vadd.f32 %v2623, %v2624
    %v2626 = vrot.slane %v2585, 4
    %v2627 = vadd.f32 %v2585, %v2626
    %v2628 = vrot.slane %v2627, 2
    %v2629 = vadd.f32 %v2627, %v2628
    %v2630 = vrot.slane %v2629, 1
    %v2631 = vadd.f32 %v2629, %v2630
    %v2632 = vrot.slane %v2586, 4
    %v2633 = vadd.f32 %v2586, %v2632
    %v2634 = vrot.slane %v2633, 2
    %v2635 = vadd.f32 %v2633, %v2634
    %v2636 = vrot.slane %v2635, 1
    %v2637 = vadd.f32 %v2635, %v2636
    %v2638 = vrot.slane %v2587, 4
    %v2639 = vadd.f32 %v2587, %v2638
    %v2640 = vrot.slane %v2639, 2
    %v2641 = vadd.f32 %v2639, %v2640
    %v2642 = vrot.slane %v2641, 1
    %v2643 = vadd.f32 %v2641, %v2642
    %v2644 = vrot.slane %v2588, 4
    %v2645 = vadd.f32 %v2588, %v2644
    %v2646 = vrot.slane %v2645, 2
    %v2647 = vadd.f32 %v2645, %v2646
    %v2648 = vrot.slane %v2647, 1
    %v2649 = vadd.f32 %v2647, %v2648
    %v2650 = vrot.slane %v2589, 4
    %v2651 = vadd.f32 %v2589, %v2650
    %v2652 = vrot.slane %v2651, 2
    %v2653 = vadd.f32 %v2651, %v2652
    %v2654 = vrot.slane %v2653, 1
    %v2655 = vadd.f32 %v2653, %v2654
    %v2656 = vrot.slane %v2590, 4
    %v2657 = vadd.f32 %v2590, %v2656
    %v2658 = vrot.slane %v2657, 2
    %v2659 = vadd.f32 %v2657, %v2658
    %v2660 = vrot.slane %v2659, 1
    %v2661 = vadd.f32 %v2659, %v2660
    %v2662 = vrot.slane %v2591, 4
    %v2663 = vadd.f32 %v2591, %v2662
    %v2664 = vrot.slane %v2663, 2
    %v2665 = vadd.f32 %v2663, %v2664
    %v2666 = vrot.slane %v2665, 1
    %v2667 = vadd.f32 %v2665, %v2666
    %v2668 = vrot.slane %v2592, 4
    %v2669 = vadd.f32 %v2592, %v2668
    %v2670 = vrot.slane %v2669, 2
    %v2671 = vadd.f32 %v2669, %v2670
    %v2672 = vrot.slane %v2671, 1
    %v2673 = vadd.f32 %v2671, %v2672
    %v2674 = vrot.slane %v2593, 4
    %v2675 = vadd.f32 %v2593, %v2674
    %v2676 = vrot.slane %v2675, 2
    %v2677 = vadd.f32 %v2675, %v2676
    %v2678 = vrot.slane %v2677, 1
    %v2679 = vadd.f32 %v2677, %v2678
    %v2680 = vrot.slane %v2594, 4
    %v2681 = vadd.f32 %v2594, %v2680
    %v2682 = vrot.slane %v2681, 2
    %v2683 = vadd.f32 %v2681, %v2682
    %v2684 = vrot.slane %v2683, 1
    %v2685 = vadd.f32 %v2683, %v2684
    %v2686 = vrot.slane %v2595, 4
    %v2687 = vadd.f32 %v2595, %v2686
    %v2688 = vrot.slane %v2687, 2
    %v2689 = vadd.f32 %v2687, %v2688
    %v2690 = vrot.slane %v2689, 1
    %v2691 = vadd.f32 %v2689, %v2690
    %s2693 = sor.u32 256, 48
    %2694 = vbcast.lane.b32.xlu0 %v379, %s2693
    %v2695 = vpop.permute.xlu0 %2694
    %s2697 = sor.u32 256, 48
    %2698 = vbcast.lane.b32.xlu0 %v386, %s2697
    %v2699 = vpop.permute.xlu0 %2698
    %s2701 = sor.u32 256, 48
    %2702 = vbcast.lane.b32.xlu0 %v393, %s2701
    %v2703 = vpop.permute.xlu0 %2702
    %s2705 = sor.u32 256, 48
    %2706 = vbcast.lane.b32.xlu0 %v400, %s2705
    %v2707 = vpop.permute.xlu0 %2706
    %s2709 = sor.u32 256, 48
    %2710 = vbcast.lane.b32.xlu0 %v407, %s2709
    %v2711 = vpop.permute.xlu0 %2710
    %s2713 = sor.u32 256, 48
    %2714 = vbcast.lane.b32.xlu0 %v414, %s2713
    %v2715 = vpop.permute.xlu0 %2714
    %s2717 = sor.u32 256, 48
    %2718 = vbcast.lane.b32.xlu0 %v421, %s2717
    %v2719 = vpop.permute.xlu0 %2718
    %s2721 = sor.u32 256, 48
    %2722 = vbcast.lane.b32.xlu0 %v428, %s2721
    %v2723 = vpop.permute.xlu0 %2722
    %s2725 = sor.u32 256, 48
    %2726 = vbcast.lane.b32.xlu0 %v435, %s2725
    %v2727 = vpop.permute.xlu0 %2726
    %s2729 = sor.u32 256, 48
    %2730 = vbcast.lane.b32.xlu0 %v442, %s2729
    %v2731 = vpop.permute.xlu0 %2730
    %s2733 = sor.u32 256, 48
    %2734 = vbcast.lane.b32.xlu0 %v449, %s2733
    %v2735 = vpop.permute.xlu0 %2734
    %s2737 = sor.u32 256, 48
    %2738 = vbcast.lane.b32.xlu0 %v456, %s2737
    %v2739 = vpop.permute.xlu0 %2738
    %s2741 = sor.u32 256, 48
    %2742 = vbcast.lane.b32.xlu0 %v463, %s2741
    %v2743 = vpop.permute.xlu0 %2742
    %s2745 = sor.u32 256, 48
    %2746 = vbcast.lane.b32.xlu0 %v470, %s2745
    %v2747 = vpop.permute.xlu0 %2746
    %s2749 = sor.u32 256, 48
    %2750 = vbcast.lane.b32.xlu0 %v477, %s2749
    %v2751 = vpop.permute.xlu0 %2750
    %s2753 = sor.u32 256, 48
    %2754 = vbcast.lane.b32.xlu0 %v484, %s2753
    %v2755 = vpop.permute.xlu0 %2754
    %v2758 = vcombine.high %v291, %v291
    %v2760 = vunpack.c.l.s4 1966171168
    %v2761 = vunpack.c.0.s8 %v2760
    %v2762 = vlaneseq
    %v2763 = vshrl.u32 %v2762, 7
    %v2764 = vsub.s32 %v2761, %v2763
    %v2765 = vrot.slane %v291, %v2764
    %v2767 = vunpack.c.l.s4 1966171168
    %v2768 = vunpack.c.0.s8 %v2767
    %v2769 = vlaneseq
    %v2770 = vshrl.u32 %v2769, 7
    %v2771 = vsub.s32 %v2768, %v2770
    %v2772 = vrot.slane %v2758, %v2771
    %v2773 = vcombine.high %v2765, %v2765
    %v2774 = vcombine.high %v2772, %v2772
    %v2776 = vunpack.c.l.s4 1966171168
    %v2777 = vunpack.c.0.s8 %v2776
    %v2778 = vlaneseq
    %v2779 = vshrl.u32 %v2778, 7
    %v2780 = vsub.s32 %v2777, %v2779
    %v2781 = vrot.slane %v2765, %v2780
    %v2783 = vunpack.c.l.s4 1966171168
    %v2784 = vunpack.c.0.s8 %v2783
    %v2785 = vlaneseq
    %v2786 = vshrl.u32 %v2785, 7
    %v2787 = vsub.s32 %v2784, %v2786
    %v2788 = vrot.slane %v2772, %v2787
    %v2790 = vunpack.c.l.s4 1966171168
    %v2791 = vunpack.c.0.s8 %v2790
    %v2792 = vlaneseq
    %v2793 = vshrl.u32 %v2792, 7
    %v2794 = vsub.s32 %v2791, %v2793
    %v2795 = vrot.slane %v2773, %v2794
    %v2797 = vunpack.c.l.s4 1966171168
    %v2798 = vunpack.c.0.s8 %v2797
    %v2799 = vlaneseq
    %v2800 = vshrl.u32 %v2799, 7
    %v2801 = vsub.s32 %v2798, %v2800
    %v2802 = vrot.slane %v2774, %v2801
    %v2803 = vcombine.high %v2781, %v2781
    %v2804 = vcombine.high %v2788, %v2788
    %v2805 = vcombine.high %v2795, %v2795
    %v2806 = vcombine.high %v2802, %v2802
    %v2807 = vcombine.high %v297, %v297
    %v2809 = vunpack.c.l.s4 1966171168
    %v2810 = vunpack.c.0.s8 %v2809
    %v2811 = vlaneseq
    %v2812 = vshrl.u32 %v2811, 7
    %v2813 = vsub.s32 %v2810, %v2812
    %v2814 = vrot.slane %v297, %v2813
    %v2816 = vunpack.c.l.s4 1966171168
    %v2817 = vunpack.c.0.s8 %v2816
    %v2818 = vlaneseq
    %v2819 = vshrl.u32 %v2818, 7
    %v2820 = vsub.s32 %v2817, %v2819
    %v2821 = vrot.slane %v2807, %v2820
    %v2822 = vcombine.high %v2814, %v2814
    %v2823 = vcombine.high %v2821, %v2821
    %v2825 = vunpack.c.l.s4 1966171168
    %v2826 = vunpack.c.0.s8 %v2825
    %v2827 = vlaneseq
    %v2828 = vshrl.u32 %v2827, 7
    %v2829 = vsub.s32 %v2826, %v2828
    %v2830 = vrot.slane %v2814, %v2829
    %v2832 = vunpack.c.l.s4 1966171168
    %v2833 = vunpack.c.0.s8 %v2832
    %v2834 = vlaneseq
    %v2835 = vshrl.u32 %v2834, 7
    %v2836 = vsub.s32 %v2833, %v2835
    %v2837 = vrot.slane %v2821, %v2836
    %v2839 = vunpack.c.l.s4 1966171168
    %v2840 = vunpack.c.0.s8 %v2839
    %v2841 = vlaneseq
    %v2842 = vshrl.u32 %v2841, 7
    %v2843 = vsub.s32 %v2840, %v2842
    %v2844 = vrot.slane %v2822, %v2843
    %v2846 = vunpack.c.l.s4 1966171168
    %v2847 = vunpack.c.0.s8 %v2846
    %v2848 = vlaneseq
    %v2849 = vshrl.u32 %v2848, 7
    %v2850 = vsub.s32 %v2847, %v2849
    %v2851 = vrot.slane %v2823, %v2850
    %v2852 = vcombine.high %v2830, %v2830
    %v2853 = vcombine.high %v2837, %v2837
    %v2854 = vcombine.high %v2844, %v2844
    %v2855 = vcombine.high %v2851, %v2851
    %v2856 = vlaneseq
    %v2857 = vshrl.u32 %v2856, 7
    %v2858 = vsub.s32 0, %v2857
    %v2859 = vrot.slane %v2781, %v2858
    %v2860 = vlaneseq
    %v2861 = vshrl.u32 %v2860, 7
    %v2862 = vsub.s32 0, %v2861
    %v2863 = vrot.slane %v2795, %v2862
    %v2864 = vlaneseq
    %v2865 = vshrl.u32 %v2864, 7
    %v2866 = vsub.s32 0, %v2865
    %v2867 = vrot.slane %v2803, %v2866
    %v2868 = vlaneseq
    %v2869 = vshrl.u32 %v2868, 7
    %v2870 = vsub.s32 0, %v2869
    %v2871 = vrot.slane %v2805, %v2870
    %v2872 = vlaneseq
    %v2873 = vshrl.u32 %v2872, 7
    %v2874 = vsub.s32 0, %v2873
    %v2875 = vrot.slane %v2788, %v2874
    %v2876 = vlaneseq
    %v2877 = vshrl.u32 %v2876, 7
    %v2878 = vsub.s32 0, %v2877
    %v2879 = vrot.slane %v2802, %v2878
    %v2880 = vlaneseq
    %v2881 = vshrl.u32 %v2880, 7
    %v2882 = vsub.s32 0, %v2881
    %v2883 = vrot.slane %v2804, %v2882
    %v2884 = vlaneseq
    %v2885 = vshrl.u32 %v2884, 7
    %v2886 = vsub.s32 0, %v2885
    %v2887 = vrot.slane %v2806, %v2886
    %v2888 = vlaneseq
    %v2889 = vshrl.u32 %v2888, 7
    %v2890 = vsub.s32 0, %v2889
    %v2891 = vrot.slane %v2830, %v2890
    %v2892 = vlaneseq
    %v2893 = vshrl.u32 %v2892, 7
    %v2894 = vsub.s32 0, %v2893
    %v2895 = vrot.slane %v2844, %v2894
    %v2896 = vlaneseq
    %v2897 = vshrl.u32 %v2896, 7
    %v2898 = vsub.s32 0, %v2897
    %v2899 = vrot.slane %v2852, %v2898
    %v2900 = vlaneseq
    %v2901 = vshrl.u32 %v2900, 7
    %v2902 = vsub.s32 0, %v2901
    %v2903 = vrot.slane %v2854, %v2902
    %v2904 = vlaneseq
    %v2905 = vshrl.u32 %v2904, 7
    %v2906 = vsub.s32 0, %v2905
    %v2907 = vrot.slane %v2837, %v2906
    %v2908 = vlaneseq
    %v2909 = vshrl.u32 %v2908, 7
    %v2910 = vsub.s32 0, %v2909
    %v2911 = vrot.slane %v2851, %v2910
    %v2912 = vlaneseq
    %v2913 = vshrl.u32 %v2912, 7
    %v2914 = vsub.s32 0, %v2913
    %v2915 = vrot.slane %v2853, %v2914
    %v2916 = vlaneseq
    %v2917 = vshrl.u32 %v2916, 7
    %v2918 = vsub.s32 0, %v2917
    %v2919 = vrot.slane %v2855, %v2918
    %v2936 = vmul.f32 %v2695, %v2859
    %v2937 = vmul.f32 %v2699, %v2863
    %v2938 = vmul.f32 %v2703, %v2867
    %v2939 = vmul.f32 %v2707, %v2871
    %v2940 = vmul.f32 %v2711, %v2875
    %v2941 = vmul.f32 %v2715, %v2879
    %v2942 = vmul.f32 %v2719, %v2883
    %v2943 = vmul.f32 %v2723, %v2887
    %v2944 = vmul.f32 %v2727, %v2891
    %v2945 = vmul.f32 %v2731, %v2895
    %v2946 = vmul.f32 %v2735, %v2899
    %v2947 = vmul.f32 %v2739, %v2903
    %v2948 = vmul.f32 %v2743, %v2907
    %v2949 = vmul.f32 %v2747, %v2911
    %v2950 = vmul.f32 %v2751, %v2915
    %v2951 = vmul.f32 %v2755, %v2919
    %v2952 = vsel %vm55, %v2936, 9e+15
    %v2953 = vsel %vm55, %v2937, 9e+15
    %v2954 = vsel %vm55, %v2938, 9e+15
    %v2955 = vsel %vm55, %v2939, 9e+15
    %v2956 = vsel %vm55, %v2940, 9e+15
    %v2957 = vsel %vm55, %v2941, 9e+15
    %v2958 = vsel %vm55, %v2942, 9e+15
    %v2959 = vsel %vm55, %v2943, 9e+15
    %v2960 = vsel %vm55, %v2944, 9e+15
    %v2961 = vsel %vm55, %v2945, 9e+15
    %v2962 = vsel %vm55, %v2946, 9e+15
    %v2963 = vsel %vm55, %v2947, 9e+15
    %v2964 = vsel %vm55, %v2948, 9e+15
    %v2965 = vsel %vm55, %v2949, 9e+15
    %v2966 = vsel %vm55, %v2950, 9e+15
    %v2967 = vsel %vm55, %v2951, 9e+15
    %v2968 = vsel %vm55, %v2936, -9e+15
    %v2969 = vsel %vm55, %v2937, -9e+15
    %v2970 = vsel %vm55, %v2938, -9e+15
    %v2971 = vsel %vm55, %v2939, -9e+15
    %v2972 = vsel %vm55, %v2940, -9e+15
    %v2973 = vsel %vm55, %v2941, -9e+15
    %v2974 = vsel %vm55, %v2942, -9e+15
    %v2975 = vsel %vm55, %v2943, -9e+15
    %v2976 = vsel %vm55, %v2944, -9e+15
    %v2977 = vsel %vm55, %v2945, -9e+15
    %v2978 = vsel %vm55, %v2946, -9e+15
    %v2979 = vsel %vm55, %v2947, -9e+15
    %v2980 = vsel %vm55, %v2948, -9e+15
    %v2981 = vsel %vm55, %v2949, -9e+15
    %v2982 = vsel %vm55, %v2950, -9e+15
    %v2983 = vsel %vm55, %v2951, -9e+15
    %2984 = vmin.xlane.f32.xlu0 %v2952
    %v2985 = vpop.xlane.xlu0 %2984
    %2986 = vmin.xlane.f32.xlu0 %v2953
    %v2987 = vpop.xlane.xlu0 %2986
    %2988 = vmin.xlane.f32.xlu0 %v2954
    %v2989 = vpop.xlane.xlu0 %2988
    %2990 = vmin.xlane.f32.xlu0 %v2955
    %v2991 = vpop.xlane.xlu0 %2990
    %2992 = vmin.xlane.f32.xlu0 %v2956
    %v2993 = vpop.xlane.xlu0 %2992
    %2994 = vmin.xlane.f32.xlu0 %v2957
    %v2995 = vpop.xlane.xlu0 %2994
    %2996 = vmin.xlane.f32.xlu0 %v2958
    %v2997 = vpop.xlane.xlu0 %2996
    %2998 = vmin.xlane.f32.xlu0 %v2959
    %v2999 = vpop.xlane.xlu0 %2998
    %3000 = vmin.xlane.f32.xlu0 %v2960
    %v3001 = vpop.xlane.xlu0 %3000
    %3002 = vmin.xlane.f32.xlu0 %v2961
    %v3003 = vpop.xlane.xlu0 %3002
    %3004 = vmin.xlane.f32.xlu0 %v2962
    %v3005 = vpop.xlane.xlu0 %3004
    %3006 = vmin.xlane.f32.xlu0 %v2963
    %v3007 = vpop.xlane.xlu0 %3006
    %3008 = vmin.xlane.f32.xlu0 %v2964
    %v3009 = vpop.xlane.xlu0 %3008
    %3010 = vmin.xlane.f32.xlu0 %v2965
    %v3011 = vpop.xlane.xlu0 %3010
    %3012 = vmin.xlane.f32.xlu0 %v2966
    %v3013 = vpop.xlane.xlu0 %3012
    %3014 = vmin.xlane.f32.xlu0 %v2967
    %v3015 = vpop.xlane.xlu0 %3014
    %3016 = vmax.xlane.f32.xlu0 %v2968
    %v3017 = vpop.xlane.xlu0 %3016
    %3018 = vmax.xlane.f32.xlu0 %v2969
    %v3019 = vpop.xlane.xlu0 %3018
    %3020 = vmax.xlane.f32.xlu0 %v2970
    %v3021 = vpop.xlane.xlu0 %3020
    %3022 = vmax.xlane.f32.xlu0 %v2971
    %v3023 = vpop.xlane.xlu0 %3022
    %3024 = vmax.xlane.f32.xlu0 %v2972
    %v3025 = vpop.xlane.xlu0 %3024
    %3026 = vmax.xlane.f32.xlu0 %v2973
    %v3027 = vpop.xlane.xlu0 %3026
    %3028 = vmax.xlane.f32.xlu0 %v2974
    %v3029 = vpop.xlane.xlu0 %3028
    %3030 = vmax.xlane.f32.xlu0 %v2975
    %v3031 = vpop.xlane.xlu0 %3030
    %3032 = vmax.xlane.f32.xlu0 %v2976
    %v3033 = vpop.xlane.xlu0 %3032
    %3034 = vmax.xlane.f32.xlu0 %v2977
    %v3035 = vpop.xlane.xlu0 %3034
    %3036 = vmax.xlane.f32.xlu0 %v2978
    %v3037 = vpop.xlane.xlu0 %3036
    %3038 = vmax.xlane.f32.xlu0 %v2979
    %v3039 = vpop.xlane.xlu0 %3038
    %3040 = vmax.xlane.f32.xlu0 %v2980
    %v3041 = vpop.xlane.xlu0 %3040
    %3042 = vmax.xlane.f32.xlu0 %v2981
    %v3043 = vpop.xlane.xlu0 %3042
    %3044 = vmax.xlane.f32.xlu0 %v2982
    %v3045 = vpop.xlane.xlu0 %3044
    %3046 = vmax.xlane.f32.xlu0 %v2983
    %v3047 = vpop.xlane.xlu0 %3046
    %v3048 = vsub.f32 %v3017, %v2985
    %v3049 = vsub.f32 %v3019, %v2987
    %v3050 = vsub.f32 %v3021, %v2989
    %v3051 = vsub.f32 %v3023, %v2991
    %v3052 = vsub.f32 %v3025, %v2993
    %v3053 = vsub.f32 %v3027, %v2995
    %v3054 = vsub.f32 %v3029, %v2997
    %v3055 = vsub.f32 %v3031, %v2999
    %v3056 = vsub.f32 %v3033, %v3001
    %v3057 = vsub.f32 %v3035, %v3003
    %v3058 = vsub.f32 %v3037, %v3005
    %v3059 = vsub.f32 %v3039, %v3007
    %v3060 = vsub.f32 %v3041, %v3009
    %v3061 = vsub.f32 %v3043, %v3011
    %v3062 = vsub.f32 %v3045, %v3013
    %v3063 = vsub.f32 %v3047, %v3015
    %vm3064 = vcmp.eq.f32.partialorder %v3048, 0.0
    %vm3065 = vcmp.eq.f32.partialorder %v3049, 0.0
    %vm3066 = vcmp.eq.f32.partialorder %v3050, 0.0
    %vm3067 = vcmp.eq.f32.partialorder %v3051, 0.0
    %vm3068 = vcmp.eq.f32.partialorder %v3052, 0.0
    %vm3069 = vcmp.eq.f32.partialorder %v3053, 0.0
    %vm3070 = vcmp.eq.f32.partialorder %v3054, 0.0
    %vm3071 = vcmp.eq.f32.partialorder %v3055, 0.0
    %vm3072 = vcmp.eq.f32.partialorder %v3056, 0.0
    %vm3073 = vcmp.eq.f32.partialorder %v3057, 0.0
    %vm3074 = vcmp.eq.f32.partialorder %v3058, 0.0
    %vm3075 = vcmp.eq.f32.partialorder %v3059, 0.0
    %vm3076 = vcmp.eq.f32.partialorder %v3060, 0.0
    %vm3077 = vcmp.eq.f32.partialorder %v3061, 0.0
    %vm3078 = vcmp.eq.f32.partialorder %v3062, 0.0
    %vm3079 = vcmp.eq.f32.partialorder %v3063, 0.0
    %v3080 = vsel %vm3064, 1e-06, %v3048
    %v3081 = vsel %vm3065, 1e-06, %v3049
    %v3082 = vsel %vm3066, 1e-06, %v3050
    %v3083 = vsel %vm3067, 1e-06, %v3051
    %v3084 = vsel %vm3068, 1e-06, %v3052
    %v3085 = vsel %vm3069, 1e-06, %v3053
    %v3086 = vsel %vm3070, 1e-06, %v3054
    %v3087 = vsel %vm3071, 1e-06, %v3055
    %v3088 = vsel %vm3072, 1e-06, %v3056
    %v3089 = vsel %vm3073, 1e-06, %v3057
    %v3090 = vsel %vm3074, 1e-06, %v3058
    %v3091 = vsel %vm3075, 1e-06, %v3059
    %v3092 = vsel %vm3076, 1e-06, %v3060
    %v3093 = vsel %vm3077, 1e-06, %v3061
    %v3094 = vsel %vm3078, 1e-06, %v3062
    %v3095 = vsel %vm3079, 1e-06, %v3063
    %v3096 = vsub.f32 %v2936, %v2985
    %v3097 = vsub.f32 %v2937, %v2987
    %v3098 = vsub.f32 %v2938, %v2989
    %v3099 = vsub.f32 %v2939, %v2991
    %v3100 = vsub.f32 %v2940, %v2993
    %v3101 = vsub.f32 %v2941, %v2995
    %v3102 = vsub.f32 %v2942, %v2997
    %v3103 = vsub.f32 %v2943, %v2999
    %v3104 = vsub.f32 %v2944, %v3001
    %v3105 = vsub.f32 %v2945, %v3003
    %v3106 = vsub.f32 %v2946, %v3005
    %v3107 = vsub.f32 %v2947, %v3007
    %v3108 = vsub.f32 %v2948, %v3009
    %v3109 = vsub.f32 %v2949, %v3011
    %v3110 = vsub.f32 %v2950, %v3013
    %v3111 = vsub.f32 %v2951, %v3015
    %v3112 = vrcp.pop %v3080
    %v3113 = vmul.f32 1.0, %v3112
    %v3114 = vrcp.pop %v3081
    %v3115 = vmul.f32 1.0, %v3114
    %v3116 = vrcp.pop %v3082
    %v3117 = vmul.f32 1.0, %v3116
    %v3118 = vrcp.pop %v3083
    %v3119 = vmul.f32 1.0, %v3118
    %v3120 = vrcp.pop %v3084
    %v3121 = vmul.f32 1.0, %v3120
    %v3122 = vrcp.pop %v3085
    %v3123 = vmul.f32 1.0, %v3122
    %v3124 = vrcp.pop %v3086
    %v3125 = vmul.f32 1.0, %v3124
    %v3126 = vrcp.pop %v3087
    %v3127 = vmul.f32 1.0, %v3126
    %v3128 = vrcp.pop %v3088
    %v3129 = vmul.f32 1.0, %v3128
    %v3130 = vrcp.pop %v3089
    %v3131 = vmul.f32 1.0, %v3130
    %v3132 = vrcp.pop %v3090
    %v3133 = vmul.f32 1.0, %v3132
    %v3134 = vrcp.pop %v3091
    %v3135 = vmul.f32 1.0, %v3134
    %v3136 = vrcp.pop %v3092
    %v3137 = vmul.f32 1.0, %v3136
    %v3138 = vrcp.pop %v3093
    %v3139 = vmul.f32 1.0, %v3138
    %v3140 = vrcp.pop %v3094
    %v3141 = vmul.f32 1.0, %v3140
    %v3142 = vrcp.pop %v3095
    %v3143 = vmul.f32 1.0, %v3142
    %v3144 = vmul.f32 %v3096, %v3113
    %v3145 = vmul.f32 %v3097, %v3115
    %v3146 = vmul.f32 %v3098, %v3117
    %v3147 = vmul.f32 %v3099, %v3119
    %v3148 = vmul.f32 %v3100, %v3121
    %v3149 = vmul.f32 %v3101, %v3123
    %v3150 = vmul.f32 %v3102, %v3125
    %v3151 = vmul.f32 %v3103, %v3127
    %v3152 = vmul.f32 %v3104, %v3129
    %v3153 = vmul.f32 %v3105, %v3131
    %v3154 = vmul.f32 %v3106, %v3133
    %v3155 = vmul.f32 %v3107, %v3135
    %v3156 = vmul.f32 %v3108, %v3137
    %v3157 = vmul.f32 %v3109, %v3139
    %v3158 = vmul.f32 %v3110, %v3141
    %v3159 = vmul.f32 %v3111, %v3143
    %v3160 = vsel %vm55, %v3144, -9e+15
    %v3161 = vsel %vm55, %v3145, -9e+15
    %v3162 = vsel %vm55, %v3146, -9e+15
    %v3163 = vsel %vm55, %v3147, -9e+15
    %v3164 = vsel %vm55, %v3148, -9e+15
    %v3165 = vsel %vm55, %v3149, -9e+15
    %v3166 = vsel %vm55, %v3150, -9e+15
    %v3167 = vsel %vm55, %v3151, -9e+15
    %v3168 = vsel %vm55, %v3152, -9e+15
    %v3169 = vsel %vm55, %v3153, -9e+15
    %v3170 = vsel %vm55, %v3154, -9e+15
    %v3171 = vsel %vm55, %v3155, -9e+15
    %v3172 = vsel %vm55, %v3156, -9e+15
    %v3173 = vsel %vm55, %v3157, -9e+15
    %v3174 = vsel %vm55, %v3158, -9e+15
    %v3175 = vsel %vm55, %v3159, -9e+15
    %v3176 = vmul.f32 %v3160, 1.442695
    %v3177 = vpow.pop %v3176
    %v3178 = vmul.f32 %v3161, 1.442695
    %v3179 = vpow.pop %v3178
    %v3180 = vmul.f32 %v3162, 1.442695
    %v3181 = vpow.pop %v3180
    %v3182 = vmul.f32 %v3163, 1.442695
    %v3183 = vpow.pop %v3182
    %v3184 = vmul.f32 %v3164, 1.442695
    %v3185 = vpow.pop %v3184
    %v3186 = vmul.f32 %v3165, 1.442695
    %v3187 = vpow.pop %v3186
    %v3188 = vmul.f32 %v3166, 1.442695
    %v3189 = vpow.pop %v3188
    %v3190 = vmul.f32 %v3167, 1.442695
    %v3191 = vpow.pop %v3190
    %v3192 = vmul.f32 %v3168, 1.442695
    %v3193 = vpow.pop %v3192
    %v3194 = vmul.f32 %v3169, 1.442695
    %v3195 = vpow.pop %v3194
    %v3196 = vmul.f32 %v3170, 1.442695
    %v3197 = vpow.pop %v3196
    %v3198 = vmul.f32 %v3171, 1.442695
    %v3199 = vpow.pop %v3198
    %v3200 = vmul.f32 %v3172, 1.442695
    %v3201 = vpow.pop %v3200
    %v3202 = vmul.f32 %v3173, 1.442695
    %v3203 = vpow.pop %v3202
    %v3204 = vmul.f32 %v3174, 1.442695
    %v3205 = vpow.pop %v3204
    %v3206 = vmul.f32 %v3175, 1.442695
    %v3207 = vpow.pop %v3206
    %3208 = vadd.xlane.f32.xlu0 %v3177
    %v3209 = vpop.xlane.xlu0 %3208
    %3210 = vadd.xlane.f32.xlu0 %v3179
    %v3211 = vpop.xlane.xlu0 %3210
    %3212 = vadd.xlane.f32.xlu0 %v3181
    %v3213 = vpop.xlane.xlu0 %3212
    %3214 = vadd.xlane.f32.xlu0 %v3183
    %v3215 = vpop.xlane.xlu0 %3214
    %3216 = vadd.xlane.f32.xlu0 %v3185
    %v3217 = vpop.xlane.xlu0 %3216
    %3218 = vadd.xlane.f32.xlu0 %v3187
    %v3219 = vpop.xlane.xlu0 %3218
    %3220 = vadd.xlane.f32.xlu0 %v3189
    %v3221 = vpop.xlane.xlu0 %3220
    %3222 = vadd.xlane.f32.xlu0 %v3191
    %v3223 = vpop.xlane.xlu0 %3222
    %3224 = vadd.xlane.f32.xlu0 %v3193
    %v3225 = vpop.xlane.xlu0 %3224
    %3226 = vadd.xlane.f32.xlu0 %v3195
    %v3227 = vpop.xlane.xlu0 %3226
    %3228 = vadd.xlane.f32.xlu0 %v3197
    %v3229 = vpop.xlane.xlu0 %3228
    %3230 = vadd.xlane.f32.xlu0 %v3199
    %v3231 = vpop.xlane.xlu0 %3230
    %3232 = vadd.xlane.f32.xlu0 %v3201
    %v3233 = vpop.xlane.xlu0 %3232
    %3234 = vadd.xlane.f32.xlu0 %v3203
    %v3235 = vpop.xlane.xlu0 %3234
    %3236 = vadd.xlane.f32.xlu0 %v3205
    %v3237 = vpop.xlane.xlu0 %3236
    %3238 = vadd.xlane.f32.xlu0 %v3207
    %v3239 = vpop.xlane.xlu0 %3238
    %v3240 = vrcp.pop %v3209
    %v3241 = vrcp.pop %v3211
    %v3242 = vrcp.pop %v3213
    %v3243 = vrcp.pop %v3215
    %v3244 = vrcp.pop %v3217
    %v3245 = vrcp.pop %v3219
    %v3246 = vrcp.pop %v3221
    %v3247 = vrcp.pop %v3223
    %v3248 = vrcp.pop %v3225
    %v3249 = vrcp.pop %v3227
    %v3250 = vrcp.pop %v3229
    %v3251 = vrcp.pop %v3231
    %v3252 = vrcp.pop %v3233
    %v3253 = vrcp.pop %v3235
    %v3254 = vrcp.pop %v3237
    %v3255 = vrcp.pop %v3239
    %v3256 = vmul.f32 %v3177, %v3240
    %v3257 = vmul.f32 %v3179, %v3241
    %v3258 = vmul.f32 %v3181, %v3242
    %v3259 = vmul.f32 %v3183, %v3243
    %v3260 = vmul.f32 %v3185, %v3244
    %v3261 = vmul.f32 %v3187, %v3245
    %v3262 = vmul.f32 %v3189, %v3246
    %v3263 = vmul.f32 %v3191, %v3247
    %v3264 = vmul.f32 %v3193, %v3248
    %v3265 = vmul.f32 %v3195, %v3249
    %v3266 = vmul.f32 %v3197, %v3250
    %v3267 = vmul.f32 %v3199, %v3251
    %v3268 = vmul.f32 %v3201, %v3252
    %v3269 = vmul.f32 %v3203, %v3253
    %v3270 = vmul.f32 %v3205, %v3254
    %v3271 = vmul.f32 %v3207, %v3255
    %s3273 = sor.u32 256, 56
    %3274 = vbcast.lane.b32.xlu0 %v379, %s3273
    %v3275 = vpop.permute.xlu0 %3274
    %s3277 = sor.u32 256, 56
    %3278 = vbcast.lane.b32.xlu0 %v386, %s3277
    %v3279 = vpop.permute.xlu0 %3278
    %s3281 = sor.u32 256, 56
    %3282 = vbcast.lane.b32.xlu0 %v393, %s3281
    %v3283 = vpop.permute.xlu0 %3282
    %s3285 = sor.u32 256, 56
    %3286 = vbcast.lane.b32.xlu0 %v400, %s3285
    %v3287 = vpop.permute.xlu0 %3286
    %s3289 = sor.u32 256, 56
    %3290 = vbcast.lane.b32.xlu0 %v407, %s3289
    %v3291 = vpop.permute.xlu0 %3290
    %s3293 = sor.u32 256, 56
    %3294 = vbcast.lane.b32.xlu0 %v414, %s3293
    %v3295 = vpop.permute.xlu0 %3294
    %s3297 = sor.u32 256, 56
    %3298 = vbcast.lane.b32.xlu0 %v421, %s3297
    %v3299 = vpop.permute.xlu0 %3298
    %s3301 = sor.u32 256, 56
    %3302 = vbcast.lane.b32.xlu0 %v428, %s3301
    %v3303 = vpop.permute.xlu0 %3302
    %s3305 = sor.u32 256, 56
    %3306 = vbcast.lane.b32.xlu0 %v435, %s3305
    %v3307 = vpop.permute.xlu0 %3306
    %s3309 = sor.u32 256, 56
    %3310 = vbcast.lane.b32.xlu0 %v442, %s3309
    %v3311 = vpop.permute.xlu0 %3310
    %s3313 = sor.u32 256, 56
    %3314 = vbcast.lane.b32.xlu0 %v449, %s3313
    %v3315 = vpop.permute.xlu0 %3314
    %s3317 = sor.u32 256, 56
    %3318 = vbcast.lane.b32.xlu0 %v456, %s3317
    %v3319 = vpop.permute.xlu0 %3318
    %s3321 = sor.u32 256, 56
    %3322 = vbcast.lane.b32.xlu0 %v463, %s3321
    %v3323 = vpop.permute.xlu0 %3322
    %s3325 = sor.u32 256, 56
    %3326 = vbcast.lane.b32.xlu0 %v470, %s3325
    %v3327 = vpop.permute.xlu0 %3326
    %s3329 = sor.u32 256, 56
    %3330 = vbcast.lane.b32.xlu0 %v477, %s3329
    %v3331 = vpop.permute.xlu0 %3330
    %s3333 = sor.u32 256, 56
    %3334 = vbcast.lane.b32.xlu0 %v484, %s3333
    %v3335 = vpop.permute.xlu0 %3334
    %v3336 = vmul.f32 %v3275, %v3256
    %v3337 = vmul.f32 %v3279, %v3257
    %v3338 = vmul.f32 %v3283, %v3258
    %v3339 = vmul.f32 %v3287, %v3259
    %v3340 = vmul.f32 %v3291, %v3260
    %v3341 = vmul.f32 %v3295, %v3261
    %v3342 = vmul.f32 %v3299, %v3262
    %v3343 = vmul.f32 %v3303, %v3263
    %v3344 = vmul.f32 %v3307, %v3264
    %v3345 = vmul.f32 %v3311, %v3265
    %v3346 = vmul.f32 %v3315, %v3266
    %v3347 = vmul.f32 %v3319, %v3267
    %v3348 = vmul.f32 %v3323, %v3268
    %v3349 = vmul.f32 %v3327, %v3269
    %v3350 = vmul.f32 %v3331, %v3270
    %v3351 = vmul.f32 %v3335, %v3271
    %v3352 = vrot.slane %v3336, 4
    %v3353 = vadd.f32 %v3336, %v3352
    %v3354 = vrot.slane %v3353, 2
    %v3355 = vadd.f32 %v3353, %v3354
    %v3356 = vrot.slane %v3355, 1
    %v3357 = vadd.f32 %v3355, %v3356
    %v3358 = vrot.slane %v3337, 4
    %v3359 = vadd.f32 %v3337, %v3358
    %v3360 = vrot.slane %v3359, 2
    %v3361 = vadd.f32 %v3359, %v3360
    %v3362 = vrot.slane %v3361, 1
    %v3363 = vadd.f32 %v3361, %v3362
    %v3364 = vrot.slane %v3338, 4
    %v3365 = vadd.f32 %v3338, %v3364
    %v3366 = vrot.slane %v3365, 2
    %v3367 = vadd.f32 %v3365, %v3366
    %v3368 = vrot.slane %v3367, 1
    %v3369 = vadd.f32 %v3367, %v3368
    %v3370 = vrot.slane %v3339, 4
    %v3371 = vadd.f32 %v3339, %v3370
    %v3372 = vrot.slane %v3371, 2
    %v3373 = vadd.f32 %v3371, %v3372
    %v3374 = vrot.slane %v3373, 1
    %v3375 = vadd.f32 %v3373, %v3374
    %v3376 = vrot.slane %v3340, 4
    %v3377 = vadd.f32 %v3340, %v3376
    %v3378 = vrot.slane %v3377, 2
    %v3379 = vadd.f32 %v3377, %v3378
    %v3380 = vrot.slane %v3379, 1
    %v3381 = vadd.f32 %v3379, %v3380
    %v3382 = vrot.slane %v3341, 4
    %v3383 = vadd.f32 %v3341, %v3382
    %v3384 = vrot.slane %v3383, 2
    %v3385 = vadd.f32 %v3383, %v3384
    %v3386 = vrot.slane %v3385, 1
    %v3387 = vadd.f32 %v3385, %v3386
    %v3388 = vrot.slane %v3342, 4
    %v3389 = vadd.f32 %v3342, %v3388
    %v3390 = vrot.slane %v3389, 2
    %v3391 = vadd.f32 %v3389, %v3390
    %v3392 = vrot.slane %v3391, 1
    %v3393 = vadd.f32 %v3391, %v3392
    %v3394 = vrot.slane %v3343, 4
    %v3395 = vadd.f32 %v3343, %v3394
    %v3396 = vrot.slane %v3395, 2
    %v3397 = vadd.f32 %v3395, %v3396
    %v3398 = vrot.slane %v3397, 1
    %v3399 = vadd.f32 %v3397, %v3398
    %v3400 = vrot.slane %v3344, 4
    %v3401 = vadd.f32 %v3344, %v3400
    %v3402 = vrot.slane %v3401, 2
    %v3403 = vadd.f32 %v3401, %v3402
    %v3404 = vrot.slane %v3403, 1
    %v3405 = vadd.f32 %v3403, %v3404
    %v3406 = vrot.slane %v3345, 4
    %v3407 = vadd.f32 %v3345, %v3406
    %v3408 = vrot.slane %v3407, 2
    %v3409 = vadd.f32 %v3407, %v3408
    %v3410 = vrot.slane %v3409, 1
    %v3411 = vadd.f32 %v3409, %v3410
    %v3412 = vrot.slane %v3346, 4
    %v3413 = vadd.f32 %v3346, %v3412
    %v3414 = vrot.slane %v3413, 2
    %v3415 = vadd.f32 %v3413, %v3414
    %v3416 = vrot.slane %v3415, 1
    %v3417 = vadd.f32 %v3415, %v3416
    %v3418 = vrot.slane %v3347, 4
    %v3419 = vadd.f32 %v3347, %v3418
    %v3420 = vrot.slane %v3419, 2
    %v3421 = vadd.f32 %v3419, %v3420
    %v3422 = vrot.slane %v3421, 1
    %v3423 = vadd.f32 %v3421, %v3422
    %v3424 = vrot.slane %v3348, 4
    %v3425 = vadd.f32 %v3348, %v3424
    %v3426 = vrot.slane %v3425, 2
    %v3427 = vadd.f32 %v3425, %v3426
    %v3428 = vrot.slane %v3427, 1
    %v3429 = vadd.f32 %v3427, %v3428
    %v3430 = vrot.slane %v3349, 4
    %v3431 = vadd.f32 %v3349, %v3430
    %v3432 = vrot.slane %v3431, 2
    %v3433 = vadd.f32 %v3431, %v3432
    %v3434 = vrot.slane %v3433, 1
    %v3435 = vadd.f32 %v3433, %v3434
    %v3436 = vrot.slane %v3350, 4
    %v3437 = vadd.f32 %v3350, %v3436
    %v3438 = vrot.slane %v3437, 2
    %v3439 = vadd.f32 %v3437, %v3438
    %v3440 = vrot.slane %v3439, 1
    %v3441 = vadd.f32 %v3439, %v3440
    %v3442 = vrot.slane %v3351, 4
    %v3443 = vadd.f32 %v3351, %v3442
    %v3444 = vrot.slane %v3443, 2
    %v3445 = vadd.f32 %v3443, %v3444
    %v3446 = vrot.slane %v3445, 1
    %v3447 = vadd.f32 %v3445, %v3446
    %s3449 = sor.u32 256, 64
    %3450 = vbcast.lane.b32.xlu0 %v379, %s3449
    %v3451 = vpop.permute.xlu0 %3450
    %s3453 = sor.u32 256, 64
    %3454 = vbcast.lane.b32.xlu0 %v386, %s3453
    %v3455 = vpop.permute.xlu0 %3454
    %s3457 = sor.u32 256, 64
    %3458 = vbcast.lane.b32.xlu0 %v393, %s3457
    %v3459 = vpop.permute.xlu0 %3458
    %s3461 = sor.u32 256, 64
    %3462 = vbcast.lane.b32.xlu0 %v400, %s3461
    %v3463 = vpop.permute.xlu0 %3462
    %s3465 = sor.u32 256, 64
    %3466 = vbcast.lane.b32.xlu0 %v407, %s3465
    %v3467 = vpop.permute.xlu0 %3466
    %s3469 = sor.u32 256, 64
    %3470 = vbcast.lane.b32.xlu0 %v414, %s3469
    %v3471 = vpop.permute.xlu0 %3470
    %s3473 = sor.u32 256, 64
    %3474 = vbcast.lane.b32.xlu0 %v421, %s3473
    %v3475 = vpop.permute.xlu0 %3474
    %s3477 = sor.u32 256, 64
    %3478 = vbcast.lane.b32.xlu0 %v428, %s3477
    %v3479 = vpop.permute.xlu0 %3478
    %s3481 = sor.u32 256, 64
    %3482 = vbcast.lane.b32.xlu0 %v435, %s3481
    %v3483 = vpop.permute.xlu0 %3482
    %s3485 = sor.u32 256, 64
    %3486 = vbcast.lane.b32.xlu0 %v442, %s3485
    %v3487 = vpop.permute.xlu0 %3486
    %s3489 = sor.u32 256, 64
    %3490 = vbcast.lane.b32.xlu0 %v449, %s3489
    %v3491 = vpop.permute.xlu0 %3490
    %s3493 = sor.u32 256, 64
    %3494 = vbcast.lane.b32.xlu0 %v456, %s3493
    %v3495 = vpop.permute.xlu0 %3494
    %s3497 = sor.u32 256, 64
    %3498 = vbcast.lane.b32.xlu0 %v463, %s3497
    %v3499 = vpop.permute.xlu0 %3498
    %s3501 = sor.u32 256, 64
    %3502 = vbcast.lane.b32.xlu0 %v470, %s3501
    %v3503 = vpop.permute.xlu0 %3502
    %s3505 = sor.u32 256, 64
    %3506 = vbcast.lane.b32.xlu0 %v477, %s3505
    %v3507 = vpop.permute.xlu0 %3506
    %s3509 = sor.u32 256, 64
    %3510 = vbcast.lane.b32.xlu0 %v484, %s3509
    %v3511 = vpop.permute.xlu0 %3510
    %v3514 = vcombine.high %v366, %v366
    %v3516 = vunpack.c.l.s4 1966171168
    %v3517 = vunpack.c.0.s8 %v3516
    %v3518 = vlaneseq
    %v3519 = vshrl.u32 %v3518, 7
    %v3520 = vsub.s32 %v3517, %v3519
    %v3521 = vrot.slane %v366, %v3520
    %v3523 = vunpack.c.l.s4 1966171168
    %v3524 = vunpack.c.0.s8 %v3523
    %v3525 = vlaneseq
    %v3526 = vshrl.u32 %v3525, 7
    %v3527 = vsub.s32 %v3524, %v3526
    %v3528 = vrot.slane %v3514, %v3527
    %v3529 = vcombine.high %v3521, %v3521
    %v3530 = vcombine.high %v3528, %v3528
    %v3532 = vunpack.c.l.s4 1966171168
    %v3533 = vunpack.c.0.s8 %v3532
    %v3534 = vlaneseq
    %v3535 = vshrl.u32 %v3534, 7
    %v3536 = vsub.s32 %v3533, %v3535
    %v3537 = vrot.slane %v3521, %v3536
    %v3539 = vunpack.c.l.s4 1966171168
    %v3540 = vunpack.c.0.s8 %v3539
    %v3541 = vlaneseq
    %v3542 = vshrl.u32 %v3541, 7
    %v3543 = vsub.s32 %v3540, %v3542
    %v3544 = vrot.slane %v3528, %v3543
    %v3546 = vunpack.c.l.s4 1966171168
    %v3547 = vunpack.c.0.s8 %v3546
    %v3548 = vlaneseq
    %v3549 = vshrl.u32 %v3548, 7
    %v3550 = vsub.s32 %v3547, %v3549
    %v3551 = vrot.slane %v3529, %v3550
    %v3553 = vunpack.c.l.s4 1966171168
    %v3554 = vunpack.c.0.s8 %v3553
    %v3555 = vlaneseq
    %v3556 = vshrl.u32 %v3555, 7
    %v3557 = vsub.s32 %v3554, %v3556
    %v3558 = vrot.slane %v3530, %v3557
    %v3559 = vcombine.high %v3537, %v3537
    %v3560 = vcombine.high %v3544, %v3544
    %v3561 = vcombine.high %v3551, %v3551
    %v3562 = vcombine.high %v3558, %v3558
    %v3563 = vcombine.high %v372, %v372
    %v3565 = vunpack.c.l.s4 1966171168
    %v3566 = vunpack.c.0.s8 %v3565
    %v3567 = vlaneseq
    %v3568 = vshrl.u32 %v3567, 7
    %v3569 = vsub.s32 %v3566, %v3568
    %v3570 = vrot.slane %v372, %v3569
    %v3572 = vunpack.c.l.s4 1966171168
    %v3573 = vunpack.c.0.s8 %v3572
    %v3574 = vlaneseq
    %v3575 = vshrl.u32 %v3574, 7
    %v3576 = vsub.s32 %v3573, %v3575
    %v3577 = vrot.slane %v3563, %v3576
    %v3578 = vcombine.high %v3570, %v3570
    %v3579 = vcombine.high %v3577, %v3577
    %v3581 = vunpack.c.l.s4 1966171168
    %v3582 = vunpack.c.0.s8 %v3581
    %v3583 = vlaneseq
    %v3584 = vshrl.u32 %v3583, 7
    %v3585 = vsub.s32 %v3582, %v3584
    %v3586 = vrot.slane %v3570, %v3585
    %v3588 = vunpack.c.l.s4 1966171168
    %v3589 = vunpack.c.0.s8 %v3588
    %v3590 = vlaneseq
    %v3591 = vshrl.u32 %v3590, 7
    %v3592 = vsub.s32 %v3589, %v3591
    %v3593 = vrot.slane %v3577, %v3592
    %v3595 = vunpack.c.l.s4 1966171168
    %v3596 = vunpack.c.0.s8 %v3595
    %v3597 = vlaneseq
    %v3598 = vshrl.u32 %v3597, 7
    %v3599 = vsub.s32 %v3596, %v3598
    %v3600 = vrot.slane %v3578, %v3599
    %v3602 = vunpack.c.l.s4 1966171168
    %v3603 = vunpack.c.0.s8 %v3602
    %v3604 = vlaneseq
    %v3605 = vshrl.u32 %v3604, 7
    %v3606 = vsub.s32 %v3603, %v3605
    %v3607 = vrot.slane %v3579, %v3606
    %v3608 = vcombine.high %v3586, %v3586
    %v3609 = vcombine.high %v3593, %v3593
    %v3610 = vcombine.high %v3600, %v3600
    %v3611 = vcombine.high %v3607, %v3607
    %v3612 = vlaneseq
    %v3613 = vshrl.u32 %v3612, 7
    %v3614 = vsub.s32 0, %v3613
    %v3615 = vrot.slane %v3537, %v3614
    %v3616 = vlaneseq
    %v3617 = vshrl.u32 %v3616, 7
    %v3618 = vsub.s32 0, %v3617
    %v3619 = vrot.slane %v3551, %v3618
    %v3620 = vlaneseq
    %v3621 = vshrl.u32 %v3620, 7
    %v3622 = vsub.s32 0, %v3621
    %v3623 = vrot.slane %v3559, %v3622
    %v3624 = vlaneseq
    %v3625 = vshrl.u32 %v3624, 7
    %v3626 = vsub.s32 0, %v3625
    %v3627 = vrot.slane %v3561, %v3626
    %v3628 = vlaneseq
    %v3629 = vshrl.u32 %v3628, 7
    %v3630 = vsub.s32 0, %v3629
    %v3631 = vrot.slane %v3544, %v3630
    %v3632 = vlaneseq
    %v3633 = vshrl.u32 %v3632, 7
    %v3634 = vsub.s32 0, %v3633
    %v3635 = vrot.slane %v3558, %v3634
    %v3636 = vlaneseq
    %v3637 = vshrl.u32 %v3636, 7
    %v3638 = vsub.s32 0, %v3637
    %v3639 = vrot.slane %v3560, %v3638
    %v3640 = vlaneseq
    %v3641 = vshrl.u32 %v3640, 7
    %v3642 = vsub.s32 0, %v3641
    %v3643 = vrot.slane %v3562, %v3642
    %v3644 = vlaneseq
    %v3645 = vshrl.u32 %v3644, 7
    %v3646 = vsub.s32 0, %v3645
    %v3647 = vrot.slane %v3586, %v3646
    %v3648 = vlaneseq
    %v3649 = vshrl.u32 %v3648, 7
    %v3650 = vsub.s32 0, %v3649
    %v3651 = vrot.slane %v3600, %v3650
    %v3652 = vlaneseq
    %v3653 = vshrl.u32 %v3652, 7
    %v3654 = vsub.s32 0, %v3653
    %v3655 = vrot.slane %v3608, %v3654
    %v3656 = vlaneseq
    %v3657 = vshrl.u32 %v3656, 7
    %v3658 = vsub.s32 0, %v3657
    %v3659 = vrot.slane %v3610, %v3658
    %v3660 = vlaneseq
    %v3661 = vshrl.u32 %v3660, 7
    %v3662 = vsub.s32 0, %v3661
    %v3663 = vrot.slane %v3593, %v3662
    %v3664 = vlaneseq
    %v3665 = vshrl.u32 %v3664, 7
    %v3666 = vsub.s32 0, %v3665
    %v3667 = vrot.slane %v3607, %v3666
    %v3668 = vlaneseq
    %v3669 = vshrl.u32 %v3668, 7
    %v3670 = vsub.s32 0, %v3669
    %v3671 = vrot.slane %v3609, %v3670
    %v3672 = vlaneseq
    %v3673 = vshrl.u32 %v3672, 7
    %v3674 = vsub.s32 0, %v3673
    %v3675 = vrot.slane %v3611, %v3674
    %v3692 = vmul.f32 %v3451, %v3615
    %v3693 = vmul.f32 %v3455, %v3619
    %v3694 = vmul.f32 %v3459, %v3623
    %v3695 = vmul.f32 %v3463, %v3627
    %v3696 = vmul.f32 %v3467, %v3631
    %v3697 = vmul.f32 %v3471, %v3635
    %v3698 = vmul.f32 %v3475, %v3639
    %v3699 = vmul.f32 %v3479, %v3643
    %v3700 = vmul.f32 %v3483, %v3647
    %v3701 = vmul.f32 %v3487, %v3651
    %v3702 = vmul.f32 %v3491, %v3655
    %v3703 = vmul.f32 %v3495, %v3659
    %v3704 = vmul.f32 %v3499, %v3663
    %v3705 = vmul.f32 %v3503, %v3667
    %v3706 = vmul.f32 %v3507, %v3671
    %v3707 = vmul.f32 %v3511, %v3675
    %v3708 = vsel %vm55, %v3692, 9e+15
    %v3709 = vsel %vm55, %v3693, 9e+15
    %v3710 = vsel %vm55, %v3694, 9e+15
    %v3711 = vsel %vm55, %v3695, 9e+15
    %v3712 = vsel %vm55, %v3696, 9e+15
    %v3713 = vsel %vm55, %v3697, 9e+15
    %v3714 = vsel %vm55, %v3698, 9e+15
    %v3715 = vsel %vm55, %v3699, 9e+15
    %v3716 = vsel %vm55, %v3700, 9e+15
    %v3717 = vsel %vm55, %v3701, 9e+15
    %v3718 = vsel %vm55, %v3702, 9e+15
    %v3719 = vsel %vm55, %v3703, 9e+15
    %v3720 = vsel %vm55, %v3704, 9e+15
    %v3721 = vsel %vm55, %v3705, 9e+15
    %v3722 = vsel %vm55, %v3706, 9e+15
    %v3723 = vsel %vm55, %v3707, 9e+15
    %v3724 = vsel %vm55, %v3692, -9e+15
    %v3725 = vsel %vm55, %v3693, -9e+15
    %v3726 = vsel %vm55, %v3694, -9e+15
    %v3727 = vsel %vm55, %v3695, -9e+15
    %v3728 = vsel %vm55, %v3696, -9e+15
    %v3729 = vsel %vm55, %v3697, -9e+15
    %v3730 = vsel %vm55, %v3698, -9e+15
    %v3731 = vsel %vm55, %v3699, -9e+15
    %v3732 = vsel %vm55, %v3700, -9e+15
    %v3733 = vsel %vm55, %v3701, -9e+15
    %v3734 = vsel %vm55, %v3702, -9e+15
    %v3735 = vsel %vm55, %v3703, -9e+15
    %v3736 = vsel %vm55, %v3704, -9e+15
    %v3737 = vsel %vm55, %v3705, -9e+15
    %v3738 = vsel %vm55, %v3706, -9e+15
    %v3739 = vsel %vm55, %v3707, -9e+15
    %3740 = vmin.xlane.f32.xlu0 %v3708
    %v3741 = vpop.xlane.xlu0 %3740
    %3742 = vmin.xlane.f32.xlu0 %v3709
    %v3743 = vpop.xlane.xlu0 %3742
    %3744 = vmin.xlane.f32.xlu0 %v3710
    %v3745 = vpop.xlane.xlu0 %3744
    %3746 = vmin.xlane.f32.xlu0 %v3711
    %v3747 = vpop.xlane.xlu0 %3746
    %3748 = vmin.xlane.f32.xlu0 %v3712
    %v3749 = vpop.xlane.xlu0 %3748
    %3750 = vmin.xlane.f32.xlu0 %v3713
    %v3751 = vpop.xlane.xlu0 %3750
    %3752 = vmin.xlane.f32.xlu0 %v3714
    %v3753 = vpop.xlane.xlu0 %3752
    %3754 = vmin.xlane.f32.xlu0 %v3715
    %v3755 = vpop.xlane.xlu0 %3754
    %3756 = vmin.xlane.f32.xlu0 %v3716
    %v3757 = vpop.xlane.xlu0 %3756
    %3758 = vmin.xlane.f32.xlu0 %v3717
    %v3759 = vpop.xlane.xlu0 %3758
    %3760 = vmin.xlane.f32.xlu0 %v3718
    %v3761 = vpop.xlane.xlu0 %3760
    %3762 = vmin.xlane.f32.xlu0 %v3719
    %v3763 = vpop.xlane.xlu0 %3762
    %3764 = vmin.xlane.f32.xlu0 %v3720
    %v3765 = vpop.xlane.xlu0 %3764
    %3766 = vmin.xlane.f32.xlu0 %v3721
    %v3767 = vpop.xlane.xlu0 %3766
    %3768 = vmin.xlane.f32.xlu0 %v3722
    %v3769 = vpop.xlane.xlu0 %3768
    %3770 = vmin.xlane.f32.xlu0 %v3723
    %v3771 = vpop.xlane.xlu0 %3770
    %3772 = vmax.xlane.f32.xlu0 %v3724
    %v3773 = vpop.xlane.xlu0 %3772
    %3774 = vmax.xlane.f32.xlu0 %v3725
    %v3775 = vpop.xlane.xlu0 %3774
    %3776 = vmax.xlane.f32.xlu0 %v3726
    %v3777 = vpop.xlane.xlu0 %3776
    %3778 = vmax.xlane.f32.xlu0 %v3727
    %v3779 = vpop.xlane.xlu0 %3778
    %3780 = vmax.xlane.f32.xlu0 %v3728
    %v3781 = vpop.xlane.xlu0 %3780
    %3782 = vmax.xlane.f32.xlu0 %v3729
    %v3783 = vpop.xlane.xlu0 %3782
    %3784 = vmax.xlane.f32.xlu0 %v3730
    %v3785 = vpop.xlane.xlu0 %3784
    %3786 = vmax.xlane.f32.xlu0 %v3731
    %v3787 = vpop.xlane.xlu0 %3786
    %3788 = vmax.xlane.f32.xlu0 %v3732
    %v3789 = vpop.xlane.xlu0 %3788
    %3790 = vmax.xlane.f32.xlu0 %v3733
    %v3791 = vpop.xlane.xlu0 %3790
    %3792 = vmax.xlane.f32.xlu0 %v3734
    %v3793 = vpop.xlane.xlu0 %3792
    %3794 = vmax.xlane.f32.xlu0 %v3735
    %v3795 = vpop.xlane.xlu0 %3794
    %3796 = vmax.xlane.f32.xlu0 %v3736
    %v3797 = vpop.xlane.xlu0 %3796
    %3798 = vmax.xlane.f32.xlu0 %v3737
    %v3799 = vpop.xlane.xlu0 %3798
    %3800 = vmax.xlane.f32.xlu0 %v3738
    %v3801 = vpop.xlane.xlu0 %3800
    %3802 = vmax.xlane.f32.xlu0 %v3739
    %v3803 = vpop.xlane.xlu0 %3802
    %v3804 = vsub.f32 %v3773, %v3741
    %v3805 = vsub.f32 %v3775, %v3743
    %v3806 = vsub.f32 %v3777, %v3745
    %v3807 = vsub.f32 %v3779, %v3747
    %v3808 = vsub.f32 %v3781, %v3749
    %v3809 = vsub.f32 %v3783, %v3751
    %v3810 = vsub.f32 %v3785, %v3753
    %v3811 = vsub.f32 %v3787, %v3755
    %v3812 = vsub.f32 %v3789, %v3757
    %v3813 = vsub.f32 %v3791, %v3759
    %v3814 = vsub.f32 %v3793, %v3761
    %v3815 = vsub.f32 %v3795, %v3763
    %v3816 = vsub.f32 %v3797, %v3765
    %v3817 = vsub.f32 %v3799, %v3767
    %v3818 = vsub.f32 %v3801, %v3769
    %v3819 = vsub.f32 %v3803, %v3771
    %vm3820 = vcmp.eq.f32.partialorder %v3804, 0.0
    %vm3821 = vcmp.eq.f32.partialorder %v3805, 0.0
    %vm3822 = vcmp.eq.f32.partialorder %v3806, 0.0
    %vm3823 = vcmp.eq.f32.partialorder %v3807, 0.0
    %vm3824 = vcmp.eq.f32.partialorder %v3808, 0.0
    %vm3825 = vcmp.eq.f32.partialorder %v3809, 0.0
    %vm3826 = vcmp.eq.f32.partialorder %v3810, 0.0
    %vm3827 = vcmp.eq.f32.partialorder %v3811, 0.0
    %vm3828 = vcmp.eq.f32.partialorder %v3812, 0.0
    %vm3829 = vcmp.eq.f32.partialorder %v3813, 0.0
    %vm3830 = vcmp.eq.f32.partialorder %v3814, 0.0
    %vm3831 = vcmp.eq.f32.partialorder %v3815, 0.0
    %vm3832 = vcmp.eq.f32.partialorder %v3816, 0.0
    %vm3833 = vcmp.eq.f32.partialorder %v3817, 0.0
    %vm3834 = vcmp.eq.f32.partialorder %v3818, 0.0
    %vm3835 = vcmp.eq.f32.partialorder %v3819, 0.0
    %v3836 = vsel %vm3820, 1e-06, %v3804
    %v3837 = vsel %vm3821, 1e-06, %v3805
    %v3838 = vsel %vm3822, 1e-06, %v3806
    %v3839 = vsel %vm3823, 1e-06, %v3807
    %v3840 = vsel %vm3824, 1e-06, %v3808
    %v3841 = vsel %vm3825, 1e-06, %v3809
    %v3842 = vsel %vm3826, 1e-06, %v3810
    %v3843 = vsel %vm3827, 1e-06, %v3811
    %v3844 = vsel %vm3828, 1e-06, %v3812
    %v3845 = vsel %vm3829, 1e-06, %v3813
    %v3846 = vsel %vm3830, 1e-06, %v3814
    %v3847 = vsel %vm3831, 1e-06, %v3815
    %v3848 = vsel %vm3832, 1e-06, %v3816
    %v3849 = vsel %vm3833, 1e-06, %v3817
    %v3850 = vsel %vm3834, 1e-06, %v3818
    %v3851 = vsel %vm3835, 1e-06, %v3819
    %v3852 = vsub.f32 %v3692, %v3741
    %v3853 = vsub.f32 %v3693, %v3743
    %v3854 = vsub.f32 %v3694, %v3745
    %v3855 = vsub.f32 %v3695, %v3747
    %v3856 = vsub.f32 %v3696, %v3749
    %v3857 = vsub.f32 %v3697, %v3751
    %v3858 = vsub.f32 %v3698, %v3753
    %v3859 = vsub.f32 %v3699, %v3755
    %v3860 = vsub.f32 %v3700, %v3757
    %v3861 = vsub.f32 %v3701, %v3759
    %v3862 = vsub.f32 %v3702, %v3761
    %v3863 = vsub.f32 %v3703, %v3763
    %v3864 = vsub.f32 %v3704, %v3765
    %v3865 = vsub.f32 %v3705, %v3767
    %v3866 = vsub.f32 %v3706, %v3769
    %v3867 = vsub.f32 %v3707, %v3771
    %v3868 = vrcp.pop %v3836
    %v3869 = vmul.f32 1.0, %v3868
    %v3870 = vrcp.pop %v3837
    %v3871 = vmul.f32 1.0, %v3870
    %v3872 = vrcp.pop %v3838
    %v3873 = vmul.f32 1.0, %v3872
    %v3874 = vrcp.pop %v3839
    %v3875 = vmul.f32 1.0, %v3874
    %v3876 = vrcp.pop %v3840
    %v3877 = vmul.f32 1.0, %v3876
    %v3878 = vrcp.pop %v3841
    %v3879 = vmul.f32 1.0, %v3878
    %v3880 = vrcp.pop %v3842
    %v3881 = vmul.f32 1.0, %v3880
    %v3882 = vrcp.pop %v3843
    %v3883 = vmul.f32 1.0, %v3882
    %v3884 = vrcp.pop %v3844
    %v3885 = vmul.f32 1.0, %v3884
    %v3886 = vrcp.pop %v3845
    %v3887 = vmul.f32 1.0, %v3886
    %v3888 = vrcp.pop %v3846
    %v3889 = vmul.f32 1.0, %v3888
    %v3890 = vrcp.pop %v3847
    %v3891 = vmul.f32 1.0, %v3890
    %v3892 = vrcp.pop %v3848
    %v3893 = vmul.f32 1.0, %v3892
    %v3894 = vrcp.pop %v3849
    %v3895 = vmul.f32 1.0, %v3894
    %v3896 = vrcp.pop %v3850
    %v3897 = vmul.f32 1.0, %v3896
    %v3898 = vrcp.pop %v3851
    %v3899 = vmul.f32 1.0, %v3898
    %v3900 = vmul.f32 %v3852, %v3869
    %v3901 = vmul.f32 %v3853, %v3871
    %v3902 = vmul.f32 %v3854, %v3873
    %v3903 = vmul.f32 %v3855, %v3875
    %v3904 = vmul.f32 %v3856, %v3877
    %v3905 = vmul.f32 %v3857, %v3879
    %v3906 = vmul.f32 %v3858, %v3881
    %v3907 = vmul.f32 %v3859, %v3883
    %v3908 = vmul.f32 %v3860, %v3885
    %v3909 = vmul.f32 %v3861, %v3887
    %v3910 = vmul.f32 %v3862, %v3889
    %v3911 = vmul.f32 %v3863, %v3891
    %v3912 = vmul.f32 %v3864, %v3893
    %v3913 = vmul.f32 %v3865, %v3895
    %v3914 = vmul.f32 %v3866, %v3897
    %v3915 = vmul.f32 %v3867, %v3899
    %v3916 = vsel %vm55, %v3900, -9e+15
    %v3917 = vsel %vm55, %v3901, -9e+15
    %v3918 = vsel %vm55, %v3902, -9e+15
    %v3919 = vsel %vm55, %v3903, -9e+15
    %v3920 = vsel %vm55, %v3904, -9e+15
    %v3921 = vsel %vm55, %v3905, -9e+15
    %v3922 = vsel %vm55, %v3906, -9e+15
    %v3923 = vsel %vm55, %v3907, -9e+15
    %v3924 = vsel %vm55, %v3908, -9e+15
    %v3925 = vsel %vm55, %v3909, -9e+15
    %v3926 = vsel %vm55, %v3910, -9e+15
    %v3927 = vsel %vm55, %v3911, -9e+15
    %v3928 = vsel %vm55, %v3912, -9e+15
    %v3929 = vsel %vm55, %v3913, -9e+15
    %v3930 = vsel %vm55, %v3914, -9e+15
    %v3931 = vsel %vm55, %v3915, -9e+15
    %v3932 = vmul.f32 %v3916, 1.442695
    %v3933 = vpow.pop %v3932
    %v3934 = vmul.f32 %v3917, 1.442695
    %v3935 = vpow.pop %v3934
    %v3936 = vmul.f32 %v3918, 1.442695
    %v3937 = vpow.pop %v3936
    %v3938 = vmul.f32 %v3919, 1.442695
    %v3939 = vpow.pop %v3938
    %v3940 = vmul.f32 %v3920, 1.442695
    %v3941 = vpow.pop %v3940
    %v3942 = vmul.f32 %v3921, 1.442695
    %v3943 = vpow.pop %v3942
    %v3944 = vmul.f32 %v3922, 1.442695
    %v3945 = vpow.pop %v3944
    %v3946 = vmul.f32 %v3923, 1.442695
    %v3947 = vpow.pop %v3946
    %v3948 = vmul.f32 %v3924, 1.442695
    %v3949 = vpow.pop %v3948
    %v3950 = vmul.f32 %v3925, 1.442695
    %v3951 = vpow.pop %v3950
    %v3952 = vmul.f32 %v3926, 1.442695
    %v3953 = vpow.pop %v3952
    %v3954 = vmul.f32 %v3927, 1.442695
    %v3955 = vpow.pop %v3954
    %v3956 = vmul.f32 %v3928, 1.442695
    %v3957 = vpow.pop %v3956
    %v3958 = vmul.f32 %v3929, 1.442695
    %v3959 = vpow.pop %v3958
    %v3960 = vmul.f32 %v3930, 1.442695
    %v3961 = vpow.pop %v3960
    %v3962 = vmul.f32 %v3931, 1.442695
    %v3963 = vpow.pop %v3962
    %3964 = vadd.xlane.f32.xlu0 %v3933
    %v3965 = vpop.xlane.xlu0 %3964
    %3966 = vadd.xlane.f32.xlu0 %v3935
    %v3967 = vpop.xlane.xlu0 %3966
    %3968 = vadd.xlane.f32.xlu0 %v3937
    %v3969 = vpop.xlane.xlu0 %3968
    %3970 = vadd.xlane.f32.xlu0 %v3939
    %v3971 = vpop.xlane.xlu0 %3970
    %3972 = vadd.xlane.f32.xlu0 %v3941
    %v3973 = vpop.xlane.xlu0 %3972
    %3974 = vadd.xlane.f32.xlu0 %v3943
    %v3975 = vpop.xlane.xlu0 %3974
    %3976 = vadd.xlane.f32.xlu0 %v3945
    %v3977 = vpop.xlane.xlu0 %3976
    %3978 = vadd.xlane.f32.xlu0 %v3947
    %v3979 = vpop.xlane.xlu0 %3978
    %3980 = vadd.xlane.f32.xlu0 %v3949
    %v3981 = vpop.xlane.xlu0 %3980
    %3982 = vadd.xlane.f32.xlu0 %v3951
    %v3983 = vpop.xlane.xlu0 %3982
    %3984 = vadd.xlane.f32.xlu0 %v3953
    %v3985 = vpop.xlane.xlu0 %3984
    %3986 = vadd.xlane.f32.xlu0 %v3955
    %v3987 = vpop.xlane.xlu0 %3986
    %3988 = vadd.xlane.f32.xlu0 %v3957
    %v3989 = vpop.xlane.xlu0 %3988
    %3990 = vadd.xlane.f32.xlu0 %v3959
    %v3991 = vpop.xlane.xlu0 %3990
    %3992 = vadd.xlane.f32.xlu0 %v3961
    %v3993 = vpop.xlane.xlu0 %3992
    %3994 = vadd.xlane.f32.xlu0 %v3963
    %v3995 = vpop.xlane.xlu0 %3994
    %v3996 = vrcp.pop %v3965
    %v3997 = vrcp.pop %v3967
    %v3998 = vrcp.pop %v3969
    %v3999 = vrcp.pop %v3971
    %v4000 = vrcp.pop %v3973
    %v4001 = vrcp.pop %v3975
    %v4002 = vrcp.pop %v3977
    %v4003 = vrcp.pop %v3979
    %v4004 = vrcp.pop %v3981
    %v4005 = vrcp.pop %v3983
    %v4006 = vrcp.pop %v3985
    %v4007 = vrcp.pop %v3987
    %v4008 = vrcp.pop %v3989
    %v4009 = vrcp.pop %v3991
    %v4010 = vrcp.pop %v3993
    %v4011 = vrcp.pop %v3995
    %v4012 = vmul.f32 %v3933, %v3996
    %v4013 = vmul.f32 %v3935, %v3997
    %v4014 = vmul.f32 %v3937, %v3998
    %v4015 = vmul.f32 %v3939, %v3999
    %v4016 = vmul.f32 %v3941, %v4000
    %v4017 = vmul.f32 %v3943, %v4001
    %v4018 = vmul.f32 %v3945, %v4002
    %v4019 = vmul.f32 %v3947, %v4003
    %v4020 = vmul.f32 %v3949, %v4004
    %v4021 = vmul.f32 %v3951, %v4005
    %v4022 = vmul.f32 %v3953, %v4006
    %v4023 = vmul.f32 %v3955, %v4007
    %v4024 = vmul.f32 %v3957, %v4008
    %v4025 = vmul.f32 %v3959, %v4009
    %v4026 = vmul.f32 %v3961, %v4010
    %v4027 = vmul.f32 %v3963, %v4011
    %s4029 = sor.u32 256, 72
    %4030 = vbcast.lane.b32.xlu0 %v379, %s4029
    %v4031 = vpop.permute.xlu0 %4030
    %s4033 = sor.u32 256, 72
    %4034 = vbcast.lane.b32.xlu0 %v386, %s4033
    %v4035 = vpop.permute.xlu0 %4034
    %s4037 = sor.u32 256, 72
    %4038 = vbcast.lane.b32.xlu0 %v393, %s4037
    %v4039 = vpop.permute.xlu0 %4038
    %s4041 = sor.u32 256, 72
    %4042 = vbcast.lane.b32.xlu0 %v400, %s4041
    %v4043 = vpop.permute.xlu0 %4042
    %s4045 = sor.u32 256, 72
    %4046 = vbcast.lane.b32.xlu0 %v407, %s4045
    %v4047 = vpop.permute.xlu0 %4046
    %s4049 = sor.u32 256, 72
    %4050 = vbcast.lane.b32.xlu0 %v414, %s4049
    %v4051 = vpop.permute.xlu0 %4050
    %s4053 = sor.u32 256, 72
    %4054 = vbcast.lane.b32.xlu0 %v421, %s4053
    %v4055 = vpop.permute.xlu0 %4054
    %s4057 = sor.u32 256, 72
    %4058 = vbcast.lane.b32.xlu0 %v428, %s4057
    %v4059 = vpop.permute.xlu0 %4058
    %s4061 = sor.u32 256, 72
    %4062 = vbcast.lane.b32.xlu0 %v435, %s4061
    %v4063 = vpop.permute.xlu0 %4062
    %s4065 = sor.u32 256, 72
    %4066 = vbcast.lane.b32.xlu0 %v442, %s4065
    %v4067 = vpop.permute.xlu0 %4066
    %s4069 = sor.u32 256, 72
    %4070 = vbcast.lane.b32.xlu0 %v449, %s4069
    %v4071 = vpop.permute.xlu0 %4070
    %s4073 = sor.u32 256, 72
    %4074 = vbcast.lane.b32.xlu0 %v456, %s4073
    %v4075 = vpop.permute.xlu0 %4074
    %s4077 = sor.u32 256, 72
    %4078 = vbcast.lane.b32.xlu0 %v463, %s4077
    %v4079 = vpop.permute.xlu0 %4078
    %s4081 = sor.u32 256, 72
    %4082 = vbcast.lane.b32.xlu0 %v470, %s4081
    %v4083 = vpop.permute.xlu0 %4082
    %s4085 = sor.u32 256, 72
    %4086 = vbcast.lane.b32.xlu0 %v477, %s4085
    %v4087 = vpop.permute.xlu0 %4086
    %s4089 = sor.u32 256, 72
    %4090 = vbcast.lane.b32.xlu0 %v484, %s4089
    %v4091 = vpop.permute.xlu0 %4090
    %v4092 = vmul.f32 %v4031, %v4012
    %v4093 = vmul.f32 %v4035, %v4013
    %v4094 = vmul.f32 %v4039, %v4014
    %v4095 = vmul.f32 %v4043, %v4015
    %v4096 = vmul.f32 %v4047, %v4016
    %v4097 = vmul.f32 %v4051, %v4017
    %v4098 = vmul.f32 %v4055, %v4018
    %v4099 = vmul.f32 %v4059, %v4019
    %v4100 = vmul.f32 %v4063, %v4020
    %v4101 = vmul.f32 %v4067, %v4021
    %v4102 = vmul.f32 %v4071, %v4022
    %v4103 = vmul.f32 %v4075, %v4023
    %v4104 = vmul.f32 %v4079, %v4024
    %v4105 = vmul.f32 %v4083, %v4025
    %v4106 = vmul.f32 %v4087, %v4026
    %v4107 = vmul.f32 %v4091, %v4027
    %v4108 = vrot.slane %v4092, 4
    %v4109 = vadd.f32 %v4092, %v4108
    %v4110 = vrot.slane %v4109, 2
    %v4111 = vadd.f32 %v4109, %v4110
    %v4112 = vrot.slane %v4111, 1
    %v4113 = vadd.f32 %v4111, %v4112
    %v4114 = vrot.slane %v4093, 4
    %v4115 = vadd.f32 %v4093, %v4114
    %v4116 = vrot.slane %v4115, 2
    %v4117 = vadd.f32 %v4115, %v4116
    %v4118 = vrot.slane %v4117, 1
    %v4119 = vadd.f32 %v4117, %v4118
    %v4120 = vrot.slane %v4094, 4
    %v4121 = vadd.f32 %v4094, %v4120
    %v4122 = vrot.slane %v4121, 2
    %v4123 = vadd.f32 %v4121, %v4122
    %v4124 = vrot.slane %v4123, 1
    %v4125 = vadd.f32 %v4123, %v4124
    %v4126 = vrot.slane %v4095, 4
    %v4127 = vadd.f32 %v4095, %v4126
    %v4128 = vrot.slane %v4127, 2
    %v4129 = vadd.f32 %v4127, %v4128
    %v4130 = vrot.slane %v4129, 1
    %v4131 = vadd.f32 %v4129, %v4130
    %v4132 = vrot.slane %v4096, 4
    %v4133 = vadd.f32 %v4096, %v4132
    %v4134 = vrot.slane %v4133, 2
    %v4135 = vadd.f32 %v4133, %v4134
    %v4136 = vrot.slane %v4135, 1
    %v4137 = vadd.f32 %v4135, %v4136
    %v4138 = vrot.slane %v4097, 4
    %v4139 = vadd.f32 %v4097, %v4138
    %v4140 = vrot.slane %v4139, 2
    %v4141 = vadd.f32 %v4139, %v4140
    %v4142 = vrot.slane %v4141, 1
    %v4143 = vadd.f32 %v4141, %v4142
    %v4144 = vrot.slane %v4098, 4
    %v4145 = vadd.f32 %v4098, %v4144
    %v4146 = vrot.slane %v4145, 2
    %v4147 = vadd.f32 %v4145, %v4146
    %v4148 = vrot.slane %v4147, 1
    %v4149 = vadd.f32 %v4147, %v4148
    %v4150 = vrot.slane %v4099, 4
    %v4151 = vadd.f32 %v4099, %v4150
    %v4152 = vrot.slane %v4151, 2
    %v4153 = vadd.f32 %v4151, %v4152
    %v4154 = vrot.slane %v4153, 1
    %v4155 = vadd.f32 %v4153, %v4154
    %v4156 = vrot.slane %v4100, 4
    %v4157 = vadd.f32 %v4100, %v4156
    %v4158 = vrot.slane %v4157, 2
    %v4159 = vadd.f32 %v4157, %v4158
    %v4160 = vrot.slane %v4159, 1
    %v4161 = vadd.f32 %v4159, %v4160
    %v4162 = vrot.slane %v4101, 4
    %v4163 = vadd.f32 %v4101, %v4162
    %v4164 = vrot.slane %v4163, 2
    %v4165 = vadd.f32 %v4163, %v4164
    %v4166 = vrot.slane %v4165, 1
    %v4167 = vadd.f32 %v4165, %v4166
    %v4168 = vrot.slane %v4102, 4
    %v4169 = vadd.f32 %v4102, %v4168
    %v4170 = vrot.slane %v4169, 2
    %v4171 = vadd.f32 %v4169, %v4170
    %v4172 = vrot.slane %v4171, 1
    %v4173 = vadd.f32 %v4171, %v4172
    %v4174 = vrot.slane %v4103, 4
    %v4175 = vadd.f32 %v4103, %v4174
    %v4176 = vrot.slane %v4175, 2
    %v4177 = vadd.f32 %v4175, %v4176
    %v4178 = vrot.slane %v4177, 1
    %v4179 = vadd.f32 %v4177, %v4178
    %v4180 = vrot.slane %v4104, 4
    %v4181 = vadd.f32 %v4104, %v4180
    %v4182 = vrot.slane %v4181, 2
    %v4183 = vadd.f32 %v4181, %v4182
    %v4184 = vrot.slane %v4183, 1
    %v4185 = vadd.f32 %v4183, %v4184
    %v4186 = vrot.slane %v4105, 4
    %v4187 = vadd.f32 %v4105, %v4186
    %v4188 = vrot.slane %v4187, 2
    %v4189 = vadd.f32 %v4187, %v4188
    %v4190 = vrot.slane %v4189, 1
    %v4191 = vadd.f32 %v4189, %v4190
    %v4192 = vrot.slane %v4106, 4
    %v4193 = vadd.f32 %v4106, %v4192
    %v4194 = vrot.slane %v4193, 2
    %v4195 = vadd.f32 %v4193, %v4194
    %v4196 = vrot.slane %v4195, 1
    %v4197 = vadd.f32 %v4195, %v4196
    %v4198 = vrot.slane %v4107, 4
    %v4199 = vadd.f32 %v4107, %v4198
    %v4200 = vrot.slane %v4199, 2
    %v4201 = vadd.f32 %v4199, %v4200
    %v4202 = vrot.slane %v4201, 1
    %v4203 = vadd.f32 %v4201, %v4202
    %s4205 = sor.u32 256, 80
    %4206 = vbcast.lane.b32.xlu0 %v379, %s4205
    %v4207 = vpop.permute.xlu0 %4206
    %s4209 = sor.u32 256, 80
    %4210 = vbcast.lane.b32.xlu0 %v386, %s4209
    %v4211 = vpop.permute.xlu0 %4210
    %s4213 = sor.u32 256, 80
    %4214 = vbcast.lane.b32.xlu0 %v393, %s4213
    %v4215 = vpop.permute.xlu0 %4214
    %s4217 = sor.u32 256, 80
    %4218 = vbcast.lane.b32.xlu0 %v400, %s4217
    %v4219 = vpop.permute.xlu0 %4218
    %s4221 = sor.u32 256, 80
    %4222 = vbcast.lane.b32.xlu0 %v407, %s4221
    %v4223 = vpop.permute.xlu0 %4222
    %s4225 = sor.u32 256, 80
    %4226 = vbcast.lane.b32.xlu0 %v414, %s4225
    %v4227 = vpop.permute.xlu0 %4226
    %s4229 = sor.u32 256, 80
    %4230 = vbcast.lane.b32.xlu0 %v421, %s4229
    %v4231 = vpop.permute.xlu0 %4230
    %s4233 = sor.u32 256, 80
    %4234 = vbcast.lane.b32.xlu0 %v428, %s4233
    %v4235 = vpop.permute.xlu0 %4234
    %s4237 = sor.u32 256, 80
    %4238 = vbcast.lane.b32.xlu0 %v435, %s4237
    %v4239 = vpop.permute.xlu0 %4238
    %s4241 = sor.u32 256, 80
    %4242 = vbcast.lane.b32.xlu0 %v442, %s4241
    %v4243 = vpop.permute.xlu0 %4242
    %s4245 = sor.u32 256, 80
    %4246 = vbcast.lane.b32.xlu0 %v449, %s4245
    %v4247 = vpop.permute.xlu0 %4246
    %s4249 = sor.u32 256, 80
    %4250 = vbcast.lane.b32.xlu0 %v456, %s4249
    %v4251 = vpop.permute.xlu0 %4250
    %s4253 = sor.u32 256, 80
    %4254 = vbcast.lane.b32.xlu0 %v463, %s4253
    %v4255 = vpop.permute.xlu0 %4254
    %s4257 = sor.u32 256, 80
    %4258 = vbcast.lane.b32.xlu0 %v470, %s4257
    %v4259 = vpop.permute.xlu0 %4258
    %s4261 = sor.u32 256, 80
    %4262 = vbcast.lane.b32.xlu0 %v477, %s4261
    %v4263 = vpop.permute.xlu0 %4262
    %s4265 = sor.u32 256, 80
    %4266 = vbcast.lane.b32.xlu0 %v484, %s4265
    %v4267 = vpop.permute.xlu0 %4266
    %v4270 = vcombine.high %v368, %v368
    %v4272 = vunpack.c.l.s4 1966171168
    %v4273 = vunpack.c.0.s8 %v4272
    %v4274 = vlaneseq
    %v4275 = vshrl.u32 %v4274, 7
    %v4276 = vsub.s32 %v4273, %v4275
    %v4277 = vrot.slane %v368, %v4276
    %v4279 = vunpack.c.l.s4 1966171168
    %v4280 = vunpack.c.0.s8 %v4279
    %v4281 = vlaneseq
    %v4282 = vshrl.u32 %v4281, 7
    %v4283 = vsub.s32 %v4280, %v4282
    %v4284 = vrot.slane %v4270, %v4283
    %v4285 = vcombine.high %v4277, %v4277
    %v4286 = vcombine.high %v4284, %v4284
    %v4288 = vunpack.c.l.s4 1966171168
    %v4289 = vunpack.c.0.s8 %v4288
    %v4290 = vlaneseq
    %v4291 = vshrl.u32 %v4290, 7
    %v4292 = vsub.s32 %v4289, %v4291
    %v4293 = vrot.slane %v4277, %v4292
    %v4295 = vunpack.c.l.s4 1966171168
    %v4296 = vunpack.c.0.s8 %v4295
    %v4297 = vlaneseq
    %v4298 = vshrl.u32 %v4297, 7
    %v4299 = vsub.s32 %v4296, %v4298
    %v4300 = vrot.slane %v4284, %v4299
    %v4302 = vunpack.c.l.s4 1966171168
    %v4303 = vunpack.c.0.s8 %v4302
    %v4304 = vlaneseq
    %v4305 = vshrl.u32 %v4304, 7
    %v4306 = vsub.s32 %v4303, %v4305
    %v4307 = vrot.slane %v4285, %v4306
    %v4309 = vunpack.c.l.s4 1966171168
    %v4310 = vunpack.c.0.s8 %v4309
    %v4311 = vlaneseq
    %v4312 = vshrl.u32 %v4311, 7
    %v4313 = vsub.s32 %v4310, %v4312
    %v4314 = vrot.slane %v4286, %v4313
    %v4315 = vcombine.high %v4293, %v4293
    %v4316 = vcombine.high %v4300, %v4300
    %v4317 = vcombine.high %v4307, %v4307
    %v4318 = vcombine.high %v4314, %v4314
    %v4319 = vcombine.high %v374, %v374
    %v4321 = vunpack.c.l.s4 1966171168
    %v4322 = vunpack.c.0.s8 %v4321
    %v4323 = vlaneseq
    %v4324 = vshrl.u32 %v4323, 7
    %v4325 = vsub.s32 %v4322, %v4324
    %v4326 = vrot.slane %v374, %v4325
    %v4328 = vunpack.c.l.s4 1966171168
    %v4329 = vunpack.c.0.s8 %v4328
    %v4330 = vlaneseq
    %v4331 = vshrl.u32 %v4330, 7
    %v4332 = vsub.s32 %v4329, %v4331
    %v4333 = vrot.slane %v4319, %v4332
    %v4334 = vcombine.high %v4326, %v4326
    %v4335 = vcombine.high %v4333, %v4333
    %v4337 = vunpack.c.l.s4 1966171168
    %v4338 = vunpack.c.0.s8 %v4337
    %v4339 = vlaneseq
    %v4340 = vshrl.u32 %v4339, 7
    %v4341 = vsub.s32 %v4338, %v4340
    %v4342 = vrot.slane %v4326, %v4341
    %v4344 = vunpack.c.l.s4 1966171168
    %v4345 = vunpack.c.0.s8 %v4344
    %v4346 = vlaneseq
    %v4347 = vshrl.u32 %v4346, 7
    %v4348 = vsub.s32 %v4345, %v4347
    %v4349 = vrot.slane %v4333, %v4348
    %v4351 = vunpack.c.l.s4 1966171168
    %v4352 = vunpack.c.0.s8 %v4351
    %v4353 = vlaneseq
    %v4354 = vshrl.u32 %v4353, 7
    %v4355 = vsub.s32 %v4352, %v4354
    %v4356 = vrot.slane %v4334, %v4355
    %v4358 = vunpack.c.l.s4 1966171168
    %v4359 = vunpack.c.0.s8 %v4358
    %v4360 = vlaneseq
    %v4361 = vshrl.u32 %v4360, 7
    %v4362 = vsub.s32 %v4359, %v4361
    %v4363 = vrot.slane %v4335, %v4362
    %v4364 = vcombine.high %v4342, %v4342
    %v4365 = vcombine.high %v4349, %v4349
    %v4366 = vcombine.high %v4356, %v4356
    %v4367 = vcombine.high %v4363, %v4363
    %v4368 = vlaneseq
    %v4369 = vshrl.u32 %v4368, 7
    %v4370 = vsub.s32 0, %v4369
    %v4371 = vrot.slane %v4293, %v4370
    %v4372 = vlaneseq
    %v4373 = vshrl.u32 %v4372, 7
    %v4374 = vsub.s32 0, %v4373
    %v4375 = vrot.slane %v4307, %v4374
    %v4376 = vlaneseq
    %v4377 = vshrl.u32 %v4376, 7
    %v4378 = vsub.s32 0, %v4377
    %v4379 = vrot.slane %v4315, %v4378
    %v4380 = vlaneseq
    %v4381 = vshrl.u32 %v4380, 7
    %v4382 = vsub.s32 0, %v4381
    %v4383 = vrot.slane %v4317, %v4382
    %v4384 = vlaneseq
    %v4385 = vshrl.u32 %v4384, 7
    %v4386 = vsub.s32 0, %v4385
    %v4387 = vrot.slane %v4300, %v4386
    %v4388 = vlaneseq
    %v4389 = vshrl.u32 %v4388, 7
    %v4390 = vsub.s32 0, %v4389
    %v4391 = vrot.slane %v4314, %v4390
    %v4392 = vlaneseq
    %v4393 = vshrl.u32 %v4392, 7
    %v4394 = vsub.s32 0, %v4393
    %v4395 = vrot.slane %v4316, %v4394
    %v4396 = vlaneseq
    %v4397 = vshrl.u32 %v4396, 7
    %v4398 = vsub.s32 0, %v4397
    %v4399 = vrot.slane %v4318, %v4398
    %v4400 = vlaneseq
    %v4401 = vshrl.u32 %v4400, 7
    %v4402 = vsub.s32 0, %v4401
    %v4403 = vrot.slane %v4342, %v4402
    %v4404 = vlaneseq
    %v4405 = vshrl.u32 %v4404, 7
    %v4406 = vsub.s32 0, %v4405
    %v4407 = vrot.slane %v4356, %v4406
    %v4408 = vlaneseq
    %v4409 = vshrl.u32 %v4408, 7
    %v4410 = vsub.s32 0, %v4409
    %v4411 = vrot.slane %v4364, %v4410
    %v4412 = vlaneseq
    %v4413 = vshrl.u32 %v4412, 7
    %v4414 = vsub.s32 0, %v4413
    %v4415 = vrot.slane %v4366, %v4414
    %v4416 = vlaneseq
    %v4417 = vshrl.u32 %v4416, 7
    %v4418 = vsub.s32 0, %v4417
    %v4419 = vrot.slane %v4349, %v4418
    %v4420 = vlaneseq
    %v4421 = vshrl.u32 %v4420, 7
    %v4422 = vsub.s32 0, %v4421
    %v4423 = vrot.slane %v4363, %v4422
    %v4424 = vlaneseq
    %v4425 = vshrl.u32 %v4424, 7
    %v4426 = vsub.s32 0, %v4425
    %v4427 = vrot.slane %v4365, %v4426
    %v4428 = vlaneseq
    %v4429 = vshrl.u32 %v4428, 7
    %v4430 = vsub.s32 0, %v4429
    %v4431 = vrot.slane %v4367, %v4430
    %v4448 = vmul.f32 %v4207, %v4371
    %v4449 = vmul.f32 %v4211, %v4375
    %v4450 = vmul.f32 %v4215, %v4379
    %v4451 = vmul.f32 %v4219, %v4383
    %v4452 = vmul.f32 %v4223, %v4387
    %v4453 = vmul.f32 %v4227, %v4391
    %v4454 = vmul.f32 %v4231, %v4395
    %v4455 = vmul.f32 %v4235, %v4399
    %v4456 = vmul.f32 %v4239, %v4403
    %v4457 = vmul.f32 %v4243, %v4407
    %v4458 = vmul.f32 %v4247, %v4411
    %v4459 = vmul.f32 %v4251, %v4415
    %v4460 = vmul.f32 %v4255, %v4419
    %v4461 = vmul.f32 %v4259, %v4423
    %v4462 = vmul.f32 %v4263, %v4427
    %v4463 = vmul.f32 %v4267, %v4431
    %v4464 = vsel %vm55, %v4448, 9e+15
    %v4465 = vsel %vm55, %v4449, 9e+15
    %v4466 = vsel %vm55, %v4450, 9e+15
    %v4467 = vsel %vm55, %v4451, 9e+15
    %v4468 = vsel %vm55, %v4452, 9e+15
    %v4469 = vsel %vm55, %v4453, 9e+15
    %v4470 = vsel %vm55, %v4454, 9e+15
    %v4471 = vsel %vm55, %v4455, 9e+15
    %v4472 = vsel %vm55, %v4456, 9e+15
    %v4473 = vsel %vm55, %v4457, 9e+15
    %v4474 = vsel %vm55, %v4458, 9e+15
    %v4475 = vsel %vm55, %v4459, 9e+15
    %v4476 = vsel %vm55, %v4460, 9e+15
    %v4477 = vsel %vm55, %v4461, 9e+15
    %v4478 = vsel %vm55, %v4462, 9e+15
    %v4479 = vsel %vm55, %v4463, 9e+15
    %v4480 = vsel %vm55, %v4448, -9e+15
    %v4481 = vsel %vm55, %v4449, -9e+15
    %v4482 = vsel %vm55, %v4450, -9e+15
    %v4483 = vsel %vm55, %v4451, -9e+15
    %v4484 = vsel %vm55, %v4452, -9e+15
    %v4485 = vsel %vm55, %v4453, -9e+15
    %v4486 = vsel %vm55, %v4454, -9e+15
    %v4487 = vsel %vm55, %v4455, -9e+15
    %v4488 = vsel %vm55, %v4456, -9e+15
    %v4489 = vsel %vm55, %v4457, -9e+15
    %v4490 = vsel %vm55, %v4458, -9e+15
    %v4491 = vsel %vm55, %v4459, -9e+15
    %v4492 = vsel %vm55, %v4460, -9e+15
    %v4493 = vsel %vm55, %v4461, -9e+15
    %v4494 = vsel %vm55, %v4462, -9e+15
    %v4495 = vsel %vm55, %v4463, -9e+15
    %4496 = vmin.xlane.f32.xlu0 %v4464
    %v4497 = vpop.xlane.xlu0 %4496
    %4498 = vmin.xlane.f32.xlu0 %v4465
    %v4499 = vpop.xlane.xlu0 %4498
    %4500 = vmin.xlane.f32.xlu0 %v4466
    %v4501 = vpop.xlane.xlu0 %4500
    %4502 = vmin.xlane.f32.xlu0 %v4467
    %v4503 = vpop.xlane.xlu0 %4502
    %4504 = vmin.xlane.f32.xlu0 %v4468
    %v4505 = vpop.xlane.xlu0 %4504
    %4506 = vmin.xlane.f32.xlu0 %v4469
    %v4507 = vpop.xlane.xlu0 %4506
    %4508 = vmin.xlane.f32.xlu0 %v4470
    %v4509 = vpop.xlane.xlu0 %4508
    %4510 = vmin.xlane.f32.xlu0 %v4471
    %v4511 = vpop.xlane.xlu0 %4510
    %4512 = vmin.xlane.f32.xlu0 %v4472
    %v4513 = vpop.xlane.xlu0 %4512
    %4514 = vmin.xlane.f32.xlu0 %v4473
    %v4515 = vpop.xlane.xlu0 %4514
    %4516 = vmin.xlane.f32.xlu0 %v4474
    %v4517 = vpop.xlane.xlu0 %4516
    %4518 = vmin.xlane.f32.xlu0 %v4475
    %v4519 = vpop.xlane.xlu0 %4518
    %4520 = vmin.xlane.f32.xlu0 %v4476
    %v4521 = vpop.xlane.xlu0 %4520
    %4522 = vmin.xlane.f32.xlu0 %v4477
    %v4523 = vpop.xlane.xlu0 %4522
    %4524 = vmin.xlane.f32.xlu0 %v4478
    %v4525 = vpop.xlane.xlu0 %4524
    %4526 = vmin.xlane.f32.xlu0 %v4479
    %v4527 = vpop.xlane.xlu0 %4526
    %4528 = vmax.xlane.f32.xlu0 %v4480
    %v4529 = vpop.xlane.xlu0 %4528
    %4530 = vmax.xlane.f32.xlu0 %v4481
    %v4531 = vpop.xlane.xlu0 %4530
    %4532 = vmax.xlane.f32.xlu0 %v4482
    %v4533 = vpop.xlane.xlu0 %4532
    %4534 = vmax.xlane.f32.xlu0 %v4483
    %v4535 = vpop.xlane.xlu0 %4534
    %4536 = vmax.xlane.f32.xlu0 %v4484
    %v4537 = vpop.xlane.xlu0 %4536
    %4538 = vmax.xlane.f32.xlu0 %v4485
    %v4539 = vpop.xlane.xlu0 %4538
    %4540 = vmax.xlane.f32.xlu0 %v4486
    %v4541 = vpop.xlane.xlu0 %4540
    %4542 = vmax.xlane.f32.xlu0 %v4487
    %v4543 = vpop.xlane.xlu0 %4542
    %4544 = vmax.xlane.f32.xlu0 %v4488
    %v4545 = vpop.xlane.xlu0 %4544
    %4546 = vmax.xlane.f32.xlu0 %v4489
    %v4547 = vpop.xlane.xlu0 %4546
    %4548 = vmax.xlane.f32.xlu0 %v4490
    %v4549 = vpop.xlane.xlu0 %4548
    %4550 = vmax.xlane.f32.xlu0 %v4491
    %v4551 = vpop.xlane.xlu0 %4550
    %4552 = vmax.xlane.f32.xlu0 %v4492
    %v4553 = vpop.xlane.xlu0 %4552
    %4554 = vmax.xlane.f32.xlu0 %v4493
    %v4555 = vpop.xlane.xlu0 %4554
    %4556 = vmax.xlane.f32.xlu0 %v4494
    %v4557 = vpop.xlane.xlu0 %4556
    %4558 = vmax.xlane.f32.xlu0 %v4495
    %v4559 = vpop.xlane.xlu0 %4558
    %v4560 = vsub.f32 %v4529, %v4497
    %v4561 = vsub.f32 %v4531, %v4499
    %v4562 = vsub.f32 %v4533, %v4501
    %v4563 = vsub.f32 %v4535, %v4503
    %v4564 = vsub.f32 %v4537, %v4505
    %v4565 = vsub.f32 %v4539, %v4507
    %v4566 = vsub.f32 %v4541, %v4509
    %v4567 = vsub.f32 %v4543, %v4511
    %v4568 = vsub.f32 %v4545, %v4513
    %v4569 = vsub.f32 %v4547, %v4515
    %v4570 = vsub.f32 %v4549, %v4517
    %v4571 = vsub.f32 %v4551, %v4519
    %v4572 = vsub.f32 %v4553, %v4521
    %v4573 = vsub.f32 %v4555, %v4523
    %v4574 = vsub.f32 %v4557, %v4525
    %v4575 = vsub.f32 %v4559, %v4527
    %vm4576 = vcmp.eq.f32.partialorder %v4560, 0.0
    %vm4577 = vcmp.eq.f32.partialorder %v4561, 0.0
    %vm4578 = vcmp.eq.f32.partialorder %v4562, 0.0
    %vm4579 = vcmp.eq.f32.partialorder %v4563, 0.0
    %vm4580 = vcmp.eq.f32.partialorder %v4564, 0.0
    %vm4581 = vcmp.eq.f32.partialorder %v4565, 0.0
    %vm4582 = vcmp.eq.f32.partialorder %v4566, 0.0
    %vm4583 = vcmp.eq.f32.partialorder %v4567, 0.0
    %vm4584 = vcmp.eq.f32.partialorder %v4568, 0.0
    %vm4585 = vcmp.eq.f32.partialorder %v4569, 0.0
    %vm4586 = vcmp.eq.f32.partialorder %v4570, 0.0
    %vm4587 = vcmp.eq.f32.partialorder %v4571, 0.0
    %vm4588 = vcmp.eq.f32.partialorder %v4572, 0.0
    %vm4589 = vcmp.eq.f32.partialorder %v4573, 0.0
    %vm4590 = vcmp.eq.f32.partialorder %v4574, 0.0
    %vm4591 = vcmp.eq.f32.partialorder %v4575, 0.0
    %v4592 = vsel %vm4576, 1e-06, %v4560
    %v4593 = vsel %vm4577, 1e-06, %v4561
    %v4594 = vsel %vm4578, 1e-06, %v4562
    %v4595 = vsel %vm4579, 1e-06, %v4563
    %v4596 = vsel %vm4580, 1e-06, %v4564
    %v4597 = vsel %vm4581, 1e-06, %v4565
    %v4598 = vsel %vm4582, 1e-06, %v4566
    %v4599 = vsel %vm4583, 1e-06, %v4567
    %v4600 = vsel %vm4584, 1e-06, %v4568
    %v4601 = vsel %vm4585, 1e-06, %v4569
    %v4602 = vsel %vm4586, 1e-06, %v4570
    %v4603 = vsel %vm4587, 1e-06, %v4571
    %v4604 = vsel %vm4588, 1e-06, %v4572
    %v4605 = vsel %vm4589, 1e-06, %v4573
    %v4606 = vsel %vm4590, 1e-06, %v4574
    %v4607 = vsel %vm4591, 1e-06, %v4575
    %v4608 = vsub.f32 %v4448, %v4497
    %v4609 = vsub.f32 %v4449, %v4499
    %v4610 = vsub.f32 %v4450, %v4501
    %v4611 = vsub.f32 %v4451, %v4503
    %v4612 = vsub.f32 %v4452, %v4505
    %v4613 = vsub.f32 %v4453, %v4507
    %v4614 = vsub.f32 %v4454, %v4509
    %v4615 = vsub.f32 %v4455, %v4511
    %v4616 = vsub.f32 %v4456, %v4513
    %v4617 = vsub.f32 %v4457, %v4515
    %v4618 = vsub.f32 %v4458, %v4517
    %v4619 = vsub.f32 %v4459, %v4519
    %v4620 = vsub.f32 %v4460, %v4521
    %v4621 = vsub.f32 %v4461, %v4523
    %v4622 = vsub.f32 %v4462, %v4525
    %v4623 = vsub.f32 %v4463, %v4527
    %v4624 = vrcp.pop %v4592
    %v4625 = vmul.f32 1.0, %v4624
    %v4626 = vrcp.pop %v4593
    %v4627 = vmul.f32 1.0, %v4626
    %v4628 = vrcp.pop %v4594
    %v4629 = vmul.f32 1.0, %v4628
    %v4630 = vrcp.pop %v4595
    %v4631 = vmul.f32 1.0, %v4630
    %v4632 = vrcp.pop %v4596
    %v4633 = vmul.f32 1.0, %v4632
    %v4634 = vrcp.pop %v4597
    %v4635 = vmul.f32 1.0, %v4634
    %v4636 = vrcp.pop %v4598
    %v4637 = vmul.f32 1.0, %v4636
    %v4638 = vrcp.pop %v4599
    %v4639 = vmul.f32 1.0, %v4638
    %v4640 = vrcp.pop %v4600
    %v4641 = vmul.f32 1.0, %v4640
    %v4642 = vrcp.pop %v4601
    %v4643 = vmul.f32 1.0, %v4642
    %v4644 = vrcp.pop %v4602
    %v4645 = vmul.f32 1.0, %v4644
    %v4646 = vrcp.pop %v4603
    %v4647 = vmul.f32 1.0, %v4646
    %v4648 = vrcp.pop %v4604
    %v4649 = vmul.f32 1.0, %v4648
    %v4650 = vrcp.pop %v4605
    %v4651 = vmul.f32 1.0, %v4650
    %v4652 = vrcp.pop %v4606
    %v4653 = vmul.f32 1.0, %v4652
    %v4654 = vrcp.pop %v4607
    %v4655 = vmul.f32 1.0, %v4654
    %v4656 = vmul.f32 %v4608, %v4625
    %v4657 = vmul.f32 %v4609, %v4627
    %v4658 = vmul.f32 %v4610, %v4629
    %v4659 = vmul.f32 %v4611, %v4631
    %v4660 = vmul.f32 %v4612, %v4633
    %v4661 = vmul.f32 %v4613, %v4635
    %v4662 = vmul.f32 %v4614, %v4637
    %v4663 = vmul.f32 %v4615, %v4639
    %v4664 = vmul.f32 %v4616, %v4641
    %v4665 = vmul.f32 %v4617, %v4643
    %v4666 = vmul.f32 %v4618, %v4645
    %v4667 = vmul.f32 %v4619, %v4647
    %v4668 = vmul.f32 %v4620, %v4649
    %v4669 = vmul.f32 %v4621, %v4651
    %v4670 = vmul.f32 %v4622, %v4653
    %v4671 = vmul.f32 %v4623, %v4655
    %v4672 = vsel %vm55, %v4656, -9e+15
    %v4673 = vsel %vm55, %v4657, -9e+15
    %v4674 = vsel %vm55, %v4658, -9e+15
    %v4675 = vsel %vm55, %v4659, -9e+15
    %v4676 = vsel %vm55, %v4660, -9e+15
    %v4677 = vsel %vm55, %v4661, -9e+15
    %v4678 = vsel %vm55, %v4662, -9e+15
    %v4679 = vsel %vm55, %v4663, -9e+15
    %v4680 = vsel %vm55, %v4664, -9e+15
    %v4681 = vsel %vm55, %v4665, -9e+15
    %v4682 = vsel %vm55, %v4666, -9e+15
    %v4683 = vsel %vm55, %v4667, -9e+15
    %v4684 = vsel %vm55, %v4668, -9e+15
    %v4685 = vsel %vm55, %v4669, -9e+15
    %v4686 = vsel %vm55, %v4670, -9e+15
    %v4687 = vsel %vm55, %v4671, -9e+15
    %v4688 = vmul.f32 %v4672, 1.442695
    %v4689 = vpow.pop %v4688
    %v4690 = vmul.f32 %v4673, 1.442695
    %v4691 = vpow.pop %v4690
    %v4692 = vmul.f32 %v4674, 1.442695
    %v4693 = vpow.pop %v4692
    %v4694 = vmul.f32 %v4675, 1.442695
    %v4695 = vpow.pop %v4694
    %v4696 = vmul.f32 %v4676, 1.442695
    %v4697 = vpow.pop %v4696
    %v4698 = vmul.f32 %v4677, 1.442695
    %v4699 = vpow.pop %v4698
    %v4700 = vmul.f32 %v4678, 1.442695
    %v4701 = vpow.pop %v4700
    %v4702 = vmul.f32 %v4679, 1.442695
    %v4703 = vpow.pop %v4702
    %v4704 = vmul.f32 %v4680, 1.442695
    %v4705 = vpow.pop %v4704
    %v4706 = vmul.f32 %v4681, 1.442695
    %v4707 = vpow.pop %v4706
    %v4708 = vmul.f32 %v4682, 1.442695
    %v4709 = vpow.pop %v4708
    %v4710 = vmul.f32 %v4683, 1.442695
    %v4711 = vpow.pop %v4710
    %v4712 = vmul.f32 %v4684, 1.442695
    %v4713 = vpow.pop %v4712
    %v4714 = vmul.f32 %v4685, 1.442695
    %v4715 = vpow.pop %v4714
    %v4716 = vmul.f32 %v4686, 1.442695
    %v4717 = vpow.pop %v4716
    %v4718 = vmul.f32 %v4687, 1.442695
    %v4719 = vpow.pop %v4718
    %4720 = vadd.xlane.f32.xlu0 %v4689
    %v4721 = vpop.xlane.xlu0 %4720
    %4722 = vadd.xlane.f32.xlu0 %v4691
    %v4723 = vpop.xlane.xlu0 %4722
    %4724 = vadd.xlane.f32.xlu0 %v4693
    %v4725 = vpop.xlane.xlu0 %4724
    %4726 = vadd.xlane.f32.xlu0 %v4695
    %v4727 = vpop.xlane.xlu0 %4726
    %4728 = vadd.xlane.f32.xlu0 %v4697
    %v4729 = vpop.xlane.xlu0 %4728
    %4730 = vadd.xlane.f32.xlu0 %v4699
    %v4731 = vpop.xlane.xlu0 %4730
    %4732 = vadd.xlane.f32.xlu0 %v4701
    %v4733 = vpop.xlane.xlu0 %4732
    %4734 = vadd.xlane.f32.xlu0 %v4703
    %v4735 = vpop.xlane.xlu0 %4734
    %4736 = vadd.xlane.f32.xlu0 %v4705
    %v4737 = vpop.xlane.xlu0 %4736
    %4738 = vadd.xlane.f32.xlu0 %v4707
    %v4739 = vpop.xlane.xlu0 %4738
    %4740 = vadd.xlane.f32.xlu0 %v4709
    %v4741 = vpop.xlane.xlu0 %4740
    %4742 = vadd.xlane.f32.xlu0 %v4711
    %v4743 = vpop.xlane.xlu0 %4742
    %4744 = vadd.xlane.f32.xlu0 %v4713
    %v4745 = vpop.xlane.xlu0 %4744
    %4746 = vadd.xlane.f32.xlu0 %v4715
    %v4747 = vpop.xlane.xlu0 %4746
    %4748 = vadd.xlane.f32.xlu0 %v4717
    %v4749 = vpop.xlane.xlu0 %4748
    %4750 = vadd.xlane.f32.xlu0 %v4719
    %v4751 = vpop.xlane.xlu0 %4750
    %v4752 = vrcp.pop %v4721
    %v4753 = vrcp.pop %v4723
    %v4754 = vrcp.pop %v4725
    %v4755 = vrcp.pop %v4727
    %v4756 = vrcp.pop %v4729
    %v4757 = vrcp.pop %v4731
    %v4758 = vrcp.pop %v4733
    %v4759 = vrcp.pop %v4735
    %v4760 = vrcp.pop %v4737
    %v4761 = vrcp.pop %v4739
    %v4762 = vrcp.pop %v4741
    %v4763 = vrcp.pop %v4743
    %v4764 = vrcp.pop %v4745
    %v4765 = vrcp.pop %v4747
    %v4766 = vrcp.pop %v4749
    %v4767 = vrcp.pop %v4751
    %v4768 = vmul.f32 %v4689, %v4752
    %v4769 = vmul.f32 %v4691, %v4753
    %v4770 = vmul.f32 %v4693, %v4754
    %v4771 = vmul.f32 %v4695, %v4755
    %v4772 = vmul.f32 %v4697, %v4756
    %v4773 = vmul.f32 %v4699, %v4757
    %v4774 = vmul.f32 %v4701, %v4758
    %v4775 = vmul.f32 %v4703, %v4759
    %v4776 = vmul.f32 %v4705, %v4760
    %v4777 = vmul.f32 %v4707, %v4761
    %v4778 = vmul.f32 %v4709, %v4762
    %v4779 = vmul.f32 %v4711, %v4763
    %v4780 = vmul.f32 %v4713, %v4764
    %v4781 = vmul.f32 %v4715, %v4765
    %v4782 = vmul.f32 %v4717, %v4766
    %v4783 = vmul.f32 %v4719, %v4767
    %s4785 = sor.u32 256, 88
    %4786 = vbcast.lane.b32.xlu0 %v379, %s4785
    %v4787 = vpop.permute.xlu0 %4786
    %s4789 = sor.u32 256, 88
    %4790 = vbcast.lane.b32.xlu0 %v386, %s4789
    %v4791 = vpop.permute.xlu0 %4790
    %s4793 = sor.u32 256, 88
    %4794 = vbcast.lane.b32.xlu0 %v393, %s4793
    %v4795 = vpop.permute.xlu0 %4794
    %s4797 = sor.u32 256, 88
    %4798 = vbcast.lane.b32.xlu0 %v400, %s4797
    %v4799 = vpop.permute.xlu0 %4798
    %s4801 = sor.u32 256, 88
    %4802 = vbcast.lane.b32.xlu0 %v407, %s4801
    %v4803 = vpop.permute.xlu0 %4802
    %s4805 = sor.u32 256, 88
    %4806 = vbcast.lane.b32.xlu0 %v414, %s4805
    %v4807 = vpop.permute.xlu0 %4806
    %s4809 = sor.u32 256, 88
    %4810 = vbcast.lane.b32.xlu0 %v421, %s4809
    %v4811 = vpop.permute.xlu0 %4810
    %s4813 = sor.u32 256, 88
    %4814 = vbcast.lane.b32.xlu0 %v428, %s4813
    %v4815 = vpop.permute.xlu0 %4814
    %s4817 = sor.u32 256, 88
    %4818 = vbcast.lane.b32.xlu0 %v435, %s4817
    %v4819 = vpop.permute.xlu0 %4818
    %s4821 = sor.u32 256, 88
    %4822 = vbcast.lane.b32.xlu0 %v442, %s4821
    %v4823 = vpop.permute.xlu0 %4822
    %s4825 = sor.u32 256, 88
    %4826 = vbcast.lane.b32.xlu0 %v449, %s4825
    %v4827 = vpop.permute.xlu0 %4826
    %s4829 = sor.u32 256, 88
    %4830 = vbcast.lane.b32.xlu0 %v456, %s4829
    %v4831 = vpop.permute.xlu0 %4830
    %s4833 = sor.u32 256, 88
    %4834 = vbcast.lane.b32.xlu0 %v463, %s4833
    %v4835 = vpop.permute.xlu0 %4834
    %s4837 = sor.u32 256, 88
    %4838 = vbcast.lane.b32.xlu0 %v470, %s4837
    %v4839 = vpop.permute.xlu0 %4838
    %s4841 = sor.u32 256, 88
    %4842 = vbcast.lane.b32.xlu0 %v477, %s4841
    %v4843 = vpop.permute.xlu0 %4842
    %s4845 = sor.u32 256, 88
    %4846 = vbcast.lane.b32.xlu0 %v484, %s4845
    %v4847 = vpop.permute.xlu0 %4846
    %v4848 = vmul.f32 %v4787, %v4768
    %v4849 = vmul.f32 %v4791, %v4769
    %v4850 = vmul.f32 %v4795, %v4770
    %v4851 = vmul.f32 %v4799, %v4771
    %v4852 = vmul.f32 %v4803, %v4772
    %v4853 = vmul.f32 %v4807, %v4773
    %v4854 = vmul.f32 %v4811, %v4774
    %v4855 = vmul.f32 %v4815, %v4775
    %v4856 = vmul.f32 %v4819, %v4776
    %v4857 = vmul.f32 %v4823, %v4777
    %v4858 = vmul.f32 %v4827, %v4778
    %v4859 = vmul.f32 %v4831, %v4779
    %v4860 = vmul.f32 %v4835, %v4780
    %v4861 = vmul.f32 %v4839, %v4781
    %v4862 = vmul.f32 %v4843, %v4782
    %v4863 = vmul.f32 %v4847, %v4783
    %v4864 = vrot.slane %v4848, 4
    %v4865 = vadd.f32 %v4848, %v4864
    %v4866 = vrot.slane %v4865, 2
    %v4867 = vadd.f32 %v4865, %v4866
    %v4868 = vrot.slane %v4867, 1
    %v4869 = vadd.f32 %v4867, %v4868
    %v4870 = vrot.slane %v4849, 4
    %v4871 = vadd.f32 %v4849, %v4870
    %v4872 = vrot.slane %v4871, 2
    %v4873 = vadd.f32 %v4871, %v4872
    %v4874 = vrot.slane %v4873, 1
    %v4875 = vadd.f32 %v4873, %v4874
    %v4876 = vrot.slane %v4850, 4
    %v4877 = vadd.f32 %v4850, %v4876
    %v4878 = vrot.slane %v4877, 2
    %v4879 = vadd.f32 %v4877, %v4878
    %v4880 = vrot.slane %v4879, 1
    %v4881 = vadd.f32 %v4879, %v4880
    %v4882 = vrot.slane %v4851, 4
    %v4883 = vadd.f32 %v4851, %v4882
    %v4884 = vrot.slane %v4883, 2
    %v4885 = vadd.f32 %v4883, %v4884
    %v4886 = vrot.slane %v4885, 1
    %v4887 = vadd.f32 %v4885, %v4886
    %v4888 = vrot.slane %v4852, 4
    %v4889 = vadd.f32 %v4852, %v4888
    %v4890 = vrot.slane %v4889, 2
    %v4891 = vadd.f32 %v4889, %v4890
    %v4892 = vrot.slane %v4891, 1
    %v4893 = vadd.f32 %v4891, %v4892
    %v4894 = vrot.slane %v4853, 4
    %v4895 = vadd.f32 %v4853, %v4894
    %v4896 = vrot.slane %v4895, 2
    %v4897 = vadd.f32 %v4895, %v4896
    %v4898 = vrot.slane %v4897, 1
    %v4899 = vadd.f32 %v4897, %v4898
    %v4900 = vrot.slane %v4854, 4
    %v4901 = vadd.f32 %v4854, %v4900
    %v4902 = vrot.slane %v4901, 2
    %v4903 = vadd.f32 %v4901, %v4902
    %v4904 = vrot.slane %v4903, 1
    %v4905 = vadd.f32 %v4903, %v4904
    %v4906 = vrot.slane %v4855, 4
    %v4907 = vadd.f32 %v4855, %v4906
    %v4908 = vrot.slane %v4907, 2
    %v4909 = vadd.f32 %v4907, %v4908
    %v4910 = vrot.slane %v4909, 1
    %v4911 = vadd.f32 %v4909, %v4910
    %v4912 = vrot.slane %v4856, 4
    %v4913 = vadd.f32 %v4856, %v4912
    %v4914 = vrot.slane %v4913, 2
    %v4915 = vadd.f32 %v4913, %v4914
    %v4916 = vrot.slane %v4915, 1
    %v4917 = vadd.f32 %v4915, %v4916
    %v4918 = vrot.slane %v4857, 4
    %v4919 = vadd.f32 %v4857, %v4918
    %v4920 = vrot.slane %v4919, 2
    %v4921 = vadd.f32 %v4919, %v4920
    %v4922 = vrot.slane %v4921, 1
    %v4923 = vadd.f32 %v4921, %v4922
    %v4924 = vrot.slane %v4858, 4
    %v4925 = vadd.f32 %v4858, %v4924
    %v4926 = vrot.slane %v4925, 2
    %v4927 = vadd.f32 %v4925, %v4926
    %v4928 = vrot.slane %v4927, 1
    %v4929 = vadd.f32 %v4927, %v4928
    %v4930 = vrot.slane %v4859, 4
    %v4931 = vadd.f32 %v4859, %v4930
    %v4932 = vrot.slane %v4931, 2
    %v4933 = vadd.f32 %v4931, %v4932
    %v4934 = vrot.slane %v4933, 1
    %v4935 = vadd.f32 %v4933, %v4934
    %v4936 = vrot.slane %v4860, 4
    %v4937 = vadd.f32 %v4860, %v4936
    %v4938 = vrot.slane %v4937, 2
    %v4939 = vadd.f32 %v4937, %v4938
    %v4940 = vrot.slane %v4939, 1
    %v4941 = vadd.f32 %v4939, %v4940
    %v4942 = vrot.slane %v4861, 4
    %v4943 = vadd.f32 %v4861, %v4942
    %v4944 = vrot.slane %v4943, 2
    %v4945 = vadd.f32 %v4943, %v4944
    %v4946 = vrot.slane %v4945, 1
    %v4947 = vadd.f32 %v4945, %v4946
    %v4948 = vrot.slane %v4862, 4
    %v4949 = vadd.f32 %v4862, %v4948
    %v4950 = vrot.slane %v4949, 2
    %v4951 = vadd.f32 %v4949, %v4950
    %v4952 = vrot.slane %v4951, 1
    %v4953 = vadd.f32 %v4951, %v4952
    %v4954 = vrot.slane %v4863, 4
    %v4955 = vadd.f32 %v4863, %v4954
    %v4956 = vrot.slane %v4955, 2
    %v4957 = vadd.f32 %v4955, %v4956
    %v4958 = vrot.slane %v4957, 1
    %v4959 = vadd.f32 %v4957, %v4958
    %vm4976 = vcmask 1041409
    %v4977 = vsel %vm4976, %v1095, %v1089
    %vm4978 = vcmask 1042434
    %v4979 = vsel %vm4978, %v1101, %v4977
    %vm4980 = vcmask 1043459
    %v4981 = vsel %vm4980, %v1107, %v4979
    %vm4982 = vcmask 1044484
    %v4983 = vsel %vm4982, %v1113, %v4981
    %vm4984 = vcmask 1045509
    %v4985 = vsel %vm4984, %v1119, %v4983
    %vm4986 = vcmask 1046534
    %v4987 = vsel %vm4986, %v1125, %v4985
    %vm4988 = vcmask 1047559
    %v4989 = vsel %vm4988, %v1131, %v4987
    %v4990 = vsel %vm4976, %v1143, %v1137
    %v4991 = vsel %vm4978, %v1149, %v4990
    %v4992 = vsel %vm4980, %v1155, %v4991
    %v4993 = vsel %vm4982, %v1161, %v4992
    %v4994 = vsel %vm4984, %v1167, %v4993
    %v4995 = vsel %vm4986, %v1173, %v4994
    %v4996 = vsel %vm4988, %v1179, %v4995
    %v5015 = vsel %vm4976, %v1851, %v1845
    %v5016 = vsel %vm4978, %v1857, %v5015
    %v5017 = vsel %vm4980, %v1863, %v5016
    %v5018 = vsel %vm4982, %v1869, %v5017
    %v5019 = vsel %vm4984, %v1875, %v5018
    %v5020 = vsel %vm4986, %v1881, %v5019
    %v5021 = vsel %vm4988, %v1887, %v5020
    %v5022 = vsel %vm4976, %v1899, %v1893
    %v5023 = vsel %vm4978, %v1905, %v5022
    %v5024 = vsel %vm4980, %v1911, %v5023
    %v5025 = vsel %vm4982, %v1917, %v5024
    %v5026 = vsel %vm4984, %v1923, %v5025
    %v5027 = vsel %vm4986, %v1929, %v5026
    %v5028 = vsel %vm4988, %v1935, %v5027
    %v5031 = vld [vmem:[#allocation5] sm:$0xff]
    %v5032 = vld [vmem:[#allocation5 + $0x8] sm:$0xff]
    %v5033 = vld [vmem:[#allocation5 + $0x10] sm:$0xff]
    %v5034 = vld [vmem:[#allocation5 + $0x18] sm:$0xff]
    %v5035 = vld [vmem:[#allocation5 + $0x20] sm:$0xff]
    %v5036 = vld [vmem:[#allocation5 + $0x28] sm:$0xff]
    %v5037 = vld [vmem:[#allocation5 + $0x30] sm:$0xff]
    %v5038 = vld [vmem:[#allocation5 + $0x38] sm:$0xff]
    %v5039 = vld [vmem:[#allocation5 + $0x40] sm:$0xff]
    %v5040 = vld [vmem:[#allocation5 + $0x48] sm:$0xff]
    %v5041 = vld [vmem:[#allocation5 + $0x50] sm:$0xff]
    %v5042 = vld [vmem:[#allocation5 + $0x58] sm:$0xff]
    %v5043 = vld [vmem:[#allocation5 + $0x60] sm:$0xff]
    %v5044 = vld [vmem:[#allocation5 + $0x68] sm:$0xff]
    %v5045 = vld [vmem:[#allocation5 + $0x70] sm:$0xff]
    %v5046 = vld [vmem:[#allocation5 + $0x78] sm:$0xff]
    %v5047 = vld [vmem:[#allocation5 + $0x80] sm:$0xff]
    %v5048 = vld [vmem:[#allocation5 + $0x88] sm:$0xff]
    %v5049 = vld [vmem:[#allocation5 + $0x90] sm:$0xff]
    %v5050 = vld [vmem:[#allocation5 + $0x98] sm:$0xff]
    %v5051 = vld [vmem:[#allocation5 + $0xa0] sm:$0xff]
    %v5052 = vld [vmem:[#allocation5 + $0xa8] sm:$0xff]
    %v5053 = vld [vmem:[#allocation5 + $0xb0] sm:$0xff]
    %v5054 = vld [vmem:[#allocation5 + $0xb8] sm:$0xff]
    %v5055 = vld [vmem:[#allocation5 + $0xc0] sm:$0xff]
    %v5056 = vld [vmem:[#allocation5 + $0xc8] sm:$0xff]
    %v5057 = vld [vmem:[#allocation5 + $0xd0] sm:$0xff]
    %v5058 = vld [vmem:[#allocation5 + $0xd8] sm:$0xff]
    %v5059 = vld [vmem:[#allocation5 + $0xe0] sm:$0xff]
    %v5060 = vld [vmem:[#allocation5 + $0xe8] sm:$0xff]
    %v5061 = vld [vmem:[#allocation5 + $0xf0] sm:$0xff]
    %v5062 = vld [vmem:[#allocation5 + $0xf8] sm:$0xff]
    %5063 = vmatprep.subr.mxu0 0.0
    %5064 = vmatpush1.msra.mxu0 %v5046
    %5065 = vmatprep.subr.mxu0 0.0
    %5066 = vmatpush1.msra.mxu0 %v5045
    %5067 = vmatprep.subr.mxu0 0.0
    %5068 = vmatpush1.msra.mxu0 %v5044
    %5069 = vmatprep.subr.mxu0 0.0
    %5070 = vmatpush1.msra.mxu0 %v5043
    %5071 = vmatprep.subr.mxu0 0.0
    %5072 = vmatpush1.msra.mxu0 %v5042
    %5073 = vmatprep.subr.mxu0 0.0
    %5074 = vmatpush1.msra.mxu0 %v5041
    %5075 = vmatprep.subr.mxu0 0.0
    %5076 = vmatpush1.msra.mxu0 %v5040
    %5077 = vmatprep.subr.mxu0 0.0
    %5078 = vmatpush1.msra.mxu0 %v5039
    %5079 = vmatprep.subr.mxu0 0.0
    %5080 = vmatpush1.msra.mxu0 %v5038
    %5081 = vmatprep.subr.mxu0 0.0
    %5082 = vmatpush1.msra.mxu0 %v5037
    %5083 = vmatprep.subr.mxu0 0.0
    %5084 = vmatpush1.msra.mxu0 %v5036
    %5085 = vmatprep.subr.mxu0 0.0
    %5086 = vmatpush1.msra.mxu0 %v5035
    %5087 = vmatprep.subr.mxu0 0.0
    %5088 = vmatpush1.msra.mxu0 %v5034
    %5089 = vmatprep.subr.mxu0 0.0
    %5090 = vmatpush1.msra.mxu0 %v5033
    %5091 = vmatprep.subr.mxu0 0.0
    %5092 = vmatpush1.msra.mxu0 %v5032
    %5093 = vmatprep.subr.mxu0 0.0
    %5094 = vmatpush1.msra.mxu0 %v5031
    %5095 = vmatprep.subr.mxu0 0.0
    %5096 = vmatpush2.msra.mxu0 %v5062
    %5097 = vmatprep.subr.mxu0 0.0
    %5098 = vmatpush2.msra.mxu0 %v5061
    %5099 = vmatprep.subr.mxu0 0.0
    %5100 = vmatpush2.msra.mxu0 %v5060
    %5101 = vmatprep.subr.mxu0 0.0
    %5102 = vmatpush2.msra.mxu0 %v5059
    %5103 = vmatprep.subr.mxu0 0.0
    %5104 = vmatpush2.msra.mxu0 %v5058
    %5105 = vmatprep.subr.mxu0 0.0
    %5106 = vmatpush2.msra.mxu0 %v5057
    %5107 = vmatprep.subr.mxu0 0.0
    %5108 = vmatpush2.msra.mxu0 %v5056
    %5109 = vmatprep.subr.mxu0 0.0
    %5110 = vmatpush2.msra.mxu0 %v5055
    %5111 = vmatprep.subr.mxu0 0.0
    %5112 = vmatpush2.msra.mxu0 %v5054
    %5113 = vmatprep.subr.mxu0 0.0
    %5114 = vmatpush2.msra.mxu0 %v5053
    %5115 = vmatprep.subr.mxu0 0.0
    %5116 = vmatpush2.msra.mxu0 %v5052
    %5117 = vmatprep.subr.mxu0 0.0
    %5118 = vmatpush2.msra.mxu0 %v5051
    %5119 = vmatprep.subr.mxu0 0.0
    %5120 = vmatpush2.msra.mxu0 %v5050
    %5121 = vmatprep.subr.mxu0 0.0
    %5122 = vmatpush2.msra.mxu0 %v5049
    %5123 = vmatprep.subr.mxu0 0.0
    %5124 = vmatpush2.msra.mxu0 %v5048
    %5125 = vmatprep.subr.mxu0 0.0
    %5126 = vmatpush2.msra.mxu0 %v5047
    %5127 = vmatprep.mubr.f32.mxu0 %v5021
    %5128 = vmatmul.mubr.f32.gmra.mxu0 %v4989
    %v5129 = vpop.f32.mrf.mxu0
    %v5130 = vadd.f32 0.0, %v5129
    %v5131 = vpop.f32.mrf.mxu0
    %5132 = vmatprep.mubr.f32.mxu0 %v5028
    %5133 = vmatmul.mubr.f32.gmra.mxu0 %v4996
    %v5134 = vpop.f32.mrf.mxu0
    %v5135 = vadd.f32 0.0, %v5134
    %v5136 = vpop.f32.mrf.mxu0
    %5137 = vdwg.mxu0
    %v5154 = vsel %vm4976, %v2607, %v2601
    %v5155 = vsel %vm4978, %v2613, %v5154
    %v5156 = vsel %vm4980, %v2619, %v5155
    %v5157 = vsel %vm4982, %v2625, %v5156
    %v5158 = vsel %vm4984, %v2631, %v5157
    %v5159 = vsel %vm4986, %v2637, %v5158
    %v5160 = vsel %vm4988, %v2643, %v5159
    %v5161 = vsel %vm4976, %v2655, %v2649
    %v5162 = vsel %vm4978, %v2661, %v5161
    %v5163 = vsel %vm4980, %v2667, %v5162
    %v5164 = vsel %vm4982, %v2673, %v5163
    %v5165 = vsel %vm4984, %v2679, %v5164
    %v5166 = vsel %vm4986, %v2685, %v5165
    %v5167 = vsel %vm4988, %v2691, %v5166
    %v5186 = vsel %vm4976, %v3363, %v3357
    %v5187 = vsel %vm4978, %v3369, %v5186
    %v5188 = vsel %vm4980, %v3375, %v5187
    %v5189 = vsel %vm4982, %v3381, %v5188
    %v5190 = vsel %vm4984, %v3387, %v5189
    %v5191 = vsel %vm4986, %v3393, %v5190
    %v5192 = vsel %vm4988, %v3399, %v5191
    %v5193 = vsel %vm4976, %v3411, %v3405
    %v5194 = vsel %vm4978, %v3417, %v5193
    %v5195 = vsel %vm4980, %v3423, %v5194
    %v5196 = vsel %vm4982, %v3429, %v5195
    %v5197 = vsel %vm4984, %v3435, %v5196
    %v5198 = vsel %vm4986, %v3441, %v5197
    %v5199 = vsel %vm4988, %v3447, %v5198
    %s5202 = scalar_lea.vmem [#allocation5], 256
    %v5203 = vld [vmem:[%s5202] sm:$0xff]
    %v5204 = vld [vmem:[%s5202 + $0x8] sm:$0xff]
    %v5205 = vld [vmem:[%s5202 + $0x10] sm:$0xff]
    %v5206 = vld [vmem:[%s5202 + $0x18] sm:$0xff]
    %v5207 = vld [vmem:[%s5202 + $0x20] sm:$0xff]
    %v5208 = vld [vmem:[%s5202 + $0x28] sm:$0xff]
    %v5209 = vld [vmem:[%s5202 + $0x30] sm:$0xff]
    %v5210 = vld [vmem:[%s5202 + $0x38] sm:$0xff]
    %v5211 = vld [vmem:[%s5202 + $0x40] sm:$0xff]
    %v5212 = vld [vmem:[%s5202 + $0x48] sm:$0xff]
    %v5213 = vld [vmem:[%s5202 + $0x50] sm:$0xff]
    %v5214 = vld [vmem:[%s5202 + $0x58] sm:$0xff]
    %v5215 = vld [vmem:[%s5202 + $0x60] sm:$0xff]
    %v5216 = vld [vmem:[%s5202 + $0x68] sm:$0xff]
    %v5217 = vld [vmem:[%s5202 + $0x70] sm:$0xff]
    %v5218 = vld [vmem:[%s5202 + $0x78] sm:$0xff]
    %v5219 = vld [vmem:[%s5202 + $0x80] sm:$0xff]
    %v5220 = vld [vmem:[%s5202 + $0x88] sm:$0xff]
    %v5221 = vld [vmem:[%s5202 + $0x90] sm:$0xff]
    %v5222 = vld [vmem:[%s5202 + $0x98] sm:$0xff]
    %v5223 = vld [vmem:[%s5202 + $0xa0] sm:$0xff]
    %v5224 = vld [vmem:[%s5202 + $0xa8] sm:$0xff]
    %v5225 = vld [vmem:[%s5202 + $0xb0] sm:$0xff]
    %v5226 = vld [vmem:[%s5202 + $0xb8] sm:$0xff]
    %v5227 = vld [vmem:[%s5202 + $0xc0] sm:$0xff]
    %v5228 = vld [vmem:[%s5202 + $0xc8] sm:$0xff]
    %v5229 = vld [vmem:[%s5202 + $0xd0] sm:$0xff]
    %v5230 = vld [vmem:[%s5202 + $0xd8] sm:$0xff]
    %v5231 = vld [vmem:[%s5202 + $0xe0] sm:$0xff]
    %v5232 = vld [vmem:[%s5202 + $0xe8] sm:$0xff]
    %v5233 = vld [vmem:[%s5202 + $0xf0] sm:$0xff]
    %v5234 = vld [vmem:[%s5202 + $0xf8] sm:$0xff]
    %5235 = vmatprep.subr.mxu0 0.0
    %5236 = vmatpush1.msra.mxu0 %v5218
    %5237 = vmatprep.subr.mxu0 0.0
    %5238 = vmatpush1.msra.mxu0 %v5217
    %5239 = vmatprep.subr.mxu0 0.0
    %5240 = vmatpush1.msra.mxu0 %v5216
    %5241 = vmatprep.subr.mxu0 0.0
    %5242 = vmatpush1.msra.mxu0 %v5215
    %5243 = vmatprep.subr.mxu0 0.0
    %5244 = vmatpush1.msra.mxu0 %v5214
    %5245 = vmatprep.subr.mxu0 0.0
    %5246 = vmatpush1.msra.mxu0 %v5213
    %5247 = vmatprep.subr.mxu0 0.0
    %5248 = vmatpush1.msra.mxu0 %v5212
    %5249 = vmatprep.subr.mxu0 0.0
    %5250 = vmatpush1.msra.mxu0 %v5211
    %5251 = vmatprep.subr.mxu0 0.0
    %5252 = vmatpush1.msra.mxu0 %v5210
    %5253 = vmatprep.subr.mxu0 0.0
    %5254 = vmatpush1.msra.mxu0 %v5209
    %5255 = vmatprep.subr.mxu0 0.0
    %5256 = vmatpush1.msra.mxu0 %v5208
    %5257 = vmatprep.subr.mxu0 0.0
    %5258 = vmatpush1.msra.mxu0 %v5207
    %5259 = vmatprep.subr.mxu0 0.0
    %5260 = vmatpush1.msra.mxu0 %v5206
    %5261 = vmatprep.subr.mxu0 0.0
    %5262 = vmatpush1.msra.mxu0 %v5205
    %5263 = vmatprep.subr.mxu0 0.0
    %5264 = vmatpush1.msra.mxu0 %v5204
    %5265 = vmatprep.subr.mxu0 0.0
    %5266 = vmatpush1.msra.mxu0 %v5203
    %5267 = vmatprep.subr.mxu0 0.0
    %5268 = vmatpush2.msra.mxu0 %v5234
    %5269 = vmatprep.subr.mxu0 0.0
    %5270 = vmatpush2.msra.mxu0 %v5233
    %5271 = vmatprep.subr.mxu0 0.0
    %5272 = vmatpush2.msra.mxu0 %v5232
    %5273 = vmatprep.subr.mxu0 0.0
    %5274 = vmatpush2.msra.mxu0 %v5231
    %5275 = vmatprep.subr.mxu0 0.0
    %5276 = vmatpush2.msra.mxu0 %v5230
    %5277 = vmatprep.subr.mxu0 0.0
    %5278 = vmatpush2.msra.mxu0 %v5229
    %5279 = vmatprep.subr.mxu0 0.0
    %5280 = vmatpush2.msra.mxu0 %v5228
    %5281 = vmatprep.subr.mxu0 0.0
    %5282 = vmatpush2.msra.mxu0 %v5227
    %5283 = vmatprep.subr.mxu0 0.0
    %5284 = vmatpush2.msra.mxu0 %v5226
    %5285 = vmatprep.subr.mxu0 0.0
    %5286 = vmatpush2.msra.mxu0 %v5225
    %5287 = vmatprep.subr.mxu0 0.0
    %5288 = vmatpush2.msra.mxu0 %v5224
    %5289 = vmatprep.subr.mxu0 0.0
    %5290 = vmatpush2.msra.mxu0 %v5223
    %5291 = vmatprep.subr.mxu0 0.0
    %5292 = vmatpush2.msra.mxu0 %v5222
    %5293 = vmatprep.subr.mxu0 0.0
    %5294 = vmatpush2.msra.mxu0 %v5221
    %5295 = vmatprep.subr.mxu0 0.0
    %5296 = vmatpush2.msra.mxu0 %v5220
    %5297 = vmatprep.subr.mxu0 0.0
    %5298 = vmatpush2.msra.mxu0 %v5219
    %5299 = vmatprep.mubr.f32.mxu0 %v5192
    %5300 = vmatmul.mubr.f32.gmra.mxu0 %v5160
    %v5301 = vpop.f32.mrf.mxu0
    %v5302 = vadd.f32 0.0, %v5301
    %v5303 = vpop.f32.mrf.mxu0
    %5304 = vmatprep.mubr.f32.mxu0 %v5199
    %5305 = vmatmul.mubr.f32.gmra.mxu0 %v5167
    %v5306 = vpop.f32.mrf.mxu0
    %v5307 = vadd.f32 0.0, %v5306
    %v5308 = vpop.f32.mrf.mxu0
    %5309 = vdwg.mxu0
    %v5326 = vsel %vm4976, %v4119, %v4113
    %v5327 = vsel %vm4978, %v4125, %v5326
    %v5328 = vsel %vm4980, %v4131, %v5327
    %v5329 = vsel %vm4982, %v4137, %v5328
    %v5330 = vsel %vm4984, %v4143, %v5329
    %v5331 = vsel %vm4986, %v4149, %v5330
    %v5332 = vsel %vm4988, %v4155, %v5331
    %v5333 = vsel %vm4976, %v4167, %v4161
    %v5334 = vsel %vm4978, %v4173, %v5333
    %v5335 = vsel %vm4980, %v4179, %v5334
    %v5336 = vsel %vm4982, %v4185, %v5335
    %v5337 = vsel %vm4984, %v4191, %v5336
    %v5338 = vsel %vm4986, %v4197, %v5337
    %v5339 = vsel %vm4988, %v4203, %v5338
    %v5358 = vsel %vm4976, %v4875, %v4869
    %v5359 = vsel %vm4978, %v4881, %v5358
    %v5360 = vsel %vm4980, %v4887, %v5359
    %v5361 = vsel %vm4982, %v4893, %v5360
    %v5362 = vsel %vm4984, %v4899, %v5361
    %v5363 = vsel %vm4986, %v4905, %v5362
    %v5364 = vsel %vm4988, %v4911, %v5363
    %v5365 = vsel %vm4976, %v4923, %v4917
    %v5366 = vsel %vm4978, %v4929, %v5365
    %v5367 = vsel %vm4980, %v4935, %v5366
    %v5368 = vsel %vm4982, %v4941, %v5367
    %v5369 = vsel %vm4984, %v4947, %v5368
    %v5370 = vsel %vm4986, %v4953, %v5369
    %v5371 = vsel %vm4988, %v4959, %v5370
    %s5374 = scalar_lea.vmem [#allocation5], 512
    %v5375 = vld [vmem:[%s5374] sm:$0xff]
    %v5376 = vld [vmem:[%s5374 + $0x8] sm:$0xff]
    %v5377 = vld [vmem:[%s5374 + $0x10] sm:$0xff]
    %v5378 = vld [vmem:[%s5374 + $0x18] sm:$0xff]
    %v5379 = vld [vmem:[%s5374 + $0x20] sm:$0xff]
    %v5380 = vld [vmem:[%s5374 + $0x28] sm:$0xff]
    %v5381 = vld [vmem:[%s5374 + $0x30] sm:$0xff]
    %v5382 = vld [vmem:[%s5374 + $0x38] sm:$0xff]
    %v5383 = vld [vmem:[%s5374 + $0x40] sm:$0xff]
    %v5384 = vld [vmem:[%s5374 + $0x48] sm:$0xff]
    %v5385 = vld [vmem:[%s5374 + $0x50] sm:$0xff]
    %v5386 = vld [vmem:[%s5374 + $0x58] sm:$0xff]
    %v5387 = vld [vmem:[%s5374 + $0x60] sm:$0xff]
    %v5388 = vld [vmem:[%s5374 + $0x68] sm:$0xff]
    %v5389 = vld [vmem:[%s5374 + $0x70] sm:$0xff]
    %v5390 = vld [vmem:[%s5374 + $0x78] sm:$0xff]
    %v5391 = vld [vmem:[%s5374 + $0x80] sm:$0xff]
    %v5392 = vld [vmem:[%s5374 + $0x88] sm:$0xff]
    %v5393 = vld [vmem:[%s5374 + $0x90] sm:$0xff]
    %v5394 = vld [vmem:[%s5374 + $0x98] sm:$0xff]
    %v5395 = vld [vmem:[%s5374 + $0xa0] sm:$0xff]
    %v5396 = vld [vmem:[%s5374 + $0xa8] sm:$0xff]
    %v5397 = vld [vmem:[%s5374 + $0xb0] sm:$0xff]
    %v5398 = vld [vmem:[%s5374 + $0xb8] sm:$0xff]
    %v5399 = vld [vmem:[%s5374 + $0xc0] sm:$0xff]
    %v5400 = vld [vmem:[%s5374 + $0xc8] sm:$0xff]
    %v5401 = vld [vmem:[%s5374 + $0xd0] sm:$0xff]
    %v5402 = vld [vmem:[%s5374 + $0xd8] sm:$0xff]
    %v5403 = vld [vmem:[%s5374 + $0xe0] sm:$0xff]
    %v5404 = vld [vmem:[%s5374 + $0xe8] sm:$0xff]
    %v5405 = vld [vmem:[%s5374 + $0xf0] sm:$0xff]
    %v5406 = vld [vmem:[%s5374 + $0xf8] sm:$0xff]
    %5407 = vmatprep.subr.mxu0 0.0
    %5408 = vmatpush1.msra.mxu0 %v5390
    %5409 = vmatprep.subr.mxu0 0.0
    %5410 = vmatpush1.msra.mxu0 %v5389
    %5411 = vmatprep.subr.mxu0 0.0
    %5412 = vmatpush1.msra.mxu0 %v5388
    %5413 = vmatprep.subr.mxu0 0.0
    %5414 = vmatpush1.msra.mxu0 %v5387
    %5415 = vmatprep.subr.mxu0 0.0
    %5416 = vmatpush1.msra.mxu0 %v5386
    %5417 = vmatprep.subr.mxu0 0.0
    %5418 = vmatpush1.msra.mxu0 %v5385
    %5419 = vmatprep.subr.mxu0 0.0
    %5420 = vmatpush1.msra.mxu0 %v5384
    %5421 = vmatprep.subr.mxu0 0.0
    %5422 = vmatpush1.msra.mxu0 %v5383
    %5423 = vmatprep.subr.mxu0 0.0
    %5424 = vmatpush1.msra.mxu0 %v5382
    %5425 = vmatprep.subr.mxu0 0.0
    %5426 = vmatpush1.msra.mxu0 %v5381
    %5427 = vmatprep.subr.mxu0 0.0
    %5428 = vmatpush1.msra.mxu0 %v5380
    %5429 = vmatprep.subr.mxu0 0.0
    %5430 = vmatpush1.msra.mxu0 %v5379
    %5431 = vmatprep.subr.mxu0 0.0
    %5432 = vmatpush1.msra.mxu0 %v5378
    %5433 = vmatprep.subr.mxu0 0.0
    %5434 = vmatpush1.msra.mxu0 %v5377
    %5435 = vmatprep.subr.mxu0 0.0
    %5436 = vmatpush1.msra.mxu0 %v5376
    %5437 = vmatprep.subr.mxu0 0.0
    %5438 = vmatpush1.msra.mxu0 %v5375
    %5439 = vmatprep.subr.mxu0 0.0
    %5440 = vmatpush2.msra.mxu0 %v5406
    %5441 = vmatprep.subr.mxu0 0.0
    %5442 = vmatpush2.msra.mxu0 %v5405
    %5443 = vmatprep.subr.mxu0 0.0
    %5444 = vmatpush2.msra.mxu0 %v5404
    %5445 = vmatprep.subr.mxu0 0.0
    %5446 = vmatpush2.msra.mxu0 %v5403
    %5447 = vmatprep.subr.mxu0 0.0
    %5448 = vmatpush2.msra.mxu0 %v5402
    %5449 = vmatprep.subr.mxu0 0.0
    %5450 = vmatpush2.msra.mxu0 %v5401
    %5451 = vmatprep.subr.mxu0 0.0
    %5452 = vmatpush2.msra.mxu0 %v5400
    %5453 = vmatprep.subr.mxu0 0.0
    %5454 = vmatpush2.msra.mxu0 %v5399
    %5455 = vmatprep.subr.mxu0 0.0
    %5456 = vmatpush2.msra.mxu0 %v5398
    %5457 = vmatprep.subr.mxu0 0.0
    %5458 = vmatpush2.msra.mxu0 %v5397
    %5459 = vmatprep.subr.mxu0 0.0
    %5460 = vmatpush2.msra.mxu0 %v5396
    %5461 = vmatprep.subr.mxu0 0.0
    %5462 = vmatpush2.msra.mxu0 %v5395
    %5463 = vmatprep.subr.mxu0 0.0
    %5464 = vmatpush2.msra.mxu0 %v5394
    %5465 = vmatprep.subr.mxu0 0.0
    %5466 = vmatpush2.msra.mxu0 %v5393
    %5467 = vmatprep.subr.mxu0 0.0
    %5468 = vmatpush2.msra.mxu0 %v5392
    %5469 = vmatprep.subr.mxu0 0.0
    %5470 = vmatpush2.msra.mxu0 %v5391
    %5471 = vmatprep.mubr.f32.mxu0 %v5364
    %5472 = vmatmul.mubr.f32.gmra.mxu0 %v5332
    %v5473 = vpop.f32.mrf.mxu0
    %v5474 = vadd.f32 0.0, %v5473
    %v5475 = vpop.f32.mrf.mxu0
    %5476 = vmatprep.mubr.f32.mxu0 %v5371
    %5477 = vmatmul.mubr.f32.gmra.mxu0 %v5339
    %v5478 = vpop.f32.mrf.mxu0
    %v5479 = vadd.f32 0.0, %v5478
    %v5480 = vpop.f32.mrf.mxu0
    %5481 = vdwg.mxu0
    %v5482 = vld [vmem:[%s4] sm:$0x7]
    %v5484 = vlaneseq
    %v5485 = vshrl.u32 %v5484, 7
    %v5486 = vsub.s32 0, %v5485
    %v5487 = vrot.slane %v5482, %v5486
    %v5488 = vlaneseq
    %v5489 = vshrl.u32 %v5488, 7
    %v5490 = vsub.s32 1, %v5489
    %v5491 = vrot.slane %v5482, %v5490
    %v5492 = vlaneseq
    %v5493 = vshrl.u32 %v5492, 7
    %v5494 = vsub.s32 2, %v5493
    %v5495 = vrot.slane %v5482, %v5494
    %v5499 = vadd.f32 %v5130, %v5487
    %v5500 = vadd.f32 %v5302, %v5491
    %v5501 = vadd.f32 %v5474, %v5495
    %v5502 = vadd.f32 %v5135, %v5487
    %v5503 = vadd.f32 %v5307, %v5491
    %v5504 = vadd.f32 %v5479, %v5495
    %5505 = vst [vmem:[#allocation7] sm:$0xff] %v5499
    %5506 = vst [vmem:[#allocation7 + $0x8] sm:$0xff] %v5500
    %5507 = vst [vmem:[#allocation7 + $0x10] sm:$0xff] %v5501
    %5508 = vst [vmem:[#allocation7 + $0x18] sm:$0xff] %v5502
    %5509 = vst [vmem:[#allocation7 + $0x20] sm:$0xff] %v5503
    %5510 = vst [vmem:[#allocation7 + $0x28] sm:$0xff] %v5504
    // Predicated region
    $region34: #{tpu_custom_call.1} parent=1 // pred_check
      _
    $region35: #{tpu_custom_call.1} parent=1 // pred_check_branch
      %5512 = sbr.rel (0) target = $region37
    $region36: #{tpu_custom_call.1} parent=1 // pred_region
      %s5514 = ssub.s32 768, 768
      %5515 = vsyncadd [#allocation4], %s5514
      %s5516 = sshll.u32 [#allocation7], 4
      %s5517 = int_to_ptr.vmem [resolvable:$true] %s5516
      %5522 = dma.vmem_to_hbm [thread:$0]  %s5517, 768, %s6, [#allocation4], 384, 384, 24
    $region37: #{tpu_custom_call.1} parent=1 // pred_fallthru
      _
    // Predicated region
    $region38: #{tpu_custom_call.1} parent=1 // pred_check
      _
    $region39: #{tpu_custom_call.1} parent=1 // pred_check_branch
      %5524 = sbr.rel (0) target = $region41
    $region40: #{tpu_custom_call.1} parent=1 // pred_region
      %5525 = dma.done [#allocation4], 768
    $region41: #{tpu_custom_call.1} parent=1 // pred_fallthru
      _
    %5526 = vsyncpa [#allocation3], 1
    %5527 = vsyncpa [#allocation6], 1
    %5528 = vsyncpa [#allocation4], 1

</llo_original>
